<compile_context>
chip_gen: v5e
topology: v5e:2x2
jax: 0.10.0
libtpu: 0.0.40
codegen_flags: <defaults>
</compile_context>

<pallas_src>
import functools

import jax
import jax.numpy as jnp
from jax.experimental import pallas as pl
from jax.experimental.pallas import tpu as pltpu


# ---------------------------------------------------------------------------
# Shared fused bidirectional recurrence.
#
#   gx_ref : (T*B, 8H) f32 VMEM scratch, precomputed x @ W_ih + b.
#            Columns [0:4H]  = fwd gates (i,f,g,o) for input x[t]
#            Columns [4H:8H] = bwd gates (i,f,g,o) for input x[t]
#   w_hh   : (2H, 8H) bf16, block-diagonal: rows 0:H -> cols 0:4H (fwd),
#            rows H:2H -> cols 4H:8H (bwd)
#   out_ref: optional (T*B, 2H) f32 output of per-position hidden states
# Returns the sum over positions of the (B, 2H) hidden (used by the head).
# ---------------------------------------------------------------------------
def _run_bidir_lstm(gx_ref, w_hh, out_ref, *, seq_len, batch, hidden):
    T, B, H = seq_len, batch, hidden
    H2, G4, G8 = 2 * H, 4 * H, 8 * H

    # Hoisted activation constants: sigmoid(x) = 0.5*tanh(0.5*x) + 0.5 for the
    # i/f/o lanes, plain tanh for the g lanes -> ONE full-width EUP pass/step.
    lane = jax.lax.broadcasted_iota(jnp.int32, (B, G8), 1)
    is_g = ((lane % G4) >= 2 * H) & ((lane % G4) < 3 * H)
    pre = jnp.where(is_g, 1.0, 0.5).astype(jnp.float32)    # pre-scale == post-mul
    post = jnp.where(is_g, 0.0, 0.5).astype(jnp.float32)   # post-add

    def step(t, carry):
        h, c, acc = carry                                   # f32 (B, 2H) each
        # Recurrent matmul, both directions at once (block-diagonal weights).
        gr = jnp.dot(h.astype(w_hh.dtype), w_hh,
                     preferred_element_type=jnp.float32)    # (B, 8H)
        # Precomputed input gates: fwd uses position t, bwd uses position T-1-t.
        gxf = gx_ref[pl.ds(t * B, B), 0:G4]                 # (B, 4H)
        gxb = gx_ref[pl.ds((T - 1 - t) * B, B), G4:G8]      # (B, 4H)
        gates = gr + jnp.concatenate([gxf, gxb], axis=1)    # (B, 8H) f32

        a = jnp.tanh(gates * pre) * pre + post              # single EUP pass

        # Regroup per gate into [fwd | bwd] 128-lane tensors.
        i_g = jnp.concatenate([a[:, 0:H],         a[:, G4:G4 + H]],         axis=1)
        f_g = jnp.concatenate([a[:, H:2 * H],     a[:, G4 + H:G4 + 2 * H]], axis=1)
        g_g = jnp.concatenate([a[:, 2 * H:3 * H], a[:, G4 + 2 * H:G4 + 3 * H]], axis=1)
        o_g = jnp.concatenate([a[:, 3 * H:4 * H], a[:, G4 + 3 * H:G4 + 4 * H]], axis=1)

        c_new = f_g * c + i_g * g_g                         # (B, 2H) f32
        h_new = o_g * jnp.tanh(c_new)                       # (B, 2H) f32

        if out_ref is not None:
            # fwd half belongs to position t, bwd half to position T-1-t
            # (64-lane masked sub-stores are forced by the time-reversed pairing).
            out_ref[pl.ds(t * B, B), 0:H] = h_new[:, 0:H].astype(out_ref.dtype)
            out_ref[pl.ds((T - 1 - t) * B, B), H:H2] = h_new[:, H:H2].astype(out_ref.dtype)

        return h_new, c_new, acc + h_new

    zeros = jnp.zeros((B, H2), jnp.float32)
    _, _, acc = jax.lax.fori_loop(0, T, step, (zeros, zeros, zeros),
                                  unroll=(T <= 32))
    return acc


# ---------------------------------------------------------------------------
# Kernel 1: one fused bidirectional LSTM layer, writes the full sequence output.
# ---------------------------------------------------------------------------
def _bilstm_seq_kernel(x_ref, wih_ref, whh_ref, b_ref, out_ref, gx_ref,
                       *, seq_len, batch, hidden):
    # Hoisted input projection: one big bf16 MXU matmul for all timesteps and
    # both directions, bias added once.
    gx_ref[...] = (
        jnp.dot(x_ref[...], wih_ref[...], preferred_element_type=jnp.float32)
        + b_ref[...]
    )
    _run_bidir_lstm(gx_ref, whh_ref[...], out_ref,
                    seq_len=seq_len, batch=batch, hidden=hidden)


def bilstm_layer(x, w_ih, w_hh, bias, *, seq_len, batch, hidden):
    """x: (T*B, Din) bf16 -> (T*B, 2H) f32 bidirectional sequence output."""
    TB, Din = x.shape
    H2, G8 = 2 * hidden, 8 * hidden
    kernel = functools.partial(_bilstm_seq_kernel,
                               seq_len=seq_len, batch=batch, hidden=hidden)
    return pl.pallas_call(
        kernel,
        out_shape=jax.ShapeDtypeStruct((TB, H2), jnp.float32),
        grid=(1,),
        in_specs=[
            pl.BlockSpec((TB, Din), lambda i: (0, 0)),
            pl.BlockSpec((Din, G8), lambda i: (0, 0)),
            pl.BlockSpec((H2, G8), lambda i: (0, 0)),
            pl.BlockSpec((1, G8), lambda i: (0, 0)),
        ],
        out_specs=pl.BlockSpec((TB, H2), lambda i: (0, 0)),
        scratch_shapes=[pltpu.VMEM((TB, G8), jnp.float32)],   # gates_x scratch
        compiler_params=pltpu.CompilerParams(
            dimension_semantics=("arbitrary",),
            vmem_limit_bytes=32 * 1024 * 1024),
    )(x, w_ih, w_hh, bias)


# ---------------------------------------------------------------------------
# Kernel 2: last bidirectional LSTM layer + head fused.
#   mean over time + LayerNorm(128) + Dropout(eval: identity) + Linear(128->C).
#   The per-step sequence output never touches HBM; only the (B, 128)-padded
#   logits are written (lane-dense store).
# ---------------------------------------------------------------------------
def _bilstm_head_kernel(x_ref, wih_ref, whh_ref, b_ref, gam_ref, bet_ref,
                        wcls_ref, bcls_ref, out_ref, gx_ref,
                        *, seq_len, batch, hidden):
    T = seq_len
    gx_ref[...] = (
        jnp.dot(x_ref[...].astype(jnp.bfloat16), wih_ref[...],
                preferred_element_type=jnp.float32)
        + b_ref[...]
    )
    acc = _run_bidir_lstm(gx_ref, whh_ref[...], None,
                          seq_len=T, batch=batch, hidden=hidden)   # sum_t h_t

    pooled = acc * (1.0 / T)                        # == torch.mean(lstm_out, dim=1)
    mu = jnp.mean(pooled, axis=-1, keepdims=True)
    var = jnp.mean((pooled - mu) ** 2, axis=-1, keepdims=True)
    y = (pooled - mu) * jax.lax.rsqrt(var + 1e-5)
    y = y * gam_ref[...] + bet_ref[...]             # LayerNorm(128)
    # Dropout(0.3) is identity in eval mode.
    out_ref[...] = (
        jnp.dot(y, wcls_ref[...], preferred_element_type=jnp.float32)
        + bcls_ref[...]
    )


def bilstm_head(x, w_ih, w_hh, bias, ln_g, ln_b, w_cls_pad, b_cls_pad,
                *, seq_len, batch, hidden):
    TB, Din = x.shape
    H2, G8 = 2 * hidden, 8 * hidden
    CP = w_cls_pad.shape[1]                         # padded to 128 lanes
    kernel = functools.partial(_bilstm_head_kernel,
                               seq_len=seq_len, batch=batch, hidden=hidden)
    return pl.pallas_call(
        kernel,
        out_shape=jax.ShapeDtypeStruct((batch, CP), jnp.float32),
        grid=(1,),
        in_specs=[
            pl.BlockSpec((TB, Din), lambda i: (0, 0)),
            pl.BlockSpec((Din, G8), lambda i: (0, 0)),
            pl.BlockSpec((H2, G8), lambda i: (0, 0)),
            pl.BlockSpec((1, G8), lambda i: (0, 0)),
            pl.BlockSpec((1, H2), lambda i: (0, 0)),
            pl.BlockSpec((1, H2), lambda i: (0, 0)),
            pl.BlockSpec((H2, CP), lambda i: (0, 0)),
            pl.BlockSpec((1, CP), lambda i: (0, 0)),
        ],
        out_specs=pl.BlockSpec((batch, CP), lambda i: (0, 0)),
        scratch_shapes=[pltpu.VMEM((TB, G8), jnp.float32)],
        compiler_params=pltpu.CompilerParams(
            dimension_semantics=("arbitrary",),
            vmem_limit_bytes=32 * 1024 * 1024),
    )(x, w_ih, w_hh, bias, ln_g, ln_b, w_cls_pad, b_cls_pad)


# ---------------------------------------------------------------------------
# Parameter construction (deterministic, synthetic).
# ---------------------------------------------------------------------------
def init_params(key, *, vocab=1000, max_pos=64, d_model=768, hidden=64,
                num_classes=2, logit_pad=128):
    H = hidden
    keys = jax.random.split(key, 16)
    ki = iter(keys)

    def u(k, shape, scale):
        return jax.random.uniform(k, shape, jnp.float32, -scale, scale)

    params = {
        # BART stub (embedding only — see TODO(synk) above).
        "tok_emb": jax.random.normal(next(ki), (vocab, d_model), jnp.float32) * 0.02,
        "pos_emb": jax.random.normal(next(ki), (max_pos, d_model), jnp.float32) * 0.02,
        # LayerNorm(128)
        "ln_gamma": jnp.ones((1, 2 * H), jnp.float32),
        "ln_beta": jnp.zeros((1, 2 * H), jnp.float32),
    }

    # Linear(128, num_classes), zero-padded to 128 output lanes for a
    # lane-dense logits store (sliced back to num_classes outside the kernel).
    sc = (2.0 * H) ** -0.5
    w_cls = u(next(ki), (2 * H, num_classes), sc)
    b_cls = u(next(ki), (1, num_classes), sc)
    params["w_cls_pad"] = jnp.zeros((2 * H, logit_pad), jnp.float32).at[:, :num_classes].set(w_cls)
    params["b_cls_pad"] = jnp.zeros((1, logit_pad), jnp.float32).at[:, :num_classes].set(b_cls)

    # 2-layer bidirectional LSTM.  Per layer we pre-fuse the two directions:
    #   W_ih: (Din, 8H) columns [fwd i,f,g,o | bwd i,f,g,o]
    #   W_hh: (2H, 8H) block-diagonal (fwd rows -> fwd cols, bwd rows -> bwd cols)
    #   b   : (1, 8H)  = b_ih + b_hh per direction, concatenated
    s = H ** -0.5
    layers = []
    for in_dim in (d_model, 2 * H):
        dirs = {}
        for d in ("fwd", "bwd"):
            k1, k2, k3, k4 = jax.random.split(next(ki), 4)
            dirs[d] = {
                "w_ih": u(k1, (in_dim, 4 * H), s),
                "w_hh": u(k2, (H, 4 * H), s),
                "b": u(k3, (1, 4 * H), s) + u(k4, (1, 4 * H), s),  # b_ih + b_hh
            }
        w_ih_cat = jnp.concatenate([dirs["fwd"]["w_ih"], dirs["bwd"]["w_ih"]], axis=1)
        w_hh_bd = jnp.zeros((2 * H, 8 * H), jnp.float32)
        w_hh_bd = w_hh_bd.at[:H, :4 * H].set(dirs["fwd"]["w_hh"])
        w_hh_bd = w_hh_bd.at[H:, 4 * H:].set(dirs["bwd"]["w_hh"])
        b_cat = jnp.concatenate([dirs["fwd"]["b"], dirs["bwd"]["b"]], axis=1)
        layers.append({
            "w_ih": w_ih_cat.astype(jnp.bfloat16),   # bf16 into the MXU
            "w_hh": w_hh_bd.astype(jnp.bfloat16),
            "b": b_cat,                              # f32 (folded into gx once)
        })
    params["lstm"] = layers
    return params


# ---------------------------------------------------------------------------
# Full forward pass.
# ---------------------------------------------------------------------------
@functools.partial(jax.jit, static_argnames=("num_classes",))
def forward(params, input_ids, attention_mask, *, num_classes=2):
    B, T = input_ids.shape
    H = params["ln_gamma"].shape[1] // 2

    # --- BART stub (plain-JAX glue): token + position embeddings, gathered
    #     directly into the time-major flat (T*B, 768) layout the LSTM kernels
    #     consume -> no separate (B, T, 768) transpose pass over HBM.
    # TODO(synk): replace with the real BART encoder when a checkpoint exists;
    #             the mask is applied multiplicatively to the embeddings here.
    ids_tm = input_ids.T.reshape(-1)                                   # (T*B,)
    pos_tm = jnp.repeat(jnp.arange(T, dtype=jnp.int32), B)             # (T*B,)
    mask_tm = attention_mask.T.reshape(-1, 1).astype(jnp.float32)      # (T*B, 1)
    x = (params["tok_emb"][ids_tm] + params["pos_emb"][pos_tm]) * mask_tm
    x = x.astype(jnp.bfloat16)                                         # bf16 -> MXU

    # --- layer 0: fused bidirectional LSTM (one pallas_call, both directions).
    l0 = params["lstm"][0]
    y = bilstm_layer(x, l0["w_ih"], l0["w_hh"], l0["b"],
                     seq_len=T, batch=B, hidden=H)                     # (T*B, 2H)
    # Inter-layer LSTM dropout(0.1) is identity in eval mode.

    # --- layer 1 + mean-pool + LayerNorm + Dropout(eval) + Linear, fused.
    l1 = params["lstm"][1]
    logits_pad = bilstm_head(y, l1["w_ih"], l1["w_hh"], l1["b"],
                             params["ln_gamma"], params["ln_beta"],
                             params["w_cls_pad"], params["b_cls_pad"],
                             seq_len=T, batch=B, hidden=H)             # (B, 128)
    return logits_pad[:, :num_classes]


if __name__ == "__main__":
    B, T = 2, 8
    d_model, hidden, num_classes, vocab = 768, 64, 2, 1000

    key = jax.random.PRNGKey(0)
    k_param, k_ids = jax.random.split(key)
    params = init_params(k_param, vocab=vocab, max_pos=T, d_model=d_model,
                         hidden=hidden, num_classes=num_classes)

    input_ids = jax.random.randint(k_ids, (B, T), 0, vocab, dtype=jnp.int32)
    attention_mask = jnp.ones((B, T), dtype=jnp.int32)

    logits = forward(params, input_ids, attention_mask, num_classes=num_classes)
    logits = jax.block_until_ready(logits)
    assert logits.shape == (B, num_classes) and logits.dtype == jnp.float32
    print("KERNEL_OK")
</pallas_src>

<mosaic_0001>
module attributes {stable_mosaic.version = 11 : i64} {
  func.func @_bilstm_seq_kernel(%arg0: i32, %arg1: memref<16x768xbf16, #tpu.memory_space<vmem>>, %arg2: memref<768x512xbf16, #tpu.memory_space<vmem>>, %arg3: memref<128x512xbf16, #tpu.memory_space<vmem>>, %arg4: memref<1x512xf32, #tpu.memory_space<vmem>>, %arg5: memref<16x128xf32, #tpu.memory_space<vmem>>, %arg6: memref<16x512xf32, #tpu.memory_space<vmem>>) attributes {dimension_semantics = [#tpu.dimension_semantics<arbitrary>], iteration_bounds = array<i64: 1>, scalar_prefetch = 0 : i64, scratch_operands = 1 : i64, tpu.core_type = #tpu.core_type<tc>, window_params = [{pipeline_mode = #tpu.pipeline_mode<synchronous>, transform_indices = @transform_0, window_bounds = array<i64: 16, 768>}, {pipeline_mode = #tpu.pipeline_mode<synchronous>, transform_indices = @transform_1, window_bounds = array<i64: 768, 512>}, {pipeline_mode = #tpu.pipeline_mode<synchronous>, transform_indices = @transform_2, window_bounds = array<i64: 128, 512>}, {pipeline_mode = #tpu.pipeline_mode<synchronous>, transform_indices = @transform_3, window_bounds = array<i64: 1, 512>}, {pipeline_mode = #tpu.pipeline_mode<synchronous>, transform_indices = @transform_4, window_bounds = array<i64: 16, 128>}]} {
    %c0 = arith.constant 0 : index
    %c0_0 = arith.constant 0 : index
    %0 = vector.load %arg1[%c0, %c0_0] : memref<16x768xbf16, #tpu.memory_space<vmem>>, vector<16x768xbf16>
    %c0_1 = arith.constant 0 : index
    %c0_2 = arith.constant 0 : index
    %1 = vector.load %arg2[%c0_1, %c0_2] : memref<768x512xbf16, #tpu.memory_space<vmem>>, vector<768x512xbf16>
    %cst = arith.constant dense<0.000000e+00> : vector<16x512xf32>
    %2 = tpu.matmul %0, %1, %cst {dimension_numbers = #tpu.dot_dimension_numbers<[1], [0], [0], [1], [0, 0, 1, 1], [], []>} : vector<16x768xbf16>, vector<768x512xbf16>, vector<16x512xf32> -> vector<16x512xf32>
    %c0_3 = arith.constant 0 : index
    %c0_4 = arith.constant 0 : index
    %3 = vector.load %arg4[%c0_3, %c0_4] : memref<1x512xf32, #tpu.memory_space<vmem>>, vector<1x512xf32>
    %4 = vector.broadcast %3 : vector<1x512xf32> to vector<16x512xf32>
    %5 = arith.addf %2, %4 : vector<16x512xf32>
    %c0_5 = arith.constant 0 : index
    %c0_6 = arith.constant 0 : index
    %6 = vector.load %arg6[%c0_5, %c0_6] : memref<16x512xf32, #tpu.memory_space<vmem>>, vector<16x512xf32>
    tpu.vector_store %arg6[%c0_5, %c0_6], %5 {strides = array<i32>} : memref<16x512xf32, #tpu.memory_space<vmem>>, vector<16x512xf32>,
    %c0_7 = arith.constant 0 : index
    %c0_8 = arith.constant 0 : index
    %7 = vector.load %arg3[%c0_7, %c0_8] : memref<128x512xbf16, #tpu.memory_space<vmem>>, vector<128x512xbf16>
    %8 = tpu.iota {dimensions = array<i32: 1>} : vector<2x512xi32>
    %c256_i32 = arith.constant 256 : i32
    %c0_i32 = arith.constant 0 : i32
    %9 = arith.cmpi eq, %c256_i32, %c0_i32 : i32
    %c1_i32 = arith.constant 1 : i32
    %10 = arith.select %9, %c1_i32, %c256_i32 : i32
    %11 = vector.broadcast %10 : i32 to vector<2x512xi32>
    %12 = arith.remsi %8, %11 : vector<2x512xi32>
    %c0_i32_9 = arith.constant 0 : i32
    %13 = vector.broadcast %c0_i32_9 : i32 to vector<2x512xi32>
    %14 = arith.cmpi ne, %12, %13 : vector<2x512xi32>
    %c0_i32_10 = arith.constant 0 : i32
    %15 = vector.broadcast %c0_i32_10 : i32 to vector<2x512xi32>
    %16 = arith.cmpi slt, %12, %15 : vector<2x512xi32>
    %c0_i32_11 = arith.constant 0 : i32
    %17 = arith.cmpi slt, %10, %c0_i32_11 : i32
    %18 = vector.broadcast %17 : i1 to vector<2x512xi1>
    %19 = vector.broadcast %18 : vector<2x512xi1> to vector<2x512xi1>
    %20 = arith.xori %16, %19 : vector<2x512xi1>
    %21 = arith.andi %20, %14 : vector<2x512xi1>
    %22 = vector.broadcast %10 : i32 to vector<2x512xi32>
    %23 = arith.addi %12, %22 : vector<2x512xi32>
    %24 = arith.select %21, %23, %12 : vector<2x512xi1>, vector<2x512xi32>
    %c128_i32 = arith.constant 128 : i32
    %25 = vector.broadcast %c128_i32 : i32 to vector<2x512xi32>
    %26 = arith.cmpi sge, %24, %25 : vector<2x512xi32>
    %c256_i32_12 = arith.constant 256 : i32
    %c0_i32_13 = arith.constant 0 : i32
    %27 = arith.cmpi eq, %c256_i32_12, %c0_i32_13 : i32
    %c1_i32_14 = arith.constant 1 : i32
    %28 = arith.select %27, %c1_i32_14, %c256_i32_12 : i32
    %29 = vector.broadcast %28 : i32 to vector<2x512xi32>
    %30 = arith.remsi %8, %29 : vector<2x512xi32>
    %c0_i32_15 = arith.constant 0 : i32
    %31 = vector.broadcast %c0_i32_15 : i32 to vector<2x512xi32>
    %32 = arith.cmpi ne, %30, %31 : vector<2x512xi32>
    %c0_i32_16 = arith.constant 0 : i32
    %33 = vector.broadcast %c0_i32_16 : i32 to vector<2x512xi32>
    %34 = arith.cmpi slt, %30, %33 : vector<2x512xi32>
    %c0_i32_17 = arith.constant 0 : i32
    %35 = arith.cmpi slt, %28, %c0_i32_17 : i32
    %36 = vector.broadcast %35 : i1 to vector<2x512xi1>
    %37 = vector.broadcast %36 : vector<2x512xi1> to vector<2x512xi1>
    %38 = arith.xori %34, %37 : vector<2x512xi1>
    %39 = arith.andi %38, %32 : vector<2x512xi1>
    %40 = vector.broadcast %28 : i32 to vector<2x512xi32>
    %41 = arith.addi %30, %40 : vector<2x512xi32>
    %42 = arith.select %39, %41, %30 : vector<2x512xi1>, vector<2x512xi32>
    %c192_i32 = arith.constant 192 : i32
    %43 = vector.broadcast %c192_i32 : i32 to vector<2x512xi32>
    %44 = arith.cmpi slt, %42, %43 : vector<2x512xi32>
    %45 = arith.andi %26, %44 : vector<2x512xi1>
    %cst_18 = arith.constant 1.000000e+00 : f32
    %cst_19 = arith.constant 5.000000e-01 : f32
    %46 = vector.broadcast %cst_18 : f32 to vector<2x512xf32>
    %47 = vector.broadcast %cst_19 : f32 to vector<2x512xf32>
    %48 = arith.select %45, %46, %47 : vector<2x512xi1>, vector<2x512xf32>
    %cst_20 = arith.constant 0.000000e+00 : f32
    %cst_21 = arith.constant 5.000000e-01 : f32
    %49 = vector.broadcast %cst_20 : f32 to vector<2x512xf32>
    %50 = vector.broadcast %cst_21 : f32 to vector<2x512xf32>
    %51 = arith.select %45, %49, %50 : vector<2x512xi1>, vector<2x512xf32>
    %cst_22 = arith.constant 0.000000e+00 : f32
    %52 = vector.broadcast %cst_22 : f32 to vector<2x128xf32>
    %c0_i32_23 = arith.constant 0 : i32
    %53 = arith.truncf %52 : vector<2x128xf32> to vector<2x128xbf16>
    %cst_24 = arith.constant dense<0.000000e+00> : vector<2x512xf32>
    %54 = tpu.matmul %53, %7, %cst_24 {dimension_numbers = #tpu.dot_dimension_numbers<[1], [0], [0], [1], [0, 0, 1, 1], [], []>} : vector<2x128xbf16>, vector<128x512xbf16>, vector<2x512xf32> -> vector<2x512xf32>
    %c2_i32 = arith.constant 2 : i32
    %55 = arith.muli %c0_i32_23, %c2_i32 : i32
    %56 = arith.index_cast %55 : i32 to index
    %c0_25 = arith.constant 0 : index
    %57 = vector.load %arg6[%56, %c0_25] : memref<16x512xf32, #tpu.memory_space<vmem>>, vector<2x256xf32>
    %c7_i32 = arith.constant 7 : i32
    %58 = arith.subi %c7_i32, %c0_i32_23 : i32
    %c2_i32_26 = arith.constant 2 : i32
    %59 = arith.muli %58, %c2_i32_26 : i32
    %60 = arith.index_cast %59 : i32 to index
    %c256 = arith.constant 256 : index
    %61 = vector.load %arg6[%60, %c256] : memref<16x512xf32, #tpu.memory_space<vmem>>, vector<2x256xf32>
    %62 = tpu.concatenate %57, %61 in 1 : vector<2x256xf32>, vector<2x256xf32> -> vector<2x512xf32>
    %63 = arith.addf %54, %62 : vector<2x512xf32>
    %64 = arith.mulf %63, %48 : vector<2x512xf32>
    %65 = math.tanh %64 : vector<2x512xf32>
    %66 = arith.mulf %65, %48 : vector<2x512xf32>
    %67 = arith.addf %66, %51 : vector<2x512xf32>
    %68 = vector.extract_strided_slice %67 {offsets = [0, 0], sizes = [2, 64], strides = [1, 1]} : vector<2x512xf32> to vector<2x64xf32>
    %69 = vector.extract_strided_slice %67 {offsets = [0, 256], sizes = [2, 64], strides = [1, 1]} : vector<2x512xf32> to vector<2x64xf32>
    %70 = tpu.concatenate %68, %69 in 1 : vector<2x64xf32>, vector<2x64xf32> -> vector<2x128xf32>
    %71 = vector.extract_strided_slice %67 {offsets = [0, 64], sizes = [2, 64], strides = [1, 1]} : vector<2x512xf32> to vector<2x64xf32>
    %72 = vector.extract_strided_slice %67 {offsets = [0, 320], sizes = [2, 64], strides = [1, 1]} : vector<2x512xf32> to vector<2x64xf32>
    %73 = tpu.concatenate %71, %72 in 1 : vector<2x64xf32>, vector<2x64xf32> -> vector<2x128xf32>
    %74 = vector.extract_strided_slice %67 {offsets = [0, 128], sizes = [2, 64], strides = [1, 1]} : vector<2x512xf32> to vector<2x64xf32>
    %75 = vector.extract_strided_slice %67 {offsets = [0, 384], sizes = [2, 64], strides = [1, 1]} : vector<2x512xf32> to vector<2x64xf32>
    %76 = tpu.concatenate %74, %75 in 1 : vector<2x64xf32>, vector<2x64xf32> -> vector<2x128xf32>
    %77 = vector.extract_strided_slice %67 {offsets = [0, 192], sizes = [2, 64], strides = [1, 1]} : vector<2x512xf32> to vector<2x64xf32>
    %78 = vector.extract_strided_slice %67 {offsets = [0, 448], sizes = [2, 64], strides = [1, 1]} : vector<2x512xf32> to vector<2x64xf32>
    %79 = tpu.concatenate %77, %78 in 1 : vector<2x64xf32>, vector<2x64xf32> -> vector<2x128xf32>
    %80 = arith.mulf %73, %52 : vector<2x128xf32>
    %81 = arith.mulf %70, %76 : vector<2x128xf32>
    %82 = arith.addf %80, %81 : vector<2x128xf32>
    %83 = math.tanh %82 : vector<2x128xf32>
    %84 = arith.mulf %79, %83 : vector<2x128xf32>
    %85 = vector.extract_strided_slice %84 {offsets = [0, 0], sizes = [2, 64], strides = [1, 1]} : vector<2x128xf32> to vector<2x64xf32>
    %c2_i32_27 = arith.constant 2 : i32
    %86 = arith.muli %c0_i32_23, %c2_i32_27 : i32
    %87 = arith.index_cast %86 : i32 to index
    %c0_28 = arith.constant 0 : index
    %88 = vector.load %arg5[%87, %c0_28] : memref<16x128xf32, #tpu.memory_space<vmem>>, vector<2x64xf32>
    tpu.vector_store %arg5[%87, %c0_28], %85 {strides = array<i32>} : memref<16x128xf32, #tpu.memory_space<vmem>>, vector<2x64xf32>,
    %89 = vector.extract_strided_slice %84 {offsets = [0, 64], sizes = [2, 64], strides = [1, 1]} : vector<2x128xf32> to vector<2x64xf32>
    %c7_i32_29 = arith.constant 7 : i32
    %90 = arith.subi %c7_i32_29, %c0_i32_23 : i32
    %c2_i32_30 = arith.constant 2 : i32
    %91 = arith.muli %90, %c2_i32_30 : i32
    %92 = arith.index_cast %91 : i32 to index
    %c64 = arith.constant 64 : index
    %93 = vector.load %arg5[%92, %c64] : memref<16x128xf32, #tpu.memory_space<vmem>>, vector<2x64xf32>
    tpu.vector_store %arg5[%92, %c64], %89 {strides = array<i32>} : memref<16x128xf32, #tpu.memory_space<vmem>>, vector<2x64xf32>,
    %c1_i32_31 = arith.constant 1 : i32
    %94 = arith.truncf %84 : vector<2x128xf32> to vector<2x128xbf16>
    %cst_32 = arith.constant dense<0.000000e+00> : vector<2x512xf32>
    %95 = tpu.matmul %94, %7, %cst_32 {dimension_numbers = #tpu.dot_dimension_numbers<[1], [0], [0], [1], [0, 0, 1, 1], [], []>} : vector<2x128xbf16>, vector<128x512xbf16>, vector<2x512xf32> -> vector<2x512xf32>
    %c2_i32_33 = arith.constant 2 : i32
    %96 = arith.muli %c1_i32_31, %c2_i32_33 : i32
    %97 = arith.index_cast %96 : i32 to index
    %c0_34 = arith.constant 0 : index
    %98 = vector.load %arg6[%97, %c0_34] : memref<16x512xf32, #tpu.memory_space<vmem>>, vector<2x256xf32>
    %c7_i32_35 = arith.constant 7 : i32
    %99 = arith.subi %c7_i32_35, %c1_i32_31 : i32
    %c2_i32_36 = arith.constant 2 : i32
    %100 = arith.muli %99, %c2_i32_36 : i32
    %101 = arith.index_cast %100 : i32 to index
    %c256_37 = arith.constant 256 : index
    %102 = vector.load %arg6[%101, %c256_37] : memref<16x512xf32, #tpu.memory_space<vmem>>, vector<2x256xf32>
    %103 = tpu.concatenate %98, %102 in 1 : vector<2x256xf32>, vector<2x256xf32> -> vector<2x512xf32>
    %104 = arith.addf %95, %103 : vector<2x512xf32>
    %105 = arith.mulf %104, %48 : vector<2x512xf32>
    %106 = math.tanh %105 : vector<2x512xf32>
    %107 = arith.mulf %106, %48 : vector<2x512xf32>
    %108 = arith.addf %107, %51 : vector<2x512xf32>
    %109 = vector.extract_strided_slice %108 {offsets = [0, 0], sizes = [2, 64], strides = [1, 1]} : vector<2x512xf32> to vector<2x64xf32>
    %110 = vector.extract_strided_slice %108 {offsets = [0, 256], sizes = [2, 64], strides = [1, 1]} : vector<2x512xf32> to vector<2x64xf32>
    %111 = tpu.concatenate %109, %110 in 1 : vector<2x64xf32>, vector<2x64xf32> -> vector<2x128xf32>
    %112 = vector.extract_strided_slice %108 {offsets = [0, 64], sizes = [2, 64], strides = [1, 1]} : vector<2x512xf32> to vector<2x64xf32>
    %113 = vector.extract_strided_slice %108 {offsets = [0, 320], sizes = [2, 64], strides = [1, 1]} : vector<2x512xf32> to vector<2x64xf32>
    %114 = tpu.concatenate %112, %113 in 1 : vector<2x64xf32>, vector<2x64xf32> -> vector<2x128xf32>
    %115 = vector.extract_strided_slice %108 {offsets = [0, 128], sizes = [2, 64], strides = [1, 1]} : vector<2x512xf32> to vector<2x64xf32>
    %116 = vector.extract_strided_slice %108 {offsets = [0, 384], sizes = [2, 64], strides = [1, 1]} : vector<2x512xf32> to vector<2x64xf32>
    %117 = tpu.concatenate %115, %116 in 1 : vector<2x64xf32>, vector<2x64xf32> -> vector<2x128xf32>
    %118 = vector.extract_strided_slice %108 {offsets = [0, 192], sizes = [2, 64], strides = [1, 1]} : vector<2x512xf32> to vector<2x64xf32>
    %119 = vector.extract_strided_slice %108 {offsets = [0, 448], sizes = [2, 64], strides = [1, 1]} : vector<2x512xf32> to vector<2x64xf32>
    %120 = tpu.concatenate %118, %119 in 1 : vector<2x64xf32>, vector<2x64xf32> -> vector<2x128xf32>
    %121 = arith.mulf %114, %82 : vector<2x128xf32>
    %122 = arith.mulf %111, %117 : vector<2x128xf32>
    %123 = arith.addf %121, %122 : vector<2x128xf32>
    %124 = math.tanh %123 : vector<2x128xf32>
    %125 = arith.mulf %120, %124 : vector<2x128xf32>
    %126 = vector.extract_strided_slice %125 {offsets = [0, 0], sizes = [2, 64], strides = [1, 1]} : vector<2x128xf32> to vector<2x64xf32>
    %c2_i32_38 = arith.constant 2 : i32
    %127 = arith.muli %c1_i32_31, %c2_i32_38 : i32
    %128 = arith.index_cast %127 : i32 to index
    %c0_39 = arith.constant 0 : index
    %129 = vector.load %arg5[%128, %c0_39] : memref<16x128xf32, #tpu.memory_space<vmem>>, vector<2x64xf32>
    tpu.vector_store %arg5[%128, %c0_39], %126 {strides = array<i32>} : memref<16x128xf32, #tpu.memory_space<vmem>>, vector<2x64xf32>,
    %130 = vector.extract_strided_slice %125 {offsets = [0, 64], sizes = [2, 64], strides = [1, 1]} : vector<2x128xf32> to vector<2x64xf32>
    %c7_i32_40 = arith.constant 7 : i32
    %131 = arith.subi %c7_i32_40, %c1_i32_31 : i32
    %c2_i32_41 = arith.constant 2 : i32
    %132 = arith.muli %131, %c2_i32_41 : i32
    %133 = arith.index_cast %132 : i32 to index
    %c64_42 = arith.constant 64 : index
    %134 = vector.load %arg5[%133, %c64_42] : memref<16x128xf32, #tpu.memory_space<vmem>>, vector<2x64xf32>
    tpu.vector_store %arg5[%133, %c64_42], %130 {strides = array<i32>} : memref<16x128xf32, #tpu.memory_space<vmem>>, vector<2x64xf32>,
    %c2_i32_43 = arith.constant 2 : i32
    %135 = arith.truncf %125 : vector<2x128xf32> to vector<2x128xbf16>
    %cst_44 = arith.constant dense<0.000000e+00> : vector<2x512xf32>
    %136 = tpu.matmul %135, %7, %cst_44 {dimension_numbers = #tpu.dot_dimension_numbers<[1], [0], [0], [1], [0, 0, 1, 1], [], []>} : vector<2x128xbf16>, vector<128x512xbf16>, vector<2x512xf32> -> vector<2x512xf32>
    %c2_i32_45 = arith.constant 2 : i32
    %137 = arith.muli %c2_i32_43, %c2_i32_45 : i32
    %138 = arith.index_cast %137 : i32 to index
    %c0_46 = arith.constant 0 : index
    %139 = vector.load %arg6[%138, %c0_46] : memref<16x512xf32, #tpu.memory_space<vmem>>, vector<2x256xf32>
    %c7_i32_47 = arith.constant 7 : i32
    %140 = arith.subi %c7_i32_47, %c2_i32_43 : i32
    %c2_i32_48 = arith.constant 2 : i32
    %141 = arith.muli %140, %c2_i32_48 : i32
    %142 = arith.index_cast %141 : i32 to index
    %c256_49 = arith.constant 256 : index
    %143 = vector.load %arg6[%142, %c256_49] : memref<16x512xf32, #tpu.memory_space<vmem>>, vector<2x256xf32>
    %144 = tpu.concatenate %139, %143 in 1 : vector<2x256xf32>, vector<2x256xf32> -> vector<2x512xf32>
    %145 = arith.addf %136, %144 : vector<2x512xf32>
    %146 = arith.mulf %145, %48 : vector<2x512xf32>
    %147 = math.tanh %146 : vector<2x512xf32>
    %148 = arith.mulf %147, %48 : vector<2x512xf32>
    %149 = arith.addf %148, %51 : vector<2x512xf32>
    %150 = vector.extract_strided_slice %149 {offsets = [0, 0], sizes = [2, 64], strides = [1, 1]} : vector<2x512xf32> to vector<2x64xf32>
    %151 = vector.extract_strided_slice %149 {offsets = [0, 256], sizes = [2, 64], strides = [1, 1]} : vector<2x512xf32> to vector<2x64xf32>
    %152 = tpu.concatenate %150, %151 in 1 : vector<2x64xf32>, vector<2x64xf32> -> vector<2x128xf32>
    %153 = vector.extract_strided_slice %149 {offsets = [0, 64], sizes = [2, 64], strides = [1, 1]} : vector<2x512xf32> to vector<2x64xf32>
    %154 = vector.extract_strided_slice %149 {offsets = [0, 320], sizes = [2, 64], strides = [1, 1]} : vector<2x512xf32> to vector<2x64xf32>
    %155 = tpu.concatenate %153, %154 in 1 : vector<2x64xf32>, vector<2x64xf32> -> vector<2x128xf32>
    %156 = vector.extract_strided_slice %149 {offsets = [0, 128], sizes = [2, 64], strides = [1, 1]} : vector<2x512xf32> to vector<2x64xf32>
    %157 = vector.extract_strided_slice %149 {offsets = [0, 384], sizes = [2, 64], strides = [1, 1]} : vector<2x512xf32> to vector<2x64xf32>
    %158 = tpu.concatenate %156, %157 in 1 : vector<2x64xf32>, vector<2x64xf32> -> vector<2x128xf32>
    %159 = vector.extract_strided_slice %149 {offsets = [0, 192], sizes = [2, 64], strides = [1, 1]} : vector<2x512xf32> to vector<2x64xf32>
    %160 = vector.extract_strided_slice %149 {offsets = [0, 448], sizes = [2, 64], strides = [1, 1]} : vector<2x512xf32> to vector<2x64xf32>
    %161 = tpu.concatenate %159, %160 in 1 : vector<2x64xf32>, vector<2x64xf32> -> vector<2x128xf32>
    %162 = arith.mulf %155, %123 : vector<2x128xf32>
    %163 = arith.mulf %152, %158 : vector<2x128xf32>
    %164 = arith.addf %162, %163 : vector<2x128xf32>
    %165 = math.tanh %164 : vector<2x128xf32>
    %166 = arith.mulf %161, %165 : vector<2x128xf32>
    %167 = vector.extract_strided_slice %166 {offsets = [0, 0], sizes = [2, 64], strides = [1, 1]} : vector<2x128xf32> to vector<2x64xf32>
    %c2_i32_50 = arith.constant 2 : i32
    %168 = arith.muli %c2_i32_43, %c2_i32_50 : i32
    %169 = arith.index_cast %168 : i32 to index
    %c0_51 = arith.constant 0 : index
    %170 = vector.load %arg5[%169, %c0_51] : memref<16x128xf32, #tpu.memory_space<vmem>>, vector<2x64xf32>
    tpu.vector_store %arg5[%169, %c0_51], %167 {strides = array<i32>} : memref<16x128xf32, #tpu.memory_space<vmem>>, vector<2x64xf32>,
    %171 = vector.extract_strided_slice %166 {offsets = [0, 64], sizes = [2, 64], strides = [1, 1]} : vector<2x128xf32> to vector<2x64xf32>
    %c7_i32_52 = arith.constant 7 : i32
    %172 = arith.subi %c7_i32_52, %c2_i32_43 : i32
    %c2_i32_53 = arith.constant 2 : i32
    %173 = arith.muli %172, %c2_i32_53 : i32
    %174 = arith.index_cast %173 : i32 to index
    %c64_54 = arith.constant 64 : index
    %175 = vector.load %arg5[%174, %c64_54] : memref<16x128xf32, #tpu.memory_space<vmem>>, vector<2x64xf32>
    tpu.vector_store %arg5[%174, %c64_54], %171 {strides = array<i32>} : memref<16x128xf32, #tpu.memory_space<vmem>>, vector<2x64xf32>,
    %c3_i32 = arith.constant 3 : i32
    %176 = arith.truncf %166 : vector<2x128xf32> to vector<2x128xbf16>
    %cst_55 = arith.constant dense<0.000000e+00> : vector<2x512xf32>
    %177 = tpu.matmul %176, %7, %cst_55 {dimension_numbers = #tpu.dot_dimension_numbers<[1], [0], [0], [1], [0, 0, 1, 1], [], []>} : vector<2x128xbf16>, vector<128x512xbf16>, vector<2x512xf32> -> vector<2x512xf32>
    %c2_i32_56 = arith.constant 2 : i32
    %178 = arith.muli %c3_i32, %c2_i32_56 : i32
    %179 = arith.index_cast %178 : i32 to index
    %c0_57 = arith.constant 0 : index
    %180 = vector.load %arg6[%179, %c0_57] : memref<16x512xf32, #tpu.memory_space<vmem>>, vector<2x256xf32>
    %c7_i32_58 = arith.constant 7 : i32
    %181 = arith.subi %c7_i32_58, %c3_i32 : i32
    %c2_i32_59 = arith.constant 2 : i32
    %182 = arith.muli %181, %c2_i32_59 : i32
    %183 = arith.index_cast %182 : i32 to index
    %c256_60 = arith.constant 256 : index
    %184 = vector.load %arg6[%183, %c256_60] : memref<16x512xf32, #tpu.memory_space<vmem>>, vector<2x256xf32>
    %185 = tpu.concatenate %180, %184 in 1 : vector<2x256xf32>, vector<2x256xf32> -> vector<2x512xf32>
    %186 = arith.addf %177, %185 : vector<2x512xf32>
    %187 = arith.mulf %186, %48 : vector<2x512xf32>
    %188 = math.tanh %187 : vector<2x512xf32>
    %189 = arith.mulf %188, %48 : vector<2x512xf32>
    %190 = arith.addf %189, %51 : vector<2x512xf32>
    %191 = vector.extract_strided_slice %190 {offsets = [0, 0], sizes = [2, 64], strides = [1, 1]} : vector<2x512xf32> to vector<2x64xf32>
    %192 = vector.extract_strided_slice %190 {offsets = [0, 256], sizes = [2, 64], strides = [1, 1]} : vector<2x512xf32> to vector<2x64xf32>
    %193 = tpu.concatenate %191, %192 in 1 : vector<2x64xf32>, vector<2x64xf32> -> vector<2x128xf32>
    %194 = vector.extract_strided_slice %190 {offsets = [0, 64], sizes = [2, 64], strides = [1, 1]} : vector<2x512xf32> to vector<2x64xf32>
    %195 = vector.extract_strided_slice %190 {offsets = [0, 320], sizes = [2, 64], strides = [1, 1]} : vector<2x512xf32> to vector<2x64xf32>
    %196 = tpu.concatenate %194, %195 in 1 : vector<2x64xf32>, vector<2x64xf32> -> vector<2x128xf32>
    %197 = vector.extract_strided_slice %190 {offsets = [0, 128], sizes = [2, 64], strides = [1, 1]} : vector<2x512xf32> to vector<2x64xf32>
    %198 = vector.extract_strided_slice %190 {offsets = [0, 384], sizes = [2, 64], strides = [1, 1]} : vector<2x512xf32> to vector<2x64xf32>
    %199 = tpu.concatenate %197, %198 in 1 : vector<2x64xf32>, vector<2x64xf32> -> vector<2x128xf32>
    %200 = vector.extract_strided_slice %190 {offsets = [0, 192], sizes = [2, 64], strides = [1, 1]} : vector<2x512xf32> to vector<2x64xf32>
    %201 = vector.extract_strided_slice %190 {offsets = [0, 448], sizes = [2, 64], strides = [1, 1]} : vector<2x512xf32> to vector<2x64xf32>
    %202 = tpu.concatenate %200, %201 in 1 : vector<2x64xf32>, vector<2x64xf32> -> vector<2x128xf32>
    %203 = arith.mulf %196, %164 : vector<2x128xf32>
    %204 = arith.mulf %193, %199 : vector<2x128xf32>
    %205 = arith.addf %203, %204 : vector<2x128xf32>
    %206 = math.tanh %205 : vector<2x128xf32>
    %207 = arith.mulf %202, %206 : vector<2x128xf32>
    %208 = vector.extract_strided_slice %207 {offsets = [0, 0], sizes = [2, 64], strides = [1, 1]} : vector<2x128xf32> to vector<2x64xf32>
    %c2_i32_61 = arith.constant 2 : i32
    %209 = arith.muli %c3_i32, %c2_i32_61 : i32
    %210 = arith.index_cast %209 : i32 to index
    %c0_62 = arith.constant 0 : index
    %211 = vector.load %arg5[%210, %c0_62] : memref<16x128xf32, #tpu.memory_space<vmem>>, vector<2x64xf32>
    tpu.vector_store %arg5[%210, %c0_62], %208 {strides = array<i32>} : memref<16x128xf32, #tpu.memory_space<vmem>>, vector<2x64xf32>,
    %212 = vector.extract_strided_slice %207 {offsets = [0, 64], sizes = [2, 64], strides = [1, 1]} : vector<2x128xf32> to vector<2x64xf32>
    %c7_i32_63 = arith.constant 7 : i32
    %213 = arith.subi %c7_i32_63, %c3_i32 : i32
    %c2_i32_64 = arith.constant 2 : i32
    %214 = arith.muli %213, %c2_i32_64 : i32
    %215 = arith.index_cast %214 : i32 to index
    %c64_65 = arith.constant 64 : index
    %216 = vector.load %arg5[%215, %c64_65] : memref<16x128xf32, #tpu.memory_space<vmem>>, vector<2x64xf32>
    tpu.vector_store %arg5[%215, %c64_65], %212 {strides = array<i32>} : memref<16x128xf32, #tpu.memory_space<vmem>>, vector<2x64xf32>,
    %c4_i32 = arith.constant 4 : i32
    %217 = arith.truncf %207 : vector<2x128xf32> to vector<2x128xbf16>
    %cst_66 = arith.constant dense<0.000000e+00> : vector<2x512xf32>
    %218 = tpu.matmul %217, %7, %cst_66 {dimension_numbers = #tpu.dot_dimension_numbers<[1], [0], [0], [1], [0, 0, 1, 1], [], []>} : vector<2x128xbf16>, vector<128x512xbf16>, vector<2x512xf32> -> vector<2x512xf32>
    %c2_i32_67 = arith.constant 2 : i32
    %219 = arith.muli %c4_i32, %c2_i32_67 : i32
    %220 = arith.index_cast %219 : i32 to index
    %c0_68 = arith.constant 0 : index
    %221 = vector.load %arg6[%220, %c0_68] : memref<16x512xf32, #tpu.memory_space<vmem>>, vector<2x256xf32>
    %c7_i32_69 = arith.constant 7 : i32
    %222 = arith.subi %c7_i32_69, %c4_i32 : i32
    %c2_i32_70 = arith.constant 2 : i32
    %223 = arith.muli %222, %c2_i32_70 : i32
    %224 = arith.index_cast %223 : i32 to index
    %c256_71 = arith.constant 256 : index
    %225 = vector.load %arg6[%224, %c256_71] : memref<16x512xf32, #tpu.memory_space<vmem>>, vector<2x256xf32>
    %226 = tpu.concatenate %221, %225 in 1 : vector<2x256xf32>, vector<2x256xf32> -> vector<2x512xf32>
    %227 = arith.addf %218, %226 : vector<2x512xf32>
    %228 = arith.mulf %227, %48 : vector<2x512xf32>
    %229 = math.tanh %228 : vector<2x512xf32>
    %230 = arith.mulf %229, %48 : vector<2x512xf32>
    %231 = arith.addf %230, %51 : vector<2x512xf32>
    %232 = vector.extract_strided_slice %231 {offsets = [0, 0], sizes = [2, 64], strides = [1, 1]} : vector<2x512xf32> to vector<2x64xf32>
    %233 = vector.extract_strided_slice %231 {offsets = [0, 256], sizes = [2, 64], strides = [1, 1]} : vector<2x512xf32> to vector<2x64xf32>
    %234 = tpu.concatenate %232, %233 in 1 : vector<2x64xf32>, vector<2x64xf32> -> vector<2x128xf32>
    %235 = vector.extract_strided_slice %231 {offsets = [0, 64], sizes = [2, 64], strides = [1, 1]} : vector<2x512xf32> to vector<2x64xf32>
    %236 = vector.extract_strided_slice %231 {offsets = [0, 320], sizes = [2, 64], strides = [1, 1]} : vector<2x512xf32> to vector<2x64xf32>
    %237 = tpu.concatenate %235, %236 in 1 : vector<2x64xf32>, vector<2x64xf32> -> vector<2x128xf32>
    %238 = vector.extract_strided_slice %231 {offsets = [0, 128], sizes = [2, 64], strides = [1, 1]} : vector<2x512xf32> to vector<2x64xf32>
    %239 = vector.extract_strided_slice %231 {offsets = [0, 384], sizes = [2, 64], strides = [1, 1]} : vector<2x512xf32> to vector<2x64xf32>
    %240 = tpu.concatenate %238, %239 in 1 : vector<2x64xf32>, vector<2x64xf32> -> vector<2x128xf32>
    %241 = vector.extract_strided_slice %231 {offsets = [0, 192], sizes = [2, 64], strides = [1, 1]} : vector<2x512xf32> to vector<2x64xf32>
    %242 = vector.extract_strided_slice %231 {offsets = [0, 448], sizes = [2, 64], strides = [1, 1]} : vector<2x512xf32> to vector<2x64xf32>
    %243 = tpu.concatenate %241, %242 in 1 : vector<2x64xf32>, vector<2x64xf32> -> vector<2x128xf32>
    %244 = arith.mulf %237, %205 : vector<2x128xf32>
    %245 = arith.mulf %234, %240 : vector<2x128xf32>
    %246 = arith.addf %244, %245 : vector<2x128xf32>
    %247 = math.tanh %246 : vector<2x128xf32>
    %248 = arith.mulf %243, %247 : vector<2x128xf32>
    %249 = vector.extract_strided_slice %248 {offsets = [0, 0], sizes = [2, 64], strides = [1, 1]} : vector<2x128xf32> to vector<2x64xf32>
    %c2_i32_72 = arith.constant 2 : i32
    %250 = arith.muli %c4_i32, %c2_i32_72 : i32
    %251 = arith.index_cast %250 : i32 to index
    %c0_73 = arith.constant 0 : index
    %252 = vector.load %arg5[%251, %c0_73] : memref<16x128xf32, #tpu.memory_space<vmem>>, vector<2x64xf32>
    tpu.vector_store %arg5[%251, %c0_73], %249 {strides = array<i32>} : memref<16x128xf32, #tpu.memory_space<vmem>>, vector<2x64xf32>,
    %253 = vector.extract_strided_slice %248 {offsets = [0, 64], sizes = [2, 64], strides = [1, 1]} : vector<2x128xf32> to vector<2x64xf32>
    %c7_i32_74 = arith.constant 7 : i32
    %254 = arith.subi %c7_i32_74, %c4_i32 : i32
    %c2_i32_75 = arith.constant 2 : i32
    %255 = arith.muli %254, %c2_i32_75 : i32
    %256 = arith.index_cast %255 : i32 to index
    %c64_76 = arith.constant 64 : index
    %257 = vector.load %arg5[%256, %c64_76] : memref<16x128xf32, #tpu.memory_space<vmem>>, vector<2x64xf32>
    tpu.vector_store %arg5[%256, %c64_76], %253 {strides = array<i32>} : memref<16x128xf32, #tpu.memory_space<vmem>>, vector<2x64xf32>,
    %c5_i32 = arith.constant 5 : i32
    %258 = arith.truncf %248 : vector<2x128xf32> to vector<2x128xbf16>
    %cst_77 = arith.constant dense<0.000000e+00> : vector<2x512xf32>
    %259 = tpu.matmul %258, %7, %cst_77 {dimension_numbers = #tpu.dot_dimension_numbers<[1], [0], [0], [1], [0, 0, 1, 1], [], []>} : vector<2x128xbf16>, vector<128x512xbf16>, vector<2x512xf32> -> vector<2x512xf32>
    %c2_i32_78 = arith.constant 2 : i32
    %260 = arith.muli %c5_i32, %c2_i32_78 : i32
    %261 = arith.index_cast %260 : i32 to index
    %c0_79 = arith.constant 0 : index
    %262 = vector.load %arg6[%261, %c0_79] : memref<16x512xf32, #tpu.memory_space<vmem>>, vector<2x256xf32>
    %c7_i32_80 = arith.constant 7 : i32
    %263 = arith.subi %c7_i32_80, %c5_i32 : i32
    %c2_i32_81 = arith.constant 2 : i32
    %264 = arith.muli %263, %c2_i32_81 : i32
    %265 = arith.index_cast %264 : i32 to index
    %c256_82 = arith.constant 256 : index
    %266 = vector.load %arg6[%265, %c256_82] : memref<16x512xf32, #tpu.memory_space<vmem>>, vector<2x256xf32>
    %267 = tpu.concatenate %262, %266 in 1 : vector<2x256xf32>, vector<2x256xf32> -> vector<2x512xf32>
    %268 = arith.addf %259, %267 : vector<2x512xf32>
    %269 = arith.mulf %268, %48 : vector<2x512xf32>
    %270 = math.tanh %269 : vector<2x512xf32>
    %271 = arith.mulf %270, %48 : vector<2x512xf32>
    %272 = arith.addf %271, %51 : vector<2x512xf32>
    %273 = vector.extract_strided_slice %272 {offsets = [0, 0], sizes = [2, 64], strides = [1, 1]} : vector<2x512xf32> to vector<2x64xf32>
    %274 = vector.extract_strided_slice %272 {offsets = [0, 256], sizes = [2, 64], strides = [1, 1]} : vector<2x512xf32> to vector<2x64xf32>
    %275 = tpu.concatenate %273, %274 in 1 : vector<2x64xf32>, vector<2x64xf32> -> vector<2x128xf32>
    %276 = vector.extract_strided_slice %272 {offsets = [0, 64], sizes = [2, 64], strides = [1, 1]} : vector<2x512xf32> to vector<2x64xf32>
    %277 = vector.extract_strided_slice %272 {offsets = [0, 320], sizes = [2, 64], strides = [1, 1]} : vector<2x512xf32> to vector<2x64xf32>
    %278 = tpu.concatenate %276, %277 in 1 : vector<2x64xf32>, vector<2x64xf32> -> vector<2x128xf32>
    %279 = vector.extract_strided_slice %272 {offsets = [0, 128], sizes = [2, 64], strides = [1, 1]} : vector<2x512xf32> to vector<2x64xf32>
    %280 = vector.extract_strided_slice %272 {offsets = [0, 384], sizes = [2, 64], strides = [1, 1]} : vector<2x512xf32> to vector<2x64xf32>
    %281 = tpu.concatenate %279, %280 in 1 : vector<2x64xf32>, vector<2x64xf32> -> vector<2x128xf32>
    %282 = vector.extract_strided_slice %272 {offsets = [0, 192], sizes = [2, 64], strides = [1, 1]} : vector<2x512xf32> to vector<2x64xf32>
    %283 = vector.extract_strided_slice %272 {offsets = [0, 448], sizes = [2, 64], strides = [1, 1]} : vector<2x512xf32> to vector<2x64xf32>
    %284 = tpu.concatenate %282, %283 in 1 : vector<2x64xf32>, vector<2x64xf32> -> vector<2x128xf32>
    %285 = arith.mulf %278, %246 : vector<2x128xf32>
    %286 = arith.mulf %275, %281 : vector<2x128xf32>
    %287 = arith.addf %285, %286 : vector<2x128xf32>
    %288 = math.tanh %287 : vector<2x128xf32>
    %289 = arith.mulf %284, %288 : vector<2x128xf32>
    %290 = vector.extract_strided_slice %289 {offsets = [0, 0], sizes = [2, 64], strides = [1, 1]} : vector<2x128xf32> to vector<2x64xf32>
    %c2_i32_83 = arith.constant 2 : i32
    %291 = arith.muli %c5_i32, %c2_i32_83 : i32
    %292 = arith.index_cast %291 : i32 to index
    %c0_84 = arith.constant 0 : index
    %293 = vector.load %arg5[%292, %c0_84] : memref<16x128xf32, #tpu.memory_space<vmem>>, vector<2x64xf32>
    tpu.vector_store %arg5[%292, %c0_84], %290 {strides = array<i32>} : memref<16x128xf32, #tpu.memory_space<vmem>>, vector<2x64xf32>,
    %294 = vector.extract_strided_slice %289 {offsets = [0, 64], sizes = [2, 64], strides = [1, 1]} : vector<2x128xf32> to vector<2x64xf32>
    %c7_i32_85 = arith.constant 7 : i32
    %295 = arith.subi %c7_i32_85, %c5_i32 : i32
    %c2_i32_86 = arith.constant 2 : i32
    %296 = arith.muli %295, %c2_i32_86 : i32
    %297 = arith.index_cast %296 : i32 to index
    %c64_87 = arith.constant 64 : index
    %298 = vector.load %arg5[%297, %c64_87] : memref<16x128xf32, #tpu.memory_space<vmem>>, vector<2x64xf32>
    tpu.vector_store %arg5[%297, %c64_87], %294 {strides = array<i32>} : memref<16x128xf32, #tpu.memory_space<vmem>>, vector<2x64xf32>,
    %c6_i32 = arith.constant 6 : i32
    %299 = arith.truncf %289 : vector<2x128xf32> to vector<2x128xbf16>
    %cst_88 = arith.constant dense<0.000000e+00> : vector<2x512xf32>
    %300 = tpu.matmul %299, %7, %cst_88 {dimension_numbers = #tpu.dot_dimension_numbers<[1], [0], [0], [1], [0, 0, 1, 1], [], []>} : vector<2x128xbf16>, vector<128x512xbf16>, vector<2x512xf32> -> vector<2x512xf32>
    %c2_i32_89 = arith.constant 2 : i32
    %301 = arith.muli %c6_i32, %c2_i32_89 : i32
    %302 = arith.index_cast %301 : i32 to index
    %c0_90 = arith.constant 0 : index
    %303 = vector.load %arg6[%302, %c0_90] : memref<16x512xf32, #tpu.memory_space<vmem>>, vector<2x256xf32>
    %c7_i32_91 = arith.constant 7 : i32
    %304 = arith.subi %c7_i32_91, %c6_i32 : i32
    %c2_i32_92 = arith.constant 2 : i32
    %305 = arith.muli %304, %c2_i32_92 : i32
    %306 = arith.index_cast %305 : i32 to index
    %c256_93 = arith.constant 256 : index
    %307 = vector.load %arg6[%306, %c256_93] : memref<16x512xf32, #tpu.memory_space<vmem>>, vector<2x256xf32>
    %308 = tpu.concatenate %303, %307 in 1 : vector<2x256xf32>, vector<2x256xf32> -> vector<2x512xf32>
    %309 = arith.addf %300, %308 : vector<2x512xf32>
    %310 = arith.mulf %309, %48 : vector<2x512xf32>
    %311 = math.tanh %310 : vector<2x512xf32>
    %312 = arith.mulf %311, %48 : vector<2x512xf32>
    %313 = arith.addf %312, %51 : vector<2x512xf32>
    %314 = vector.extract_strided_slice %313 {offsets = [0, 0], sizes = [2, 64], strides = [1, 1]} : vector<2x512xf32> to vector<2x64xf32>
    %315 = vector.extract_strided_slice %313 {offsets = [0, 256], sizes = [2, 64], strides = [1, 1]} : vector<2x512xf32> to vector<2x64xf32>
    %316 = tpu.concatenate %314, %315 in 1 : vector<2x64xf32>, vector<2x64xf32> -> vector<2x128xf32>
    %317 = vector.extract_strided_slice %313 {offsets = [0, 64], sizes = [2, 64], strides = [1, 1]} : vector<2x512xf32> to vector<2x64xf32>
    %318 = vector.extract_strided_slice %313 {offsets = [0, 320], sizes = [2, 64], strides = [1, 1]} : vector<2x512xf32> to vector<2x64xf32>
    %319 = tpu.concatenate %317, %318 in 1 : vector<2x64xf32>, vector<2x64xf32> -> vector<2x128xf32>
    %320 = vector.extract_strided_slice %313 {offsets = [0, 128], sizes = [2, 64], strides = [1, 1]} : vector<2x512xf32> to vector<2x64xf32>
    %321 = vector.extract_strided_slice %313 {offsets = [0, 384], sizes = [2, 64], strides = [1, 1]} : vector<2x512xf32> to vector<2x64xf32>
    %322 = tpu.concatenate %320, %321 in 1 : vector<2x64xf32>, vector<2x64xf32> -> vector<2x128xf32>
    %323 = vector.extract_strided_slice %313 {offsets = [0, 192], sizes = [2, 64], strides = [1, 1]} : vector<2x512xf32> to vector<2x64xf32>
    %324 = vector.extract_strided_slice %313 {offsets = [0, 448], sizes = [2, 64], strides = [1, 1]} : vector<2x512xf32> to vector<2x64xf32>
    %325 = tpu.concatenate %323, %324 in 1 : vector<2x64xf32>, vector<2x64xf32> -> vector<2x128xf32>
    %326 = arith.mulf %319, %287 : vector<2x128xf32>
    %327 = arith.mulf %316, %322 : vector<2x128xf32>
    %328 = arith.addf %326, %327 : vector<2x128xf32>
    %329 = math.tanh %328 : vector<2x128xf32>
    %330 = arith.mulf %325, %329 : vector<2x128xf32>
    %331 = vector.extract_strided_slice %330 {offsets = [0, 0], sizes = [2, 64], strides = [1, 1]} : vector<2x128xf32> to vector<2x64xf32>
    %c2_i32_94 = arith.constant 2 : i32
    %332 = arith.muli %c6_i32, %c2_i32_94 : i32
    %333 = arith.index_cast %332 : i32 to index
    %c0_95 = arith.constant 0 : index
    %334 = vector.load %arg5[%333, %c0_95] : memref<16x128xf32, #tpu.memory_space<vmem>>, vector<2x64xf32>
    tpu.vector_store %arg5[%333, %c0_95], %331 {strides = array<i32>} : memref<16x128xf32, #tpu.memory_space<vmem>>, vector<2x64xf32>,
    %335 = vector.extract_strided_slice %330 {offsets = [0, 64], sizes = [2, 64], strides = [1, 1]} : vector<2x128xf32> to vector<2x64xf32>
    %c7_i32_96 = arith.constant 7 : i32
    %336 = arith.subi %c7_i32_96, %c6_i32 : i32
    %c2_i32_97 = arith.constant 2 : i32
    %337 = arith.muli %336, %c2_i32_97 : i32
    %338 = arith.index_cast %337 : i32 to index
    %c64_98 = arith.constant 64 : index
    %339 = vector.load %arg5[%338, %c64_98] : memref<16x128xf32, #tpu.memory_space<vmem>>, vector<2x64xf32>
    tpu.vector_store %arg5[%338, %c64_98], %335 {strides = array<i32>} : memref<16x128xf32, #tpu.memory_space<vmem>>, vector<2x64xf32>,
    %c7_i32_99 = arith.constant 7 : i32
    %340 = arith.truncf %330 : vector<2x128xf32> to vector<2x128xbf16>
    %cst_100 = arith.constant dense<0.000000e+00> : vector<2x512xf32>
    %341 = tpu.matmul %340, %7, %cst_100 {dimension_numbers = #tpu.dot_dimension_numbers<[1], [0], [0], [1], [0, 0, 1, 1], [], []>} : vector<2x128xbf16>, vector<128x512xbf16>, vector<2x512xf32> -> vector<2x512xf32>
    %c2_i32_101 = arith.constant 2 : i32
    %342 = arith.muli %c7_i32_99, %c2_i32_101 : i32
    %343 = arith.index_cast %342 : i32 to index
    %c0_102 = arith.constant 0 : index
    %344 = vector.load %arg6[%343, %c0_102] : memref<16x512xf32, #tpu.memory_space<vmem>>, vector<2x256xf32>
    %c7_i32_103 = arith.constant 7 : i32
    %345 = arith.subi %c7_i32_103, %c7_i32_99 : i32
    %c2_i32_104 = arith.constant 2 : i32
    %346 = arith.muli %345, %c2_i32_104 : i32
    %347 = arith.index_cast %346 : i32 to index
    %c256_105 = arith.constant 256 : index
    %348 = vector.load %arg6[%347, %c256_105] : memref<16x512xf32, #tpu.memory_space<vmem>>, vector<2x256xf32>
    %349 = tpu.concatenate %344, %348 in 1 : vector<2x256xf32>, vector<2x256xf32> -> vector<2x512xf32>
    %350 = arith.addf %341, %349 : vector<2x512xf32>
    %351 = arith.mulf %350, %48 : vector<2x512xf32>
    %352 = math.tanh %351 : vector<2x512xf32>
    %353 = arith.mulf %352, %48 : vector<2x512xf32>
    %354 = arith.addf %353, %51 : vector<2x512xf32>
    %355 = vector.extract_strided_slice %354 {offsets = [0, 0], sizes = [2, 64], strides = [1, 1]} : vector<2x512xf32> to vector<2x64xf32>
    %356 = vector.extract_strided_slice %354 {offsets = [0, 256], sizes = [2, 64], strides = [1, 1]} : vector<2x512xf32> to vector<2x64xf32>
    %357 = tpu.concatenate %355, %356 in 1 : vector<2x64xf32>, vector<2x64xf32> -> vector<2x128xf32>
    %358 = vector.extract_strided_slice %354 {offsets = [0, 64], sizes = [2, 64], strides = [1, 1]} : vector<2x512xf32> to vector<2x64xf32>
    %359 = vector.extract_strided_slice %354 {offsets = [0, 320], sizes = [2, 64], strides = [1, 1]} : vector<2x512xf32> to vector<2x64xf32>
    %360 = tpu.concatenate %358, %359 in 1 : vector<2x64xf32>, vector<2x64xf32> -> vector<2x128xf32>
    %361 = vector.extract_strided_slice %354 {offsets = [0, 128], sizes = [2, 64], strides = [1, 1]} : vector<2x512xf32> to vector<2x64xf32>
    %362 = vector.extract_strided_slice %354 {offsets = [0, 384], sizes = [2, 64], strides = [1, 1]} : vector<2x512xf32> to vector<2x64xf32>
    %363 = tpu.concatenate %361, %362 in 1 : vector<2x64xf32>, vector<2x64xf32> -> vector<2x128xf32>
    %364 = vector.extract_strided_slice %354 {offsets = [0, 192], sizes = [2, 64], strides = [1, 1]} : vector<2x512xf32> to vector<2x64xf32>
    %365 = vector.extract_strided_slice %354 {offsets = [0, 448], sizes = [2, 64], strides = [1, 1]} : vector<2x512xf32> to vector<2x64xf32>
    %366 = tpu.concatenate %364, %365 in 1 : vector<2x64xf32>, vector<2x64xf32> -> vector<2x128xf32>
    %367 = arith.mulf %360, %328 : vector<2x128xf32>
    %368 = arith.mulf %357, %363 : vector<2x128xf32>
    %369 = arith.addf %367, %368 : vector<2x128xf32>
    %370 = math.tanh %369 : vector<2x128xf32>
    %371 = arith.mulf %366, %370 : vector<2x128xf32>
    %372 = vector.extract_strided_slice %371 {offsets = [0, 0], sizes = [2, 64], strides = [1, 1]} : vector<2x128xf32> to vector<2x64xf32>
    %c2_i32_106 = arith.constant 2 : i32
    %373 = arith.muli %c7_i32_99, %c2_i32_106 : i32
    %374 = arith.index_cast %373 : i32 to index
    %c0_107 = arith.constant 0 : index
    %375 = vector.load %arg5[%374, %c0_107] : memref<16x128xf32, #tpu.memory_space<vmem>>, vector<2x64xf32>
    tpu.vector_store %arg5[%374, %c0_107], %372 {strides = array<i32>} : memref<16x128xf32, #tpu.memory_space<vmem>>, vector<2x64xf32>,
    %376 = vector.extract_strided_slice %371 {offsets = [0, 64], sizes = [2, 64], strides = [1, 1]} : vector<2x128xf32> to vector<2x64xf32>
    %c7_i32_108 = arith.constant 7 : i32
    %377 = arith.subi %c7_i32_108, %c7_i32_99 : i32
    %c2_i32_109 = arith.constant 2 : i32
    %378 = arith.muli %377, %c2_i32_109 : i32
    %379 = arith.index_cast %378 : i32 to index
    %c64_110 = arith.constant 64 : index
    %380 = vector.load %arg5[%379, %c64_110] : memref<16x128xf32, #tpu.memory_space<vmem>>, vector<2x64xf32>
    tpu.vector_store %arg5[%379, %c64_110], %376 {strides = array<i32>} : memref<16x128xf32, #tpu.memory_space<vmem>>, vector<2x64xf32>,
    %c8_i32 = arith.constant 8 : i32
    return
  }
  func.func @transform_0(%arg0: i32) -> (i32, i32) {
    %c0_i32 = arith.constant 0 : i32
    %c0_i32_0 = arith.constant 0 : i32
    %c0_i32_1 = arith.constant 0 : i32
    return %c0_i32, %c0_i32_0 : i32, i32
  }
  func.func @transform_1(%arg0: i32) -> (i32, i32) {
    %c0_i32 = arith.constant 0 : i32
    %c0_i32_0 = arith.constant 0 : i32
    %c0_i32_1 = arith.constant 0 : i32
    return %c0_i32, %c0_i32_0 : i32, i32
  }
  func.func @transform_2(%arg0: i32) -> (i32, i32) {
    %c0_i32 = arith.constant 0 : i32
    %c0_i32_0 = arith.constant 0 : i32
    %c0_i32_1 = arith.constant 0 : i32
    return %c0_i32, %c0_i32_0 : i32, i32
  }
  func.func @transform_3(%arg0: i32) -> (i32, i32) {
    %c0_i32 = arith.constant 0 : i32
    %c0_i32_0 = arith.constant 0 : i32
    %c0_i32_1 = arith.constant 0 : i32
    return %c0_i32, %c0_i32_0 : i32, i32
  }
  func.func @transform_4(%arg0: i32) -> (i32, i32) {
    %c0_i32 = arith.constant 0 : i32
    %c0_i32_0 = arith.constant 0 : i32
    %c0_i32_1 = arith.constant 0 : i32
    return %c0_i32, %c0_i32_0 : i32, i32
  }
}

module attributes {stable_mosaic.version = 11 : i64} {
  func.func @_bilstm_head_kernel(%arg0: i32, %arg1: memref<16x128xf32, #tpu.memory_space<vmem>>, %arg2: memref<128x512xbf16, #tpu.memory_space<vmem>>, %arg3: memref<128x512xbf16, #tpu.memory_space<vmem>>, %arg4: memref<1x512xf32, #tpu.memory_space<vmem>>, %arg5: memref<1x128xf32, #tpu.memory_space<vmem>>, %arg6: memref<1x128xf32, #tpu.memory_space<vmem>>, %arg7: memref<128x128xf32, #tpu.memory_space<vmem>>, %arg8: memref<1x128xf32, #tpu.memory_space<vmem>>, %arg9: memref<2x128xf32, #tpu.memory_space<vmem>>, %arg10: memref<16x512xf32, #tpu.memory_space<vmem>>) attributes {dimension_semantics = [#tpu.dimension_semantics<arbitrary>], iteration_bounds = array<i64: 1>, scalar_prefetch = 0 : i64, scratch_operands = 1 : i64, tpu.core_type = #tpu.core_type<tc>, window_params = [{pipeline_mode = #tpu.pipeline_mode<synchronous>, transform_indices = @transform_0, window_bounds = array<i64: 16, 128>}, {pipeline_mode = #tpu.pipeline_mode<synchronous>, transform_indices = @transform_1, window_bounds = array<i64: 128, 512>}, {pipeline_mode = #tpu.pipeline_mode<synchronous>, transform_indices = @transform_2, window_bounds = array<i64: 128, 512>}, {pipeline_mode = #tpu.pipeline_mode<synchronous>, transform_indices = @transform_3, window_bounds = array<i64: 1, 512>}, {pipeline_mode = #tpu.pipeline_mode<synchronous>, transform_indices = @transform_4, window_bounds = array<i64: 1, 128>}, {pipeline_mode = #tpu.pipeline_mode<synchronous>, transform_indices = @transform_5, window_bounds = array<i64: 1, 128>}, {pipeline_mode = #tpu.pipeline_mode<synchronous>, transform_indices = @transform_6, window_bounds = array<i64: 128, 128>}, {pipeline_mode = #tpu.pipeline_mode<synchronous>, transform_indices = @transform_7, window_bounds = array<i64: 1, 128>}, {pipeline_mode = #tpu.pipeline_mode<synchronous>, transform_indices = @transform_8, window_bounds = array<i64: 2, 128>}]} {
    %c0 = arith.constant 0 : index
    %c0_0 = arith.constant 0 : index
    %0 = vector.load %arg1[%c0, %c0_0] : memref<16x128xf32, #tpu.memory_space<vmem>>, vector<16x128xf32>
    %1 = arith.truncf %0 : vector<16x128xf32> to vector<16x128xbf16>
    %c0_1 = arith.constant 0 : index
    %c0_2 = arith.constant 0 : index
    %2 = vector.load %arg2[%c0_1, %c0_2] : memref<128x512xbf16, #tpu.memory_space<vmem>>, vector<128x512xbf16>
    %cst = arith.constant dense<0.000000e+00> : vector<16x512xf32>
    %3 = tpu.matmul %1, %2, %cst {dimension_numbers = #tpu.dot_dimension_numbers<[1], [0], [0], [1], [0, 0, 1, 1], [], []>} : vector<16x128xbf16>, vector<128x512xbf16>, vector<16x512xf32> -> vector<16x512xf32>
    %c0_3 = arith.constant 0 : index
    %c0_4 = arith.constant 0 : index
    %4 = vector.load %arg4[%c0_3, %c0_4] : memref<1x512xf32, #tpu.memory_space<vmem>>, vector<1x512xf32>
    %5 = vector.broadcast %4 : vector<1x512xf32> to vector<16x512xf32>
    %6 = arith.addf %3, %5 : vector<16x512xf32>
    %c0_5 = arith.constant 0 : index
    %c0_6 = arith.constant 0 : index
    %7 = vector.load %arg10[%c0_5, %c0_6] : memref<16x512xf32, #tpu.memory_space<vmem>>, vector<16x512xf32>
    tpu.vector_store %arg10[%c0_5, %c0_6], %6 {strides = array<i32>} : memref<16x512xf32, #tpu.memory_space<vmem>>, vector<16x512xf32>,
    %c0_7 = arith.constant 0 : index
    %c0_8 = arith.constant 0 : index
    %8 = vector.load %arg3[%c0_7, %c0_8] : memref<128x512xbf16, #tpu.memory_space<vmem>>, vector<128x512xbf16>
    %9 = tpu.iota {dimensions = array<i32: 1>} : vector<2x512xi32>
    %c256_i32 = arith.constant 256 : i32
    %c0_i32 = arith.constant 0 : i32
    %10 = arith.cmpi eq, %c256_i32, %c0_i32 : i32
    %c1_i32 = arith.constant 1 : i32
    %11 = arith.select %10, %c1_i32, %c256_i32 : i32
    %12 = vector.broadcast %11 : i32 to vector<2x512xi32>
    %13 = arith.remsi %9, %12 : vector<2x512xi32>
    %c0_i32_9 = arith.constant 0 : i32
    %14 = vector.broadcast %c0_i32_9 : i32 to vector<2x512xi32>
    %15 = arith.cmpi ne, %13, %14 : vector<2x512xi32>
    %c0_i32_10 = arith.constant 0 : i32
    %16 = vector.broadcast %c0_i32_10 : i32 to vector<2x512xi32>
    %17 = arith.cmpi slt, %13, %16 : vector<2x512xi32>
    %c0_i32_11 = arith.constant 0 : i32
    %18 = arith.cmpi slt, %11, %c0_i32_11 : i32
    %19 = vector.broadcast %18 : i1 to vector<2x512xi1>
    %20 = vector.broadcast %19 : vector<2x512xi1> to vector<2x512xi1>
    %21 = arith.xori %17, %20 : vector<2x512xi1>
    %22 = arith.andi %21, %15 : vector<2x512xi1>
    %23 = vector.broadcast %11 : i32 to vector<2x512xi32>
    %24 = arith.addi %13, %23 : vector<2x512xi32>
    %25 = arith.select %22, %24, %13 : vector<2x512xi1>, vector<2x512xi32>
    %c128_i32 = arith.constant 128 : i32
    %26 = vector.broadcast %c128_i32 : i32 to vector<2x512xi32>
    %27 = arith.cmpi sge, %25, %26 : vector<2x512xi32>
    %c256_i32_12 = arith.constant 256 : i32
    %c0_i32_13 = arith.constant 0 : i32
    %28 = arith.cmpi eq, %c256_i32_12, %c0_i32_13 : i32
    %c1_i32_14 = arith.constant 1 : i32
    %29 = arith.select %28, %c1_i32_14, %c256_i32_12 : i32
    %30 = vector.broadcast %29 : i32 to vector<2x512xi32>
    %31 = arith.remsi %9, %30 : vector<2x512xi32>
    %c0_i32_15 = arith.constant 0 : i32
    %32 = vector.broadcast %c0_i32_15 : i32 to vector<2x512xi32>
    %33 = arith.cmpi ne, %31, %32 : vector<2x512xi32>
    %c0_i32_16 = arith.constant 0 : i32
    %34 = vector.broadcast %c0_i32_16 : i32 to vector<2x512xi32>
    %35 = arith.cmpi slt, %31, %34 : vector<2x512xi32>
    %c0_i32_17 = arith.constant 0 : i32
    %36 = arith.cmpi slt, %29, %c0_i32_17 : i32
    %37 = vector.broadcast %36 : i1 to vector<2x512xi1>
    %38 = vector.broadcast %37 : vector<2x512xi1> to vector<2x512xi1>
    %39 = arith.xori %35, %38 : vector<2x512xi1>
    %40 = arith.andi %39, %33 : vector<2x512xi1>
    %41 = vector.broadcast %29 : i32 to vector<2x512xi32>
    %42 = arith.addi %31, %41 : vector<2x512xi32>
    %43 = arith.select %40, %42, %31 : vector<2x512xi1>, vector<2x512xi32>
    %c192_i32 = arith.constant 192 : i32
    %44 = vector.broadcast %c192_i32 : i32 to vector<2x512xi32>
    %45 = arith.cmpi slt, %43, %44 : vector<2x512xi32>
    %46 = arith.andi %27, %45 : vector<2x512xi1>
    %cst_18 = arith.constant 1.000000e+00 : f32
    %cst_19 = arith.constant 5.000000e-01 : f32
    %47 = vector.broadcast %cst_18 : f32 to vector<2x512xf32>
    %48 = vector.broadcast %cst_19 : f32 to vector<2x512xf32>
    %49 = arith.select %46, %47, %48 : vector<2x512xi1>, vector<2x512xf32>
    %cst_20 = arith.constant 0.000000e+00 : f32
    %cst_21 = arith.constant 5.000000e-01 : f32
    %50 = vector.broadcast %cst_20 : f32 to vector<2x512xf32>
    %51 = vector.broadcast %cst_21 : f32 to vector<2x512xf32>
    %52 = arith.select %46, %50, %51 : vector<2x512xi1>, vector<2x512xf32>
    %cst_22 = arith.constant 0.000000e+00 : f32
    %53 = vector.broadcast %cst_22 : f32 to vector<2x128xf32>
    %c0_i32_23 = arith.constant 0 : i32
    %54 = arith.truncf %53 : vector<2x128xf32> to vector<2x128xbf16>
    %cst_24 = arith.constant dense<0.000000e+00> : vector<2x512xf32>
    %55 = tpu.matmul %54, %8, %cst_24 {dimension_numbers = #tpu.dot_dimension_numbers<[1], [0], [0], [1], [0, 0, 1, 1], [], []>} : vector<2x128xbf16>, vector<128x512xbf16>, vector<2x512xf32> -> vector<2x512xf32>
    %c2_i32 = arith.constant 2 : i32
    %56 = arith.muli %c0_i32_23, %c2_i32 : i32
    %57 = arith.index_cast %56 : i32 to index
    %c0_25 = arith.constant 0 : index
    %58 = vector.load %arg10[%57, %c0_25] : memref<16x512xf32, #tpu.memory_space<vmem>>, vector<2x256xf32>
    %c7_i32 = arith.constant 7 : i32
    %59 = arith.subi %c7_i32, %c0_i32_23 : i32
    %c2_i32_26 = arith.constant 2 : i32
    %60 = arith.muli %59, %c2_i32_26 : i32
    %61 = arith.index_cast %60 : i32 to index
    %c256 = arith.constant 256 : index
    %62 = vector.load %arg10[%61, %c256] : memref<16x512xf32, #tpu.memory_space<vmem>>, vector<2x256xf32>
    %63 = tpu.concatenate %58, %62 in 1 : vector<2x256xf32>, vector<2x256xf32> -> vector<2x512xf32>
    %64 = arith.addf %55, %63 : vector<2x512xf32>
    %65 = arith.mulf %64, %49 : vector<2x512xf32>
    %66 = math.tanh %65 : vector<2x512xf32>
    %67 = arith.mulf %66, %49 : vector<2x512xf32>
    %68 = arith.addf %67, %52 : vector<2x512xf32>
    %69 = vector.extract_strided_slice %68 {offsets = [0, 0], sizes = [2, 64], strides = [1, 1]} : vector<2x512xf32> to vector<2x64xf32>
    %70 = vector.extract_strided_slice %68 {offsets = [0, 256], sizes = [2, 64], strides = [1, 1]} : vector<2x512xf32> to vector<2x64xf32>
    %71 = tpu.concatenate %69, %70 in 1 : vector<2x64xf32>, vector<2x64xf32> -> vector<2x128xf32>
    %72 = vector.extract_strided_slice %68 {offsets = [0, 64], sizes = [2, 64], strides = [1, 1]} : vector<2x512xf32> to vector<2x64xf32>
    %73 = vector.extract_strided_slice %68 {offsets = [0, 320], sizes = [2, 64], strides = [1, 1]} : vector<2x512xf32> to vector<2x64xf32>
    %74 = tpu.concatenate %72, %73 in 1 : vector<2x64xf32>, vector<2x64xf32> -> vector<2x128xf32>
    %75 = vector.extract_strided_slice %68 {offsets = [0, 128], sizes = [2, 64], strides = [1, 1]} : vector<2x512xf32> to vector<2x64xf32>
    %76 = vector.extract_strided_slice %68 {offsets = [0, 384], sizes = [2, 64], strides = [1, 1]} : vector<2x512xf32> to vector<2x64xf32>
    %77 = tpu.concatenate %75, %76 in 1 : vector<2x64xf32>, vector<2x64xf32> -> vector<2x128xf32>
    %78 = vector.extract_strided_slice %68 {offsets = [0, 192], sizes = [2, 64], strides = [1, 1]} : vector<2x512xf32> to vector<2x64xf32>
    %79 = vector.extract_strided_slice %68 {offsets = [0, 448], sizes = [2, 64], strides = [1, 1]} : vector<2x512xf32> to vector<2x64xf32>
    %80 = tpu.concatenate %78, %79 in 1 : vector<2x64xf32>, vector<2x64xf32> -> vector<2x128xf32>
    %81 = arith.mulf %74, %53 : vector<2x128xf32>
    %82 = arith.mulf %71, %77 : vector<2x128xf32>
    %83 = arith.addf %81, %82 : vector<2x128xf32>
    %84 = math.tanh %83 : vector<2x128xf32>
    %85 = arith.mulf %80, %84 : vector<2x128xf32>
    %86 = arith.addf %53, %85 : vector<2x128xf32>
    %c1_i32_27 = arith.constant 1 : i32
    %87 = arith.truncf %85 : vector<2x128xf32> to vector<2x128xbf16>
    %cst_28 = arith.constant dense<0.000000e+00> : vector<2x512xf32>
    %88 = tpu.matmul %87, %8, %cst_28 {dimension_numbers = #tpu.dot_dimension_numbers<[1], [0], [0], [1], [0, 0, 1, 1], [], []>} : vector<2x128xbf16>, vector<128x512xbf16>, vector<2x512xf32> -> vector<2x512xf32>
    %c2_i32_29 = arith.constant 2 : i32
    %89 = arith.muli %c1_i32_27, %c2_i32_29 : i32
    %90 = arith.index_cast %89 : i32 to index
    %c0_30 = arith.constant 0 : index
    %91 = vector.load %arg10[%90, %c0_30] : memref<16x512xf32, #tpu.memory_space<vmem>>, vector<2x256xf32>
    %c7_i32_31 = arith.constant 7 : i32
    %92 = arith.subi %c7_i32_31, %c1_i32_27 : i32
    %c2_i32_32 = arith.constant 2 : i32
    %93 = arith.muli %92, %c2_i32_32 : i32
    %94 = arith.index_cast %93 : i32 to index
    %c256_33 = arith.constant 256 : index
    %95 = vector.load %arg10[%94, %c256_33] : memref<16x512xf32, #tpu.memory_space<vmem>>, vector<2x256xf32>
    %96 = tpu.concatenate %91, %95 in 1 : vector<2x256xf32>, vector<2x256xf32> -> vector<2x512xf32>
    %97 = arith.addf %88, %96 : vector<2x512xf32>
    %98 = arith.mulf %97, %49 : vector<2x512xf32>
    %99 = math.tanh %98 : vector<2x512xf32>
    %100 = arith.mulf %99, %49 : vector<2x512xf32>
    %101 = arith.addf %100, %52 : vector<2x512xf32>
    %102 = vector.extract_strided_slice %101 {offsets = [0, 0], sizes = [2, 64], strides = [1, 1]} : vector<2x512xf32> to vector<2x64xf32>
    %103 = vector.extract_strided_slice %101 {offsets = [0, 256], sizes = [2, 64], strides = [1, 1]} : vector<2x512xf32> to vector<2x64xf32>
    %104 = tpu.concatenate %102, %103 in 1 : vector<2x64xf32>, vector<2x64xf32> -> vector<2x128xf32>
    %105 = vector.extract_strided_slice %101 {offsets = [0, 64], sizes = [2, 64], strides = [1, 1]} : vector<2x512xf32> to vector<2x64xf32>
    %106 = vector.extract_strided_slice %101 {offsets = [0, 320], sizes = [2, 64], strides = [1, 1]} : vector<2x512xf32> to vector<2x64xf32>
    %107 = tpu.concatenate %105, %106 in 1 : vector<2x64xf32>, vector<2x64xf32> -> vector<2x128xf32>
    %108 = vector.extract_strided_slice %101 {offsets = [0, 128], sizes = [2, 64], strides = [1, 1]} : vector<2x512xf32> to vector<2x64xf32>
    %109 = vector.extract_strided_slice %101 {offsets = [0, 384], sizes = [2, 64], strides = [1, 1]} : vector<2x512xf32> to vector<2x64xf32>
    %110 = tpu.concatenate %108, %109 in 1 : vector<2x64xf32>, vector<2x64xf32> -> vector<2x128xf32>
    %111 = vector.extract_strided_slice %101 {offsets = [0, 192], sizes = [2, 64], strides = [1, 1]} : vector<2x512xf32> to vector<2x64xf32>
    %112 = vector.extract_strided_slice %101 {offsets = [0, 448], sizes = [2, 64], strides = [1, 1]} : vector<2x512xf32> to vector<2x64xf32>
    %113 = tpu.concatenate %111, %112 in 1 : vector<2x64xf32>, vector<2x64xf32> -> vector<2x128xf32>
    %114 = arith.mulf %107, %83 : vector<2x128xf32>
    %115 = arith.mulf %104, %110 : vector<2x128xf32>
    %116 = arith.addf %114, %115 : vector<2x128xf32>
    %117 = math.tanh %116 : vector<2x128xf32>
    %118 = arith.mulf %113, %117 : vector<2x128xf32>
    %119 = arith.addf %86, %118 : vector<2x128xf32>
    %c2_i32_34 = arith.constant 2 : i32
    %120 = arith.truncf %118 : vector<2x128xf32> to vector<2x128xbf16>
    %cst_35 = arith.constant dense<0.000000e+00> : vector<2x512xf32>
    %121 = tpu.matmul %120, %8, %cst_35 {dimension_numbers = #tpu.dot_dimension_numbers<[1], [0], [0], [1], [0, 0, 1, 1], [], []>} : vector<2x128xbf16>, vector<128x512xbf16>, vector<2x512xf32> -> vector<2x512xf32>
    %c2_i32_36 = arith.constant 2 : i32
    %122 = arith.muli %c2_i32_34, %c2_i32_36 : i32
    %123 = arith.index_cast %122 : i32 to index
    %c0_37 = arith.constant 0 : index
    %124 = vector.load %arg10[%123, %c0_37] : memref<16x512xf32, #tpu.memory_space<vmem>>, vector<2x256xf32>
    %c7_i32_38 = arith.constant 7 : i32
    %125 = arith.subi %c7_i32_38, %c2_i32_34 : i32
    %c2_i32_39 = arith.constant 2 : i32
    %126 = arith.muli %125, %c2_i32_39 : i32
    %127 = arith.index_cast %126 : i32 to index
    %c256_40 = arith.constant 256 : index
    %128 = vector.load %arg10[%127, %c256_40] : memref<16x512xf32, #tpu.memory_space<vmem>>, vector<2x256xf32>
    %129 = tpu.concatenate %124, %128 in 1 : vector<2x256xf32>, vector<2x256xf32> -> vector<2x512xf32>
    %130 = arith.addf %121, %129 : vector<2x512xf32>
    %131 = arith.mulf %130, %49 : vector<2x512xf32>
    %132 = math.tanh %131 : vector<2x512xf32>
    %133 = arith.mulf %132, %49 : vector<2x512xf32>
    %134 = arith.addf %133, %52 : vector<2x512xf32>
    %135 = vector.extract_strided_slice %134 {offsets = [0, 0], sizes = [2, 64], strides = [1, 1]} : vector<2x512xf32> to vector<2x64xf32>
    %136 = vector.extract_strided_slice %134 {offsets = [0, 256], sizes = [2, 64], strides = [1, 1]} : vector<2x512xf32> to vector<2x64xf32>
    %137 = tpu.concatenate %135, %136 in 1 : vector<2x64xf32>, vector<2x64xf32> -> vector<2x128xf32>
    %138 = vector.extract_strided_slice %134 {offsets = [0, 64], sizes = [2, 64], strides = [1, 1]} : vector<2x512xf32> to vector<2x64xf32>
    %139 = vector.extract_strided_slice %134 {offsets = [0, 320], sizes = [2, 64], strides = [1, 1]} : vector<2x512xf32> to vector<2x64xf32>
    %140 = tpu.concatenate %138, %139 in 1 : vector<2x64xf32>, vector<2x64xf32> -> vector<2x128xf32>
    %141 = vector.extract_strided_slice %134 {offsets = [0, 128], sizes = [2, 64], strides = [1, 1]} : vector<2x512xf32> to vector<2x64xf32>
    %142 = vector.extract_strided_slice %134 {offsets = [0, 384], sizes = [2, 64], strides = [1, 1]} : vector<2x512xf32> to vector<2x64xf32>
    %143 = tpu.concatenate %141, %142 in 1 : vector<2x64xf32>, vector<2x64xf32> -> vector<2x128xf32>
    %144 = vector.extract_strided_slice %134 {offsets = [0, 192], sizes = [2, 64], strides = [1, 1]} : vector<2x512xf32> to vector<2x64xf32>
    %145 = vector.extract_strided_slice %134 {offsets = [0, 448], sizes = [2, 64], strides = [1, 1]} : vector<2x512xf32> to vector<2x64xf32>
    %146 = tpu.concatenate %144, %145 in 1 : vector<2x64xf32>, vector<2x64xf32> -> vector<2x128xf32>
    %147 = arith.mulf %140, %116 : vector<2x128xf32>
    %148 = arith.mulf %137, %143 : vector<2x128xf32>
    %149 = arith.addf %147, %148 : vector<2x128xf32>
    %150 = math.tanh %149 : vector<2x128xf32>
    %151 = arith.mulf %146, %150 : vector<2x128xf32>
    %152 = arith.addf %119, %151 : vector<2x128xf32>
    %c3_i32 = arith.constant 3 : i32
    %153 = arith.truncf %151 : vector<2x128xf32> to vector<2x128xbf16>
    %cst_41 = arith.constant dense<0.000000e+00> : vector<2x512xf32>
    %154 = tpu.matmul %153, %8, %cst_41 {dimension_numbers = #tpu.dot_dimension_numbers<[1], [0], [0], [1], [0, 0, 1, 1], [], []>} : vector<2x128xbf16>, vector<128x512xbf16>, vector<2x512xf32> -> vector<2x512xf32>
    %c2_i32_42 = arith.constant 2 : i32
    %155 = arith.muli %c3_i32, %c2_i32_42 : i32
    %156 = arith.index_cast %155 : i32 to index
    %c0_43 = arith.constant 0 : index
    %157 = vector.load %arg10[%156, %c0_43] : memref<16x512xf32, #tpu.memory_space<vmem>>, vector<2x256xf32>
    %c7_i32_44 = arith.constant 7 : i32
    %158 = arith.subi %c7_i32_44, %c3_i32 : i32
    %c2_i32_45 = arith.constant 2 : i32
    %159 = arith.muli %158, %c2_i32_45 : i32
    %160 = arith.index_cast %159 : i32 to index
    %c256_46 = arith.constant 256 : index
    %161 = vector.load %arg10[%160, %c256_46] : memref<16x512xf32, #tpu.memory_space<vmem>>, vector<2x256xf32>
    %162 = tpu.concatenate %157, %161 in 1 : vector<2x256xf32>, vector<2x256xf32> -> vector<2x512xf32>
    %163 = arith.addf %154, %162 : vector<2x512xf32>
    %164 = arith.mulf %163, %49 : vector<2x512xf32>
    %165 = math.tanh %164 : vector<2x512xf32>
    %166 = arith.mulf %165, %49 : vector<2x512xf32>
    %167 = arith.addf %166, %52 : vector<2x512xf32>
    %168 = vector.extract_strided_slice %167 {offsets = [0, 0], sizes = [2, 64], strides = [1, 1]} : vector<2x512xf32> to vector<2x64xf32>
    %169 = vector.extract_strided_slice %167 {offsets = [0, 256], sizes = [2, 64], strides = [1, 1]} : vector<2x512xf32> to vector<2x64xf32>
    %170 = tpu.concatenate %168, %169 in 1 : vector<2x64xf32>, vector<2x64xf32> -> vector<2x128xf32>
    %171 = vector.extract_strided_slice %167 {offsets = [0, 64], sizes = [2, 64], strides = [1, 1]} : vector<2x512xf32> to vector<2x64xf32>
    %172 = vector.extract_strided_slice %167 {offsets = [0, 320], sizes = [2, 64], strides = [1, 1]} : vector<2x512xf32> to vector<2x64xf32>
    %173 = tpu.concatenate %171, %172 in 1 : vector<2x64xf32>, vector<2x64xf32> -> vector<2x128xf32>
    %174 = vector.extract_strided_slice %167 {offsets = [0, 128], sizes = [2, 64], strides = [1, 1]} : vector<2x512xf32> to vector<2x64xf32>
    %175 = vector.extract_strided_slice %167 {offsets = [0, 384], sizes = [2, 64], strides = [1, 1]} : vector<2x512xf32> to vector<2x64xf32>
    %176 = tpu.concatenate %174, %175 in 1 : vector<2x64xf32>, vector<2x64xf32> -> vector<2x128xf32>
    %177 = vector.extract_strided_slice %167 {offsets = [0, 192], sizes = [2, 64], strides = [1, 1]} : vector<2x512xf32> to vector<2x64xf32>
    %178 = vector.extract_strided_slice %167 {offsets = [0, 448], sizes = [2, 64], strides = [1, 1]} : vector<2x512xf32> to vector<2x64xf32>
    %179 = tpu.concatenate %177, %178 in 1 : vector<2x64xf32>, vector<2x64xf32> -> vector<2x128xf32>
    %180 = arith.mulf %173, %149 : vector<2x128xf32>
    %181 = arith.mulf %170, %176 : vector<2x128xf32>
    %182 = arith.addf %180, %181 : vector<2x128xf32>
    %183 = math.tanh %182 : vector<2x128xf32>
    %184 = arith.mulf %179, %183 : vector<2x128xf32>
    %185 = arith.addf %152, %184 : vector<2x128xf32>
    %c4_i32 = arith.constant 4 : i32
    %186 = arith.truncf %184 : vector<2x128xf32> to vector<2x128xbf16>
    %cst_47 = arith.constant dense<0.000000e+00> : vector<2x512xf32>
    %187 = tpu.matmul %186, %8, %cst_47 {dimension_numbers = #tpu.dot_dimension_numbers<[1], [0], [0], [1], [0, 0, 1, 1], [], []>} : vector<2x128xbf16>, vector<128x512xbf16>, vector<2x512xf32> -> vector<2x512xf32>
    %c2_i32_48 = arith.constant 2 : i32
    %188 = arith.muli %c4_i32, %c2_i32_48 : i32
    %189 = arith.index_cast %188 : i32 to index
    %c0_49 = arith.constant 0 : index
    %190 = vector.load %arg10[%189, %c0_49] : memref<16x512xf32, #tpu.memory_space<vmem>>, vector<2x256xf32>
    %c7_i32_50 = arith.constant 7 : i32
    %191 = arith.subi %c7_i32_50, %c4_i32 : i32
    %c2_i32_51 = arith.constant 2 : i32
    %192 = arith.muli %191, %c2_i32_51 : i32
    %193 = arith.index_cast %192 : i32 to index
    %c256_52 = arith.constant 256 : index
    %194 = vector.load %arg10[%193, %c256_52] : memref<16x512xf32, #tpu.memory_space<vmem>>, vector<2x256xf32>
    %195 = tpu.concatenate %190, %194 in 1 : vector<2x256xf32>, vector<2x256xf32> -> vector<2x512xf32>
    %196 = arith.addf %187, %195 : vector<2x512xf32>
    %197 = arith.mulf %196, %49 : vector<2x512xf32>
    %198 = math.tanh %197 : vector<2x512xf32>
    %199 = arith.mulf %198, %49 : vector<2x512xf32>
    %200 = arith.addf %199, %52 : vector<2x512xf32>
    %201 = vector.extract_strided_slice %200 {offsets = [0, 0], sizes = [2, 64], strides = [1, 1]} : vector<2x512xf32> to vector<2x64xf32>
    %202 = vector.extract_strided_slice %200 {offsets = [0, 256], sizes = [2, 64], strides = [1, 1]} : vector<2x512xf32> to vector<2x64xf32>
    %203 = tpu.concatenate %201, %202 in 1 : vector<2x64xf32>, vector<2x64xf32> -> vector<2x128xf32>
    %204 = vector.extract_strided_slice %200 {offsets = [0, 64], sizes = [2, 64], strides = [1, 1]} : vector<2x512xf32> to vector<2x64xf32>
    %205 = vector.extract_strided_slice %200 {offsets = [0, 320], sizes = [2, 64], strides = [1, 1]} : vector<2x512xf32> to vector<2x64xf32>
    %206 = tpu.concatenate %204, %205 in 1 : vector<2x64xf32>, vector<2x64xf32> -> vector<2x128xf32>
    %207 = vector.extract_strided_slice %200 {offsets = [0, 128], sizes = [2, 64], strides = [1, 1]} : vector<2x512xf32> to vector<2x64xf32>
    %208 = vector.extract_strided_slice %200 {offsets = [0, 384], sizes = [2, 64], strides = [1, 1]} : vector<2x512xf32> to vector<2x64xf32>
    %209 = tpu.concatenate %207, %208 in 1 : vector<2x64xf32>, vector<2x64xf32> -> vector<2x128xf32>
    %210 = vector.extract_strided_slice %200 {offsets = [0, 192], sizes = [2, 64], strides = [1, 1]} : vector<2x512xf32> to vector<2x64xf32>
    %211 = vector.extract_strided_slice %200 {offsets = [0, 448], sizes = [2, 64], strides = [1, 1]} : vector<2x512xf32> to vector<2x64xf32>
    %212 = tpu.concatenate %210, %211 in 1 : vector<2x64xf32>, vector<2x64xf32> -> vector<2x128xf32>
    %213 = arith.mulf %206, %182 : vector<2x128xf32>
    %214 = arith.mulf %203, %209 : vector<2x128xf32>
    %215 = arith.addf %213, %214 : vector<2x128xf32>
    %216 = math.tanh %215 : vector<2x128xf32>
    %217 = arith.mulf %212, %216 : vector<2x128xf32>
    %218 = arith.addf %185, %217 : vector<2x128xf32>
    %c5_i32 = arith.constant 5 : i32
    %219 = arith.truncf %217 : vector<2x128xf32> to vector<2x128xbf16>
    %cst_53 = arith.constant dense<0.000000e+00> : vector<2x512xf32>
    %220 = tpu.matmul %219, %8, %cst_53 {dimension_numbers = #tpu.dot_dimension_numbers<[1], [0], [0], [1], [0, 0, 1, 1], [], []>} : vector<2x128xbf16>, vector<128x512xbf16>, vector<2x512xf32> -> vector<2x512xf32>
    %c2_i32_54 = arith.constant 2 : i32
    %221 = arith.muli %c5_i32, %c2_i32_54 : i32
    %222 = arith.index_cast %221 : i32 to index
    %c0_55 = arith.constant 0 : index
    %223 = vector.load %arg10[%222, %c0_55] : memref<16x512xf32, #tpu.memory_space<vmem>>, vector<2x256xf32>
    %c7_i32_56 = arith.constant 7 : i32
    %224 = arith.subi %c7_i32_56, %c5_i32 : i32
    %c2_i32_57 = arith.constant 2 : i32
    %225 = arith.muli %224, %c2_i32_57 : i32
    %226 = arith.index_cast %225 : i32 to index
    %c256_58 = arith.constant 256 : index
    %227 = vector.load %arg10[%226, %c256_58] : memref<16x512xf32, #tpu.memory_space<vmem>>, vector<2x256xf32>
    %228 = tpu.concatenate %223, %227 in 1 : vector<2x256xf32>, vector<2x256xf32> -> vector<2x512xf32>
    %229 = arith.addf %220, %228 : vector<2x512xf32>
    %230 = arith.mulf %229, %49 : vector<2x512xf32>
    %231 = math.tanh %230 : vector<2x512xf32>
    %232 = arith.mulf %231, %49 : vector<2x512xf32>
    %233 = arith.addf %232, %52 : vector<2x512xf32>
    %234 = vector.extract_strided_slice %233 {offsets = [0, 0], sizes = [2, 64], strides = [1, 1]} : vector<2x512xf32> to vector<2x64xf32>
    %235 = vector.extract_strided_slice %233 {offsets = [0, 256], sizes = [2, 64], strides = [1, 1]} : vector<2x512xf32> to vector<2x64xf32>
    %236 = tpu.concatenate %234, %235 in 1 : vector<2x64xf32>, vector<2x64xf32> -> vector<2x128xf32>
    %237 = vector.extract_strided_slice %233 {offsets = [0, 64], sizes = [2, 64], strides = [1, 1]} : vector<2x512xf32> to vector<2x64xf32>
    %238 = vector.extract_strided_slice %233 {offsets = [0, 320], sizes = [2, 64], strides = [1, 1]} : vector<2x512xf32> to vector<2x64xf32>
    %239 = tpu.concatenate %237, %238 in 1 : vector<2x64xf32>, vector<2x64xf32> -> vector<2x128xf32>
    %240 = vector.extract_strided_slice %233 {offsets = [0, 128], sizes = [2, 64], strides = [1, 1]} : vector<2x512xf32> to vector<2x64xf32>
    %241 = vector.extract_strided_slice %233 {offsets = [0, 384], sizes = [2, 64], strides = [1, 1]} : vector<2x512xf32> to vector<2x64xf32>
    %242 = tpu.concatenate %240, %241 in 1 : vector<2x64xf32>, vector<2x64xf32> -> vector<2x128xf32>
    %243 = vector.extract_strided_slice %233 {offsets = [0, 192], sizes = [2, 64], strides = [1, 1]} : vector<2x512xf32> to vector<2x64xf32>
    %244 = vector.extract_strided_slice %233 {offsets = [0, 448], sizes = [2, 64], strides = [1, 1]} : vector<2x512xf32> to vector<2x64xf32>
    %245 = tpu.concatenate %243, %244 in 1 : vector<2x64xf32>, vector<2x64xf32> -> vector<2x128xf32>
    %246 = arith.mulf %239, %215 : vector<2x128xf32>
    %247 = arith.mulf %236, %242 : vector<2x128xf32>
    %248 = arith.addf %246, %247 : vector<2x128xf32>
    %249 = math.tanh %248 : vector<2x128xf32>
    %250 = arith.mulf %245, %249 : vector<2x128xf32>
    %251 = arith.addf %218, %250 : vector<2x128xf32>
    %c6_i32 = arith.constant 6 : i32
    %252 = arith.truncf %250 : vector<2x128xf32> to vector<2x128xbf16>
    %cst_59 = arith.constant dense<0.000000e+00> : vector<2x512xf32>
    %253 = tpu.matmul %252, %8, %cst_59 {dimension_numbers = #tpu.dot_dimension_numbers<[1], [0], [0], [1], [0, 0, 1, 1], [], []>} : vector<2x128xbf16>, vector<128x512xbf16>, vector<2x512xf32> -> vector<2x512xf32>
    %c2_i32_60 = arith.constant 2 : i32
    %254 = arith.muli %c6_i32, %c2_i32_60 : i32
    %255 = arith.index_cast %254 : i32 to index
    %c0_61 = arith.constant 0 : index
    %256 = vector.load %arg10[%255, %c0_61] : memref<16x512xf32, #tpu.memory_space<vmem>>, vector<2x256xf32>
    %c7_i32_62 = arith.constant 7 : i32
    %257 = arith.subi %c7_i32_62, %c6_i32 : i32
    %c2_i32_63 = arith.constant 2 : i32
    %258 = arith.muli %257, %c2_i32_63 : i32
    %259 = arith.index_cast %258 : i32 to index
    %c256_64 = arith.constant 256 : index
    %260 = vector.load %arg10[%259, %c256_64] : memref<16x512xf32, #tpu.memory_space<vmem>>, vector<2x256xf32>
    %261 = tpu.concatenate %256, %260 in 1 : vector<2x256xf32>, vector<2x256xf32> -> vector<2x512xf32>
    %262 = arith.addf %253, %261 : vector<2x512xf32>
    %263 = arith.mulf %262, %49 : vector<2x512xf32>
    %264 = math.tanh %263 : vector<2x512xf32>
    %265 = arith.mulf %264, %49 : vector<2x512xf32>
    %266 = arith.addf %265, %52 : vector<2x512xf32>
    %267 = vector.extract_strided_slice %266 {offsets = [0, 0], sizes = [2, 64], strides = [1, 1]} : vector<2x512xf32> to vector<2x64xf32>
    %268 = vector.extract_strided_slice %266 {offsets = [0, 256], sizes = [2, 64], strides = [1, 1]} : vector<2x512xf32> to vector<2x64xf32>
    %269 = tpu.concatenate %267, %268 in 1 : vector<2x64xf32>, vector<2x64xf32> -> vector<2x128xf32>
    %270 = vector.extract_strided_slice %266 {offsets = [0, 64], sizes = [2, 64], strides = [1, 1]} : vector<2x512xf32> to vector<2x64xf32>
    %271 = vector.extract_strided_slice %266 {offsets = [0, 320], sizes = [2, 64], strides = [1, 1]} : vector<2x512xf32> to vector<2x64xf32>
    %272 = tpu.concatenate %270, %271 in 1 : vector<2x64xf32>, vector<2x64xf32> -> vector<2x128xf32>
    %273 = vector.extract_strided_slice %266 {offsets = [0, 128], sizes = [2, 64], strides = [1, 1]} : vector<2x512xf32> to vector<2x64xf32>
    %274 = vector.extract_strided_slice %266 {offsets = [0, 384], sizes = [2, 64], strides = [1, 1]} : vector<2x512xf32> to vector<2x64xf32>
    %275 = tpu.concatenate %273, %274 in 1 : vector<2x64xf32>, vector<2x64xf32> -> vector<2x128xf32>
    %276 = vector.extract_strided_slice %266 {offsets = [0, 192], sizes = [2, 64], strides = [1, 1]} : vector<2x512xf32> to vector<2x64xf32>
    %277 = vector.extract_strided_slice %266 {offsets = [0, 448], sizes = [2, 64], strides = [1, 1]} : vector<2x512xf32> to vector<2x64xf32>
    %278 = tpu.concatenate %276, %277 in 1 : vector<2x64xf32>, vector<2x64xf32> -> vector<2x128xf32>
    %279 = arith.mulf %272, %248 : vector<2x128xf32>
    %280 = arith.mulf %269, %275 : vector<2x128xf32>
    %281 = arith.addf %279, %280 : vector<2x128xf32>
    %282 = math.tanh %281 : vector<2x128xf32>
    %283 = arith.mulf %278, %282 : vector<2x128xf32>
    %284 = arith.addf %251, %283 : vector<2x128xf32>
    %c7_i32_65 = arith.constant 7 : i32
    %285 = arith.truncf %283 : vector<2x128xf32> to vector<2x128xbf16>
    %cst_66 = arith.constant dense<0.000000e+00> : vector<2x512xf32>
    %286 = tpu.matmul %285, %8, %cst_66 {dimension_numbers = #tpu.dot_dimension_numbers<[1], [0], [0], [1], [0, 0, 1, 1], [], []>} : vector<2x128xbf16>, vector<128x512xbf16>, vector<2x512xf32> -> vector<2x512xf32>
    %c2_i32_67 = arith.constant 2 : i32
    %287 = arith.muli %c7_i32_65, %c2_i32_67 : i32
    %288 = arith.index_cast %287 : i32 to index
    %c0_68 = arith.constant 0 : index
    %289 = vector.load %arg10[%288, %c0_68] : memref<16x512xf32, #tpu.memory_space<vmem>>, vector<2x256xf32>
    %c7_i32_69 = arith.constant 7 : i32
    %290 = arith.subi %c7_i32_69, %c7_i32_65 : i32
    %c2_i32_70 = arith.constant 2 : i32
    %291 = arith.muli %290, %c2_i32_70 : i32
    %292 = arith.index_cast %291 : i32 to index
    %c256_71 = arith.constant 256 : index
    %293 = vector.load %arg10[%292, %c256_71] : memref<16x512xf32, #tpu.memory_space<vmem>>, vector<2x256xf32>
    %294 = tpu.concatenate %289, %293 in 1 : vector<2x256xf32>, vector<2x256xf32> -> vector<2x512xf32>
    %295 = arith.addf %286, %294 : vector<2x512xf32>
    %296 = arith.mulf %295, %49 : vector<2x512xf32>
    %297 = math.tanh %296 : vector<2x512xf32>
    %298 = arith.mulf %297, %49 : vector<2x512xf32>
    %299 = arith.addf %298, %52 : vector<2x512xf32>
    %300 = vector.extract_strided_slice %299 {offsets = [0, 0], sizes = [2, 64], strides = [1, 1]} : vector<2x512xf32> to vector<2x64xf32>
    %301 = vector.extract_strided_slice %299 {offsets = [0, 256], sizes = [2, 64], strides = [1, 1]} : vector<2x512xf32> to vector<2x64xf32>
    %302 = tpu.concatenate %300, %301 in 1 : vector<2x64xf32>, vector<2x64xf32> -> vector<2x128xf32>
    %303 = vector.extract_strided_slice %299 {offsets = [0, 64], sizes = [2, 64], strides = [1, 1]} : vector<2x512xf32> to vector<2x64xf32>
    %304 = vector.extract_strided_slice %299 {offsets = [0, 320], sizes = [2, 64], strides = [1, 1]} : vector<2x512xf32> to vector<2x64xf32>
    %305 = tpu.concatenate %303, %304 in 1 : vector<2x64xf32>, vector<2x64xf32> -> vector<2x128xf32>
    %306 = vector.extract_strided_slice %299 {offsets = [0, 128], sizes = [2, 64], strides = [1, 1]} : vector<2x512xf32> to vector<2x64xf32>
    %307 = vector.extract_strided_slice %299 {offsets = [0, 384], sizes = [2, 64], strides = [1, 1]} : vector<2x512xf32> to vector<2x64xf32>
    %308 = tpu.concatenate %306, %307 in 1 : vector<2x64xf32>, vector<2x64xf32> -> vector<2x128xf32>
    %309 = vector.extract_strided_slice %299 {offsets = [0, 192], sizes = [2, 64], strides = [1, 1]} : vector<2x512xf32> to vector<2x64xf32>
    %310 = vector.extract_strided_slice %299 {offsets = [0, 448], sizes = [2, 64], strides = [1, 1]} : vector<2x512xf32> to vector<2x64xf32>
    %311 = tpu.concatenate %309, %310 in 1 : vector<2x64xf32>, vector<2x64xf32> -> vector<2x128xf32>
    %312 = arith.mulf %305, %281 : vector<2x128xf32>
    %313 = arith.mulf %302, %308 : vector<2x128xf32>
    %314 = arith.addf %312, %313 : vector<2x128xf32>
    %315 = math.tanh %314 : vector<2x128xf32>
    %316 = arith.mulf %311, %315 : vector<2x128xf32>
    %317 = arith.addf %284, %316 : vector<2x128xf32>
    %c8_i32 = arith.constant 8 : i32
    %cst_72 = arith.constant 1.250000e-01 : f32
    %318 = vector.broadcast %cst_72 : f32 to vector<2x128xf32>
    %319 = arith.mulf %317, %318 : vector<2x128xf32>
    %cst_73 = arith.constant dense<0.000000e+00> : vector<2xf32>
    %320 = vector.multi_reduction <add>, %319, %cst_73 [1] : vector<2x128xf32> to vector<2xf32>
    %321 = vector.shape_cast %320 : vector<2xf32> to vector<2x1xf32>
    %cst_74 = arith.constant 1.280000e+02 : f32
    %322 = vector.broadcast %cst_74 : f32 to vector<2x1xf32>
    %323 = arith.divf %321, %322 : vector<2x1xf32>
    %324 = vector.broadcast %323 : vector<2x1xf32> to vector<2x128xf32>
    %325 = arith.subf %319, %324 : vector<2x128xf32>
    %326 = arith.mulf %325, %325 : vector<2x128xf32>
    %cst_75 = arith.constant dense<0.000000e+00> : vector<2xf32>
    %327 = vector.multi_reduction <add>, %326, %cst_75 [1] : vector<2x128xf32> to vector<2xf32>
    %328 = vector.shape_cast %327 : vector<2xf32> to vector<2x1xf32>
    %cst_76 = arith.constant 1.280000e+02 : f32
    %329 = vector.broadcast %cst_76 : f32 to vector<2x1xf32>
    %330 = arith.divf %328, %329 : vector<2x1xf32>
    %331 = vector.broadcast %323 : vector<2x1xf32> to vector<2x128xf32>
    %332 = arith.subf %319, %331 : vector<2x128xf32>
    %cst_77 = arith.constant 9.99999974E-6 : f32
    %333 = vector.broadcast %cst_77 : f32 to vector<2x1xf32>
    %334 = arith.addf %330, %333 : vector<2x1xf32>
    %335 = math.rsqrt %334 : vector<2x1xf32>
    %336 = vector.broadcast %335 : vector<2x1xf32> to vector<2x128xf32>
    %337 = arith.mulf %332, %336 : vector<2x128xf32>
    %c0_78 = arith.constant 0 : index
    %c0_79 = arith.constant 0 : index
    %338 = vector.load %arg5[%c0_78, %c0_79] : memref<1x128xf32, #tpu.memory_space<vmem>>, vector<1x128xf32>
    %339 = vector.broadcast %338 : vector<1x128xf32> to vector<2x128xf32>
    %340 = arith.mulf %337, %339 : vector<2x128xf32>
    %c0_80 = arith.constant 0 : index
    %c0_81 = arith.constant 0 : index
    %341 = vector.load %arg6[%c0_80, %c0_81] : memref<1x128xf32, #tpu.memory_space<vmem>>, vector<1x128xf32>
    %342 = vector.broadcast %341 : vector<1x128xf32> to vector<2x128xf32>
    %343 = arith.addf %340, %342 : vector<2x128xf32>
    %c0_82 = arith.constant 0 : index
    %c0_83 = arith.constant 0 : index
    %344 = vector.load %arg7[%c0_82, %c0_83] : memref<128x128xf32, #tpu.memory_space<vmem>>, vector<128x128xf32>
    %cst_84 = arith.constant dense<0.000000e+00> : vector<2x128xf32>
    %345 = tpu.matmul %343, %344, %cst_84 {dimension_numbers = #tpu.dot_dimension_numbers<[1], [0], [0], [1], [0, 0, 1, 1], [], []>} : vector<2x128xf32>, vector<128x128xf32>, vector<2x128xf32> -> vector<2x128xf32>
    %c0_85 = arith.constant 0 : index
    %c0_86 = arith.constant 0 : index
    %346 = vector.load %arg8[%c0_85, %c0_86] : memref<1x128xf32, #tpu.memory_space<vmem>>, vector<1x128xf32>
    %347 = vector.broadcast %346 : vector<1x128xf32> to vector<2x128xf32>
    %348 = arith.addf %345, %347 : vector<2x128xf32>
    %c0_87 = arith.constant 0 : index
    %c0_88 = arith.constant 0 : index
    %349 = vector.load %arg9[%c0_87, %c0_88] : memref<2x128xf32, #tpu.memory_space<vmem>>, vector<2x128xf32>
    tpu.vector_store %arg9[%c0_87, %c0_88], %348 {strides = array<i32>} : memref<2x128xf32, #tpu.memory_space<vmem>>, vector<2x128xf32>,
    return
  }
  func.func @transform_0(%arg0: i32) -> (i32, i32) {
    %c0_i32 = arith.constant 0 : i32
    %c0_i32_0 = arith.constant 0 : i32
    %c0_i32_1 = arith.constant 0 : i32
    return %c0_i32, %c0_i32_0 : i32, i32
  }
  func.func @transform_1(%arg0: i32) -> (i32, i32) {
    %c0_i32 = arith.constant 0 : i32
    %c0_i32_0 = arith.constant 0 : i32
    %c0_i32_1 = arith.constant 0 : i32
    return %c0_i32, %c0_i32_0 : i32, i32
  }
  func.func @transform_2(%arg0: i32) -> (i32, i32) {
    %c0_i32 = arith.constant 0 : i32
    %c0_i32_0 = arith.constant 0 : i32
    %c0_i32_1 = arith.constant 0 : i32
    return %c0_i32, %c0_i32_0 : i32, i32
  }
  func.func @transform_3(%arg0: i32) -> (i32, i32) {
    %c0_i32 = arith.constant 0 : i32
    %c0_i32_0 = arith.constant 0 : i32
    %c0_i32_1 = arith.constant 0 : i32
    return %c0_i32, %c0_i32_0 : i32, i32
  }
  func.func @transform_4(%arg0: i32) -> (i32, i32) {
    %c0_i32 = arith.constant 0 : i32
    %c0_i32_0 = arith.constant 0 : i32
    %c0_i32_1 = arith.constant 0 : i32
    return %c0_i32, %c0_i32_0 : i32, i32
  }
  func.func @transform_5(%arg0: i32) -> (i32, i32) {
    %c0_i32 = arith.constant 0 : i32
    %c0_i32_0 = arith.constant 0 : i32
    %c0_i32_1 = arith.constant 0 : i32
    return %c0_i32, %c0_i32_0 : i32, i32
  }
  func.func @transform_6(%arg0: i32) -> (i32, i32) {
    %c0_i32 = arith.constant 0 : i32
    %c0_i32_0 = arith.constant 0 : i32
    %c0_i32_1 = arith.constant 0 : i32
    return %c0_i32, %c0_i32_0 : i32, i32
  }
  func.func @transform_7(%arg0: i32) -> (i32, i32) {
    %c0_i32 = arith.constant 0 : i32
    %c0_i32_0 = arith.constant 0 : i32
    %c0_i32_1 = arith.constant 0 : i32
    return %c0_i32, %c0_i32_0 : i32, i32
  }
  func.func @transform_8(%arg0: i32) -> (i32, i32) {
    %c0_i32 = arith.constant 0 : i32
    %c0_i32_0 = arith.constant 0 : i32
    %c0_i32_1 = arith.constant 0 : i32
    return %c0_i32, %c0_i32_0 : i32, i32
  }
}

</mosaic_0001>

<llo_original>
// kernel: forward.3
$region0: #{forward.3}
  #allocation0 [shape = 'u32[]', space=smem, size = 0x4, offset = 0x4, fixed_abs, tag = 'smem constant byte address 0x4 - core index']
  #allocation1 [shape = 'u32[72,128]{1,0:T(1,128)}', space=vmem, size = 0x9000, scoped, tag = 'internal scratch']
  #allocation2 [shape = 'f32[16,512]{1,0:T(8,128)}', space=vmem, size = 0x8000, scoped, tag = 'scratch operand']
  %s0 = inlined_call_operand.vmem [shape: f32[16,128], index: 0, kind: input, shape index: {}]
  %s1 = inlined_call_operand.hbm [shape: bf16[128,512], index: 1, kind: input, shape index: {}]
  %s2 = inlined_call_operand.hbm [shape: bf16[128,512], index: 2, kind: input, shape index: {}]
  %s3 = inlined_call_operand.hbm [shape: f32[1,512], index: 3, kind: input, shape index: {}]
  %s4 = inlined_call_operand.hbm [shape: f32[1,128], index: 4, kind: input, shape index: {}]
  %s5 = inlined_call_operand.hbm [shape: f32[1,128], index: 5, kind: input, shape index: {}]
  %s6 = inlined_call_operand.hbm [shape: f32[128,128], index: 6, kind: input, shape index: {}]
  %s7 = inlined_call_operand.hbm [shape: f32[1,128], index: 7, kind: input, shape index: {}]
  %s8 = inlined_call_operand.hbm [shape: f32[2,128], index: 8, kind: output, shape index: {}]
  %s9 = sld [smem:[#allocation0]]
  $region70: #{forward.3} parent=0
    _
  %s11 = ssub.s32 1, %s9
  %s12 = scalar_select 0, %s11, %s9
  $region1: #{forward.3} parent=0
    #allocation3 [shape = 'u8[131072]{0}', space=vmem, size = 0x20000, scoped, tag = 'input window, operand 1, single buffered']
    #allocation4 [shape = 's32[1]{0}', space=sflag, size = 0x4, scoped, tag = 'scoped memory for forward.3']
    #allocation5 [shape = 's32[1]{0}', space=sflag, size = 0x4, scoped, tag = 'scoped memory for forward.3']
    #allocation6 [shape = 'u8[131072]{0}', space=vmem, size = 0x20000, scoped, tag = 'input window, operand 2, single buffered']
    #allocation7 [shape = 's32[1]{0}', space=sflag, size = 0x4, scoped, tag = 'scoped memory for forward.3']
    #allocation8 [shape = 'u8[2048]{0}', space=vmem, size = 0x800, scoped, tag = 'input window, operand 3, single buffered']
    #allocation9 [shape = 'u8[512]{0}', space=vmem, size = 0x400, scoped, tag = 'input window, operand 4, single buffered']
    #allocation10 [shape = 's32[1]{0}', space=sflag, size = 0x4, scoped, tag = 'scoped memory for forward.3']
    #allocation11 [shape = 'u8[512]{0}', space=vmem, size = 0x400, scoped, tag = 'input window, operand 5, single buffered']
    #allocation12 [shape = 'u8[65536]{0}', space=vmem, size = 0x10000, scoped, tag = 'input window, operand 6, single buffered']
    #allocation13 [shape = 's32[1]{0}', space=sflag, size = 0x4, scoped, tag = 'scoped memory for forward.3']
    #allocation14 [shape = 'u8[512]{0}', space=vmem, size = 0x400, scoped, tag = 'input window, operand 7, single buffered']
    #allocation15 [shape = 'u8[1024]{0}', space=vmem, size = 0x400, scoped, tag = 'output window, operand 0, single buffered']
    %13 = vsyncpa [#allocation4], 0
    %14 = vsyncpa [#allocation7], 0
    %15 = vsyncpa [#allocation10], 0
    %16 = vsyncpa [#allocation13], 0
    %17 = vsyncpa [#allocation5], 0
    // Predicated region
    $region2: #{forward.3} parent=1 // pred_check
      _
    $region3: #{forward.3} parent=1 // pred_check_branch
      %19 = sbr.rel (0) target = $region5
    $region4: #{forward.3} parent=1 // pred_region
      _
    $region5: #{forward.3} parent=1 // pred_fallthru
      _
    // Predicated region
    $region6: #{forward.3} parent=1 // pred_check
      _
    $region7: #{forward.3} parent=1 // pred_check_branch
      %21 = sbr.rel (0) target = $region9
    $region8: #{forward.3} parent=1 // pred_region
      %23 = vsyncadd [#allocation4], 0
      %s24 = sshll.u32 %s1, 4
      %s25 = int_to_ptr.hbm [resolvable:$true] %s24
      %s26 = sshll.u32 [#allocation3], 4
      %s27 = int_to_ptr.vmem [resolvable:$true] %s26
      %32 = dma.hbm_to_vmem [thread:$0]  %s25, 4096, %s27, [#allocation4], 256, 256, 16
    $region9: #{forward.3} parent=1 // pred_fallthru
      _
    // Predicated region
    $region10: #{forward.3} parent=1 // pred_check
      _
    $region11: #{forward.3} parent=1 // pred_check_branch
      %34 = sbr.rel (0) target = $region13
    $region12: #{forward.3} parent=1 // pred_region
      %36 = vsyncadd [#allocation7], 0
      %s37 = sshll.u32 %s2, 4
      %s38 = int_to_ptr.hbm [resolvable:$true] %s37
      %s39 = sshll.u32 [#allocation6], 4
      %s40 = int_to_ptr.vmem [resolvable:$true] %s39
      %45 = dma.hbm_to_vmem [thread:$0]  %s38, 4096, %s40, [#allocation7], 256, 256, 16
    $region13: #{forward.3} parent=1 // pred_fallthru
      _
    // Predicated region
    $region14: #{forward.3} parent=1 // pred_check
      _
    $region15: #{forward.3} parent=1 // pred_check_branch
      %47 = sbr.rel (0) target = $region17
    $region16: #{forward.3} parent=1 // pred_region
      %49 = vsyncadd [#allocation7], 0
      %s51 = sshll.u32 %s3, 4
      %s52 = int_to_ptr.hbm [resolvable:$true] %s51
      %s53 = sshll.u32 [#allocation8], 4
      %s54 = int_to_ptr.vmem [resolvable:$true] %s53
      %56 = dma.hbm_to_vmem [thread:$0]  %s52, 64, %s54, [#allocation7]
    $region17: #{forward.3} parent=1 // pred_fallthru
      _
    // Predicated region
    $region18: #{forward.3} parent=1 // pred_check
      _
    $region19: #{forward.3} parent=1 // pred_check_branch
      %58 = sbr.rel (0) target = $region21
    $region20: #{forward.3} parent=1 // pred_region
      %60 = vsyncadd [#allocation10], 0
      %s62 = sshll.u32 %s4, 4
      %s63 = int_to_ptr.hbm [resolvable:$true] %s62
      %s64 = sshll.u32 [#allocation9], 4
      %s65 = int_to_ptr.vmem [resolvable:$true] %s64
      %67 = dma.hbm_to_vmem [thread:$0]  %s63, 16, %s65, [#allocation10]
    $region21: #{forward.3} parent=1 // pred_fallthru
      _
    // Predicated region
    $region22: #{forward.3} parent=1 // pred_check
      _
    $region23: #{forward.3} parent=1 // pred_check_branch
      %69 = sbr.rel (0) target = $region25
    $region24: #{forward.3} parent=1 // pred_region
      %71 = vsyncadd [#allocation10], 0
      %s73 = sshll.u32 %s5, 4
      %s74 = int_to_ptr.hbm [resolvable:$true] %s73
      %s75 = sshll.u32 [#allocation11], 4
      %s76 = int_to_ptr.vmem [resolvable:$true] %s75
      %78 = dma.hbm_to_vmem [thread:$0]  %s74, 16, %s76, [#allocation10]
    $region25: #{forward.3} parent=1 // pred_fallthru
      _
    // Predicated region
    $region26: #{forward.3} parent=1 // pred_check
      _
    $region27: #{forward.3} parent=1 // pred_check_branch
      %80 = sbr.rel (0) target = $region29
    $region28: #{forward.3} parent=1 // pred_region
      %82 = vsyncadd [#allocation13], 0
      %s83 = sshll.u32 %s6, 4
      %s84 = int_to_ptr.hbm [resolvable:$true] %s83
      %s85 = sshll.u32 [#allocation12], 4
      %s86 = int_to_ptr.vmem [resolvable:$true] %s85
      %91 = dma.hbm_to_vmem [thread:$0]  %s84, 2048, %s86, [#allocation13], 128, 128, 8
    $region29: #{forward.3} parent=1 // pred_fallthru
      _
    // Predicated region
    $region30: #{forward.3} parent=1 // pred_check
      _
    $region31: #{forward.3} parent=1 // pred_check_branch
      %93 = sbr.rel (0) target = $region33
    $region32: #{forward.3} parent=1 // pred_region
      %95 = vsyncadd [#allocation13], 0
      %s97 = sshll.u32 %s7, 4
      %s98 = int_to_ptr.hbm [resolvable:$true] %s97
      %s99 = sshll.u32 [#allocation14], 4
      %s100 = int_to_ptr.vmem [resolvable:$true] %s99
      %102 = dma.hbm_to_vmem [thread:$0]  %s98, 16, %s100, [#allocation13]
    $region33: #{forward.3} parent=1 // pred_fallthru
      _
    // Predicated region
    $region34: #{forward.3} parent=1 // pred_check
      _
    $region35: #{forward.3} parent=1 // pred_check_branch
      %104 = sbr.rel (0) target = $region37
    $region36: #{forward.3} parent=1 // pred_region
      %106 = dma.done [#allocation4], 4096
    $region37: #{forward.3} parent=1 // pred_fallthru
      _
    // Predicated region
    $region38: #{forward.3} parent=1 // pred_check
      _
    $region39: #{forward.3} parent=1 // pred_check_branch
      %108 = sbr.rel (0) target = $region41
    $region40: #{forward.3} parent=1 // pred_region
      %110 = dma.done [#allocation7], 4096
    $region41: #{forward.3} parent=1 // pred_fallthru
      _
    // Predicated region
    $region42: #{forward.3} parent=1 // pred_check
      _
    $region43: #{forward.3} parent=1 // pred_check_branch
      %112 = sbr.rel (0) target = $region45
    $region44: #{forward.3} parent=1 // pred_region
      %114 = dma.done [#allocation7], 64
    $region45: #{forward.3} parent=1 // pred_fallthru
      _
    // Predicated region
    $region46: #{forward.3} parent=1 // pred_check
      _
    $region47: #{forward.3} parent=1 // pred_check_branch
      %116 = sbr.rel (0) target = $region49
    $region48: #{forward.3} parent=1 // pred_region
      %118 = dma.done [#allocation10], 16
    $region49: #{forward.3} parent=1 // pred_fallthru
      _
    // Predicated region
    $region50: #{forward.3} parent=1 // pred_check
      _
    $region51: #{forward.3} parent=1 // pred_check_branch
      %120 = sbr.rel (0) target = $region53
    $region52: #{forward.3} parent=1 // pred_region
      %122 = dma.done [#allocation10], 16
    $region53: #{forward.3} parent=1 // pred_fallthru
      _
    // Predicated region
    $region54: #{forward.3} parent=1 // pred_check
      _
    $region55: #{forward.3} parent=1 // pred_check_branch
      %124 = sbr.rel (0) target = $region57
    $region56: #{forward.3} parent=1 // pred_region
      %126 = dma.done [#allocation13], 2048
    $region57: #{forward.3} parent=1 // pred_fallthru
      _
    // Predicated region
    $region58: #{forward.3} parent=1 // pred_check
      _
    $region59: #{forward.3} parent=1 // pred_check_branch
      %128 = sbr.rel (0) target = $region61
    $region60: #{forward.3} parent=1 // pred_region
      %130 = dma.done [#allocation13], 16
    $region61: #{forward.3} parent=1 // pred_fallthru
      _
    %v132 = vld [vmem:[%s0] sm:$0xff]
    %v133 = vld [vmem:[%s0 + $0x8] sm:$0xff]
    %v134 = vpack.c.bf16 %v133, %v132
    %v135 = vld [vmem:[#allocation3] sm:$0xff]
    %v136 = vld [vmem:[#allocation3 + $0x8] sm:$0xff]
    %v137 = vld [vmem:[#allocation3 + $0x10] sm:$0xff]
    %v138 = vld [vmem:[#allocation3 + $0x18] sm:$0xff]
    %v139 = vld [vmem:[#allocation3 + $0x20] sm:$0xff]
    %v140 = vld [vmem:[#allocation3 + $0x28] sm:$0xff]
    %v141 = vld [vmem:[#allocation3 + $0x30] sm:$0xff]
    %v142 = vld [vmem:[#allocation3 + $0x38] sm:$0xff]
    %v143 = vld [vmem:[#allocation3 + $0x40] sm:$0xff]
    %v144 = vld [vmem:[#allocation3 + $0x48] sm:$0xff]
    %v145 = vld [vmem:[#allocation3 + $0x50] sm:$0xff]
    %v146 = vld [vmem:[#allocation3 + $0x58] sm:$0xff]
    %v147 = vld [vmem:[#allocation3 + $0x60] sm:$0xff]
    %v148 = vld [vmem:[#allocation3 + $0x68] sm:$0xff]
    %v149 = vld [vmem:[#allocation3 + $0x70] sm:$0xff]
    %v150 = vld [vmem:[#allocation3 + $0x78] sm:$0xff]
    %v151 = vld [vmem:[#allocation3 + $0x80] sm:$0xff]
    %v152 = vld [vmem:[#allocation3 + $0x88] sm:$0xff]
    %v153 = vld [vmem:[#allocation3 + $0x90] sm:$0xff]
    %v154 = vld [vmem:[#allocation3 + $0x98] sm:$0xff]
    %v155 = vld [vmem:[#allocation3 + $0xa0] sm:$0xff]
    %v156 = vld [vmem:[#allocation3 + $0xa8] sm:$0xff]
    %v157 = vld [vmem:[#allocation3 + $0xb0] sm:$0xff]
    %v158 = vld [vmem:[#allocation3 + $0xb8] sm:$0xff]
    %v159 = vld [vmem:[#allocation3 + $0xc0] sm:$0xff]
    %v160 = vld [vmem:[#allocation3 + $0xc8] sm:$0xff]
    %v161 = vld [vmem:[#allocation3 + $0xd0] sm:$0xff]
    %v162 = vld [vmem:[#allocation3 + $0xd8] sm:$0xff]
    %v163 = vld [vmem:[#allocation3 + $0xe0] sm:$0xff]
    %v164 = vld [vmem:[#allocation3 + $0xe8] sm:$0xff]
    %v165 = vld [vmem:[#allocation3 + $0xf0] sm:$0xff]
    %v166 = vld [vmem:[#allocation3 + $0xf8] sm:$0xff]
    %v167 = vld [vmem:[#allocation8] sm:$0xf]
    %v169 = vperm.slane %v167, 0
    %v170 = vperm.slane %v167, 1
    %v171 = vperm.slane %v167, 2
    %v172 = vperm.slane %v167, 3
    %v209 = vunpack.c.l.b16 %v135
    %v210 = vunpack.c.h.b16 %v135
    %v211 = vunpack.c.l.b16 %v136
    %v212 = vunpack.c.h.b16 %v136
    %v213 = vunpack.c.l.b16 %v137
    %v214 = vunpack.c.h.b16 %v137
    %v215 = vunpack.c.l.b16 %v138
    %v216 = vunpack.c.h.b16 %v138
    %v217 = vunpack.c.l.b16 %v139
    %v218 = vunpack.c.h.b16 %v139
    %v219 = vunpack.c.l.b16 %v140
    %v220 = vunpack.c.h.b16 %v140
    %v221 = vunpack.c.l.b16 %v141
    %v222 = vunpack.c.h.b16 %v141
    %v223 = vunpack.c.l.b16 %v142
    %v224 = vunpack.c.h.b16 %v142
    %v225 = vunpack.c.l.b16 %v143
    %v226 = vunpack.c.h.b16 %v143
    %v227 = vunpack.c.l.b16 %v144
    %v228 = vunpack.c.h.b16 %v144
    %v229 = vunpack.c.l.b16 %v145
    %v230 = vunpack.c.h.b16 %v145
    %v231 = vunpack.c.l.b16 %v146
    %v232 = vunpack.c.h.b16 %v146
    %v233 = vunpack.c.l.b16 %v147
    %v234 = vunpack.c.h.b16 %v147
    %v235 = vunpack.c.l.b16 %v148
    %v236 = vunpack.c.h.b16 %v148
    %v237 = vunpack.c.l.b16 %v149
    %v238 = vunpack.c.h.b16 %v149
    %v239 = vunpack.c.l.b16 %v150
    %v240 = vunpack.c.h.b16 %v150
    %v241 = vunpack.c.l.b16 %v151
    %v242 = vunpack.c.h.b16 %v151
    %v243 = vunpack.c.l.b16 %v152
    %v244 = vunpack.c.h.b16 %v152
    %v245 = vunpack.c.l.b16 %v153
    %v246 = vunpack.c.h.b16 %v153
    %v247 = vunpack.c.l.b16 %v154
    %v248 = vunpack.c.h.b16 %v154
    %v249 = vunpack.c.l.b16 %v155
    %v250 = vunpack.c.h.b16 %v155
    %v251 = vunpack.c.l.b16 %v156
    %v252 = vunpack.c.h.b16 %v156
    %v253 = vunpack.c.l.b16 %v157
    %v254 = vunpack.c.h.b16 %v157
    %v255 = vunpack.c.l.b16 %v158
    %v256 = vunpack.c.h.b16 %v158
    %v257 = vunpack.c.l.b16 %v159
    %v258 = vunpack.c.h.b16 %v159
    %v259 = vunpack.c.l.b16 %v160
    %v260 = vunpack.c.h.b16 %v160
    %v261 = vunpack.c.l.b16 %v161
    %v262 = vunpack.c.h.b16 %v161
    %v263 = vunpack.c.l.b16 %v162
    %v264 = vunpack.c.h.b16 %v162
    %v265 = vunpack.c.l.b16 %v163
    %v266 = vunpack.c.h.b16 %v163
    %v267 = vunpack.c.l.b16 %v164
    %v268 = vunpack.c.h.b16 %v164
    %v269 = vunpack.c.l.b16 %v165
    %v270 = vunpack.c.h.b16 %v165
    %v271 = vunpack.c.l.b16 %v166
    %v272 = vunpack.c.h.b16 %v166
    %v273 = vpack.c.b16 %v213, %v209
    %v274 = vpack.c.b16 %v214, %v210
    %v275 = vpack.c.b16 %v215, %v211
    %v276 = vpack.c.b16 %v216, %v212
    %v277 = vpack.c.b16 %v221, %v217
    %v278 = vpack.c.b16 %v222, %v218
    %v279 = vpack.c.b16 %v223, %v219
    %v280 = vpack.c.b16 %v224, %v220
    %v281 = vpack.c.b16 %v229, %v225
    %v282 = vpack.c.b16 %v230, %v226
    %v283 = vpack.c.b16 %v231, %v227
    %v284 = vpack.c.b16 %v232, %v228
    %v285 = vpack.c.b16 %v237, %v233
    %v286 = vpack.c.b16 %v238, %v234
    %v287 = vpack.c.b16 %v239, %v235
    %v288 = vpack.c.b16 %v240, %v236
    %v289 = vpack.c.b16 %v245, %v241
    %v290 = vpack.c.b16 %v246, %v242
    %v291 = vpack.c.b16 %v247, %v243
    %v292 = vpack.c.b16 %v248, %v244
    %v293 = vpack.c.b16 %v253, %v249
    %v294 = vpack.c.b16 %v254, %v250
    %v295 = vpack.c.b16 %v255, %v251
    %v296 = vpack.c.b16 %v256, %v252
    %v297 = vpack.c.b16 %v261, %v257
    %v298 = vpack.c.b16 %v262, %v258
    %v299 = vpack.c.b16 %v263, %v259
    %v300 = vpack.c.b16 %v264, %v260
    %v301 = vpack.c.b16 %v269, %v265
    %v302 = vpack.c.b16 %v270, %v266
    %v303 = vpack.c.b16 %v271, %v267
    %v304 = vpack.c.b16 %v272, %v268
    %337 = vmatpush.bf16.msra.mxu0 %v301
    %338 = vmatpush.bf16.msra.mxu0 %v297
    %339 = vmatpush.bf16.msra.mxu0 %v293
    %340 = vmatpush.bf16.msra.mxu0 %v289
    %341 = vmatpush.bf16.msra.mxu0 %v285
    %342 = vmatpush.bf16.msra.mxu0 %v281
    %343 = vmatpush.bf16.msra.mxu0 %v277
    %344 = vmatpush.bf16.msra.mxu0 %v273
    %345 = vmatmul.bf16.gmra.mxu0 %v134
    %v346 = vpop.f32.mrf.mxu0
    %v347 = vadd.f32 %v169, %v346
    %v348 = vpop.f32.mrf.mxu0
    %v349 = vadd.f32 %v169, %v348
    %350 = vdwg.mxu0
    %351 = vmatpush.bf16.msra.mxu0 %v302
    %352 = vmatpush.bf16.msra.mxu0 %v298
    %353 = vmatpush.bf16.msra.mxu0 %v294
    %354 = vmatpush.bf16.msra.mxu0 %v290
    %355 = vmatpush.bf16.msra.mxu0 %v286
    %356 = vmatpush.bf16.msra.mxu0 %v282
    %357 = vmatpush.bf16.msra.mxu0 %v278
    %358 = vmatpush.bf16.msra.mxu0 %v274
    %359 = vmatmul.bf16.gmra.mxu0 %v134
    %v360 = vpop.f32.mrf.mxu0
    %v361 = vadd.f32 %v170, %v360
    %v362 = vpop.f32.mrf.mxu0
    %v363 = vadd.f32 %v170, %v362
    %364 = vdwg.mxu0
    %365 = vmatpush.bf16.msra.mxu0 %v303
    %366 = vmatpush.bf16.msra.mxu0 %v299
    %367 = vmatpush.bf16.msra.mxu0 %v295
    %368 = vmatpush.bf16.msra.mxu0 %v291
    %369 = vmatpush.bf16.msra.mxu0 %v287
    %370 = vmatpush.bf16.msra.mxu0 %v283
    %371 = vmatpush.bf16.msra.mxu0 %v279
    %372 = vmatpush.bf16.msra.mxu0 %v275
    %373 = vmatmul.bf16.gmra.mxu0 %v134
    %v374 = vpop.f32.mrf.mxu0
    %v375 = vadd.f32 %v171, %v374
    %v376 = vpop.f32.mrf.mxu0
    %v377 = vadd.f32 %v171, %v376
    %378 = vdwg.mxu0
    %379 = vmatpush.bf16.msra.mxu0 %v304
    %380 = vmatpush.bf16.msra.mxu0 %v300
    %381 = vmatpush.bf16.msra.mxu0 %v296
    %382 = vmatpush.bf16.msra.mxu0 %v292
    %383 = vmatpush.bf16.msra.mxu0 %v288
    %384 = vmatpush.bf16.msra.mxu0 %v284
    %385 = vmatpush.bf16.msra.mxu0 %v280
    %386 = vmatpush.bf16.msra.mxu0 %v276
    %387 = vmatmul.bf16.gmra.mxu0 %v134
    %v388 = vpop.f32.mrf.mxu0
    %v389 = vadd.f32 %v172, %v388
    %v390 = vpop.f32.mrf.mxu0
    %v391 = vadd.f32 %v172, %v390
    %392 = vdwg.mxu0
    %393 = vst [vmem:[#allocation2] sm:$0xff] %v347
    %394 = vst [vmem:[#allocation2 + $0x8] sm:$0xff] %v361
    %395 = vst [vmem:[#allocation2 + $0x10] sm:$0xff] %v375
    %396 = vst [vmem:[#allocation2 + $0x18] sm:$0xff] %v389
    %397 = vst [vmem:[#allocation2 + $0x20] sm:$0xff] %v349
    %398 = vst [vmem:[#allocation2 + $0x28] sm:$0xff] %v363
    %399 = vst [vmem:[#allocation2 + $0x30] sm:$0xff] %v377
    %400 = vst [vmem:[#allocation2 + $0x38] sm:$0xff] %v391
    %v401 = vld [vmem:[#allocation6] sm:$0xff]
    %v402 = vld [vmem:[#allocation6 + $0x8] sm:$0xff]
    %v403 = vld [vmem:[#allocation6 + $0x10] sm:$0xff]
    %v404 = vld [vmem:[#allocation6 + $0x18] sm:$0xff]
    %v405 = vld [vmem:[#allocation6 + $0x20] sm:$0xff]
    %v406 = vld [vmem:[#allocation6 + $0x28] sm:$0xff]
    %v407 = vld [vmem:[#allocation6 + $0x30] sm:$0xff]
    %v408 = vld [vmem:[#allocation6 + $0x38] sm:$0xff]
    %v409 = vld [vmem:[#allocation6 + $0x40] sm:$0xff]
    %v410 = vld [vmem:[#allocation6 + $0x48] sm:$0xff]
    %v411 = vld [vmem:[#allocation6 + $0x50] sm:$0xff]
    %v412 = vld [vmem:[#allocation6 + $0x58] sm:$0xff]
    %v413 = vld [vmem:[#allocation6 + $0x60] sm:$0xff]
    %v414 = vld [vmem:[#allocation6 + $0x68] sm:$0xff]
    %v415 = vld [vmem:[#allocation6 + $0x70] sm:$0xff]
    %v416 = vld [vmem:[#allocation6 + $0x78] sm:$0xff]
    %v417 = vld [vmem:[#allocation6 + $0x80] sm:$0xff]
    %v418 = vld [vmem:[#allocation6 + $0x88] sm:$0xff]
    %v419 = vld [vmem:[#allocation6 + $0x90] sm:$0xff]
    %v420 = vld [vmem:[#allocation6 + $0x98] sm:$0xff]
    %v421 = vld [vmem:[#allocation6 + $0xa0] sm:$0xff]
    %v422 = vld [vmem:[#allocation6 + $0xa8] sm:$0xff]
    %v423 = vld [vmem:[#allocation6 + $0xb0] sm:$0xff]
    %v424 = vld [vmem:[#allocation6 + $0xb8] sm:$0xff]
    %v425 = vld [vmem:[#allocation6 + $0xc0] sm:$0xff]
    %v426 = vld [vmem:[#allocation6 + $0xc8] sm:$0xff]
    %v427 = vld [vmem:[#allocation6 + $0xd0] sm:$0xff]
    %v428 = vld [vmem:[#allocation6 + $0xd8] sm:$0xff]
    %v429 = vld [vmem:[#allocation6 + $0xe0] sm:$0xff]
    %v430 = vld [vmem:[#allocation6 + $0xe8] sm:$0xff]
    %v431 = vld [vmem:[#allocation6 + $0xf0] sm:$0xff]
    %v432 = vld [vmem:[#allocation6 + $0xf8] sm:$0xff]
    %v433 = vlaneseq
    %v434 = vand.u32 %v433, 127
    %v435 = vadd.s32 %v434, 128
    %v436 = vadd.s32 %v434, 256
    %v437 = vadd.s32 %v434, 384
    %vm438 = vcmp.lt.s32.totalorder %v434, 0
    %v439 = vsub.s32 0, %v434
    %v440 = vsel %vm438, %v439, %v434
    %v441 = vshrl.u32 %v440, 8
    %v442 = vand.u32 %v440, 255
    %v443 = vsub.s32 0, %v442
    %v444 = vsel %vm438, %v443, %v442
    %vm445 = vcmp.lt.s32.totalorder %v435, 0
    %v446 = vsub.s32 0, %v435
    %v447 = vsel %vm445, %v446, %v435
    %v448 = vshrl.u32 %v447, 8
    %v449 = vand.u32 %v447, 255
    %v450 = vsub.s32 0, %v449
    %v451 = vsel %vm445, %v450, %v449
    %vm452 = vcmp.lt.s32.totalorder %v436, 0
    %v453 = vsub.s32 0, %v436
    %v454 = vsel %vm452, %v453, %v436
    %v455 = vshrl.u32 %v454, 8
    %v456 = vand.u32 %v454, 255
    %v457 = vsub.s32 0, %v456
    %v458 = vsel %vm452, %v457, %v456
    %vm459 = vcmp.lt.s32.totalorder %v437, 0
    %v460 = vsub.s32 0, %v437
    %v461 = vsel %vm459, %v460, %v437
    %v462 = vshrl.u32 %v461, 8
    %v463 = vand.u32 %v461, 255
    %v464 = vsub.s32 0, %v463
    %v465 = vsel %vm459, %v464, %v463
    %vm466 = vcmp.ne.s32.totalorder %v444, 0
    %vm467 = vcmp.ne.s32.totalorder %v451, 0
    %vm468 = vcmp.ne.s32.totalorder %v458, 0
    %vm469 = vcmp.ne.s32.totalorder %v465, 0
    %vm470 = vcmp.lt.s32.totalorder %v444, 0
    %vm471 = vcmp.lt.s32.totalorder %v451, 0
    %vm472 = vcmp.lt.s32.totalorder %v458, 0
    %vm473 = vcmp.lt.s32.totalorder %v465, 0
    %vm474 = vmand %vm470, %vm466
    %vm475 = vmand %vm471, %vm467
    %vm476 = vmand %vm472, %vm468
    %vm477 = vmand %vm473, %vm469
    %v478 = vadd.s32 %v444, 256
    %v479 = vadd.s32 %v451, 256
    %v480 = vadd.s32 %v458, 256
    %v481 = vadd.s32 %v465, 256
    %v482 = vsel %vm474, %v478, %v444
    %v483 = vsel %vm475, %v479, %v451
    %v484 = vsel %vm476, %v480, %v458
    %v485 = vsel %vm477, %v481, %v465
    %vm486 = vcmp.ge.s32.totalorder %v482, 128
    %vm487 = vcmp.ge.s32.totalorder %v483, 128
    %vm488 = vcmp.ge.s32.totalorder %v484, 128
    %vm489 = vcmp.ge.s32.totalorder %v485, 128
    %vm490 = vcmp.lt.s32.totalorder %v482, 192
    %vm491 = vcmp.lt.s32.totalorder %v483, 192
    %vm492 = vcmp.lt.s32.totalorder %v484, 192
    %vm493 = vcmp.lt.s32.totalorder %v485, 192
    %vm494 = vmand %vm486, %vm490
    %vm495 = vmand %vm487, %vm491
    %vm496 = vmand %vm488, %vm492
    %vm497 = vmand %vm489, %vm493
    %v498 = vsel %vm494, 1.0, 0.5
    %v499 = vsel %vm495, 1.0, 0.5
    %v500 = vsel %vm496, 1.0, 0.5
    %v501 = vsel %vm497, 1.0, 0.5
    %v502 = vsel %vm494, 0.0, 0.5
    %v503 = vsel %vm495, 0.0, 0.5
    %v504 = vsel %vm496, 0.0, 0.5
    %v505 = vsel %vm497, 0.0, 0.5
    %v506 = vld [vmem:[#allocation2] sm:$0x3]
    %v507 = vld [vmem:[#allocation2 + $0x8] sm:$0x3]
    %v508 = vld [vmem:[#allocation2 + $0x30] sm:$0xc0]
    %v509 = vld [vmem:[#allocation2 + $0x38] sm:$0xc0]
    %v512 = vrot.slane %v508, 6
    %v513 = vrot.slane %v509, 6
    %v548 = vunpack.c.l.b16 %v401
    %v549 = vunpack.c.h.b16 %v401
    %v550 = vunpack.c.l.b16 %v402
    %v551 = vunpack.c.h.b16 %v402
    %v552 = vunpack.c.l.b16 %v403
    %v553 = vunpack.c.h.b16 %v403
    %v554 = vunpack.c.l.b16 %v404
    %v555 = vunpack.c.h.b16 %v404
    %v556 = vunpack.c.l.b16 %v405
    %v557 = vunpack.c.h.b16 %v405
    %v558 = vunpack.c.l.b16 %v406
    %v559 = vunpack.c.h.b16 %v406
    %v560 = vunpack.c.l.b16 %v407
    %v561 = vunpack.c.h.b16 %v407
    %v562 = vunpack.c.l.b16 %v408
    %v563 = vunpack.c.h.b16 %v408
    %v564 = vunpack.c.l.b16 %v409
    %v565 = vunpack.c.h.b16 %v409
    %v566 = vunpack.c.l.b16 %v410
    %v567 = vunpack.c.h.b16 %v410
    %v568 = vunpack.c.l.b16 %v411
    %v569 = vunpack.c.h.b16 %v411
    %v570 = vunpack.c.l.b16 %v412
    %v571 = vunpack.c.h.b16 %v412
    %v572 = vunpack.c.l.b16 %v413
    %v573 = vunpack.c.h.b16 %v413
    %v574 = vunpack.c.l.b16 %v414
    %v575 = vunpack.c.h.b16 %v414
    %v576 = vunpack.c.l.b16 %v415
    %v577 = vunpack.c.h.b16 %v415
    %v578 = vunpack.c.l.b16 %v416
    %v579 = vunpack.c.h.b16 %v416
    %v580 = vunpack.c.l.b16 %v417
    %v581 = vunpack.c.h.b16 %v417
    %v582 = vunpack.c.l.b16 %v418
    %v583 = vunpack.c.h.b16 %v418
    %v584 = vunpack.c.l.b16 %v419
    %v585 = vunpack.c.h.b16 %v419
    %v586 = vunpack.c.l.b16 %v420
    %v587 = vunpack.c.h.b16 %v420
    %v588 = vunpack.c.l.b16 %v421
    %v589 = vunpack.c.h.b16 %v421
    %v590 = vunpack.c.l.b16 %v422
    %v591 = vunpack.c.h.b16 %v422
    %v592 = vunpack.c.l.b16 %v423
    %v593 = vunpack.c.h.b16 %v423
    %v594 = vunpack.c.l.b16 %v424
    %v595 = vunpack.c.h.b16 %v424
    %v596 = vunpack.c.l.b16 %v425
    %v597 = vunpack.c.h.b16 %v425
    %v598 = vunpack.c.l.b16 %v426
    %v599 = vunpack.c.h.b16 %v426
    %v600 = vunpack.c.l.b16 %v427
    %v601 = vunpack.c.h.b16 %v427
    %v602 = vunpack.c.l.b16 %v428
    %v603 = vunpack.c.h.b16 %v428
    %v604 = vunpack.c.l.b16 %v429
    %v605 = vunpack.c.h.b16 %v429
    %v606 = vunpack.c.l.b16 %v430
    %v607 = vunpack.c.h.b16 %v430
    %v608 = vunpack.c.l.b16 %v431
    %v609 = vunpack.c.h.b16 %v431
    %v610 = vunpack.c.l.b16 %v432
    %v611 = vunpack.c.h.b16 %v432
    %v612 = vpack.c.b16 %v552, %v548
    %v613 = vpack.c.b16 %v553, %v549
    %v614 = vpack.c.b16 %v554, %v550
    %v615 = vpack.c.b16 %v555, %v551
    %v616 = vpack.c.b16 %v560, %v556
    %v617 = vpack.c.b16 %v561, %v557
    %v618 = vpack.c.b16 %v562, %v558
    %v619 = vpack.c.b16 %v563, %v559
    %v620 = vpack.c.b16 %v568, %v564
    %v621 = vpack.c.b16 %v569, %v565
    %v622 = vpack.c.b16 %v570, %v566
    %v623 = vpack.c.b16 %v571, %v567
    %v624 = vpack.c.b16 %v576, %v572
    %v625 = vpack.c.b16 %v577, %v573
    %v626 = vpack.c.b16 %v578, %v574
    %v627 = vpack.c.b16 %v579, %v575
    %v628 = vpack.c.b16 %v584, %v580
    %v629 = vpack.c.b16 %v585, %v581
    %v630 = vpack.c.b16 %v586, %v582
    %v631 = vpack.c.b16 %v587, %v583
    %v632 = vpack.c.b16 %v592, %v588
    %v633 = vpack.c.b16 %v593, %v589
    %v634 = vpack.c.b16 %v594, %v590
    %v635 = vpack.c.b16 %v595, %v591
    %v636 = vpack.c.b16 %v600, %v596
    %v637 = vpack.c.b16 %v601, %v597
    %v638 = vpack.c.b16 %v602, %v598
    %v639 = vpack.c.b16 %v603, %v599
    %v640 = vpack.c.b16 %v608, %v604
    %v641 = vpack.c.b16 %v609, %v605
    %v642 = vpack.c.b16 %v610, %v606
    %v643 = vpack.c.b16 %v611, %v607
    %676 = vmatpush.bf16.msra.mxu0 %v640
    %677 = vmatpush.bf16.msra.mxu0 %v636
    %678 = vmatpush.bf16.msra.mxu0 %v632
    %679 = vmatpush.bf16.msra.mxu0 %v628
    %680 = vmatpush.bf16.msra.mxu0 %v624
    %681 = vmatpush.bf16.msra.mxu0 %v620
    %682 = vmatpush.bf16.msra.mxu0 %v616
    %683 = vmatpush.bf16.msra.mxu0 %v612
    %684 = vmatmul.bf16.gmra.mxu0 0
    %v685 = vpop.f32.mrf.mxu0
    %v686 = vadd.f32 %v506, %v685
    %v687 = vpop.f32.mrf.mxu0
    %688 = vdwg.mxu0
    %689 = vmatpush.bf16.msra.mxu0 %v641
    %690 = vmatpush.bf16.msra.mxu0 %v637
    %691 = vmatpush.bf16.msra.mxu0 %v633
    %692 = vmatpush.bf16.msra.mxu0 %v629
    %693 = vmatpush.bf16.msra.mxu0 %v625
    %694 = vmatpush.bf16.msra.mxu0 %v621
    %695 = vmatpush.bf16.msra.mxu0 %v617
    %696 = vmatpush.bf16.msra.mxu0 %v613
    %697 = vmatmul.bf16.gmra.mxu0 0
    %v698 = vpop.f32.mrf.mxu0
    %v699 = vadd.f32 %v507, %v698
    %v700 = vpop.f32.mrf.mxu0
    %701 = vdwg.mxu0
    %702 = vmatpush.bf16.msra.mxu0 %v642
    %703 = vmatpush.bf16.msra.mxu0 %v638
    %704 = vmatpush.bf16.msra.mxu0 %v634
    %705 = vmatpush.bf16.msra.mxu0 %v630
    %706 = vmatpush.bf16.msra.mxu0 %v626
    %707 = vmatpush.bf16.msra.mxu0 %v622
    %708 = vmatpush.bf16.msra.mxu0 %v618
    %709 = vmatpush.bf16.msra.mxu0 %v614
    %710 = vmatmul.bf16.gmra.mxu0 0
    %v711 = vpop.f32.mrf.mxu0
    %v712 = vadd.f32 %v512, %v711
    %v713 = vpop.f32.mrf.mxu0
    %714 = vdwg.mxu0
    %715 = vmatpush.bf16.msra.mxu0 %v643
    %716 = vmatpush.bf16.msra.mxu0 %v639
    %717 = vmatpush.bf16.msra.mxu0 %v635
    %718 = vmatpush.bf16.msra.mxu0 %v631
    %719 = vmatpush.bf16.msra.mxu0 %v627
    %720 = vmatpush.bf16.msra.mxu0 %v623
    %721 = vmatpush.bf16.msra.mxu0 %v619
    %722 = vmatpush.bf16.msra.mxu0 %v615
    %723 = vmatmul.bf16.gmra.mxu0 0
    %v724 = vpop.f32.mrf.mxu0
    %v725 = vadd.f32 %v513, %v724
    %v726 = vpop.f32.mrf.mxu0
    %727 = vdwg.mxu0
    %v728 = vmul.f32 %v686, %v498
    %v729 = vmul.f32 %v699, %v499
    %v730 = vmul.f32 %v712, %v500
    %v731 = vmul.f32 %v725, %v501
    %v732 = vtanh.pop %v728
    %v733 = vtanh.pop %v729
    %v734 = vtanh.pop %v730
    %v735 = vtanh.pop %v731
    %v736 = vmul.f32 %v732, %v498
    %v737 = vmul.f32 %v733, %v499
    %v738 = vmul.f32 %v734, %v500
    %v739 = vmul.f32 %v735, %v501
    %v740 = vadd.f32 %v736, %v502
    %v741 = vadd.f32 %v737, %v503
    %v742 = vadd.f32 %v738, %v504
    %v743 = vadd.f32 %v739, %v505
    %745 = vrot.lane.b32.xlu0 %v742, 64
    %v746 = vpop.permute.xlu0 %745
    %vm748 = vcmask 523264
    %v749 = vsel %vm748, %v740, %v746
    %751 = vrot.lane.b32.xlu0 %v740, 64
    %v752 = vpop.permute.xlu0 %751
    %v754 = vsel %vm748, %v752, %v742
    %756 = vrot.lane.b32.xlu0 %v743, 64
    %v757 = vpop.permute.xlu0 %756
    %v759 = vsel %vm748, %v741, %v757
    %761 = vrot.lane.b32.xlu0 %v741, 64
    %v762 = vpop.permute.xlu0 %761
    %v764 = vsel %vm748, %v762, %v743
    %v765 = vmul.f32 %v754, 0.0
    %v766 = vmul.f32 %v749, %v759
    %v767 = vadd.f32 %v765, %v766
    %v768 = vtanh.pop %v767
    %v769 = vmul.f32 %v764, %v768
    %v770 = vadd.f32 %v769, 0.0
    %v771 = vpack.c.bf16 %v769, %v769
    %v772 = vld [vmem:[#allocation2] sm:$0xc]
    %v773 = vld [vmem:[#allocation2 + $0x8] sm:$0xc]
    %v774 = vld [vmem:[#allocation2 + $0x30] sm:$0x30]
    %v775 = vld [vmem:[#allocation2 + $0x38] sm:$0x30]
    %v778 = vrot.slane %v774, 2
    %v779 = vrot.slane %v775, 2
    %v782 = vrot.slane %v772, 2
    %v783 = vrot.slane %v773, 2
    %v784 = vrot.slane %v778, 2
    %v785 = vrot.slane %v779, 2
    %790 = vmatpush.bf16.msra.mxu0 %v640
    %791 = vmatpush.bf16.msra.mxu0 %v636
    %792 = vmatpush.bf16.msra.mxu0 %v632
    %793 = vmatpush.bf16.msra.mxu0 %v628
    %794 = vmatpush.bf16.msra.mxu0 %v624
    %795 = vmatpush.bf16.msra.mxu0 %v620
    %796 = vmatpush.bf16.msra.mxu0 %v616
    %797 = vmatpush.bf16.msra.mxu0 %v612
    %798 = vmatmul.bf16.gmra.mxu0 %v771
    %v799 = vpop.f32.mrf.mxu0
    %v800 = vadd.f32 %v782, %v799
    %v801 = vpop.f32.mrf.mxu0
    %802 = vdwg.mxu0
    %803 = vmatpush.bf16.msra.mxu0 %v641
    %804 = vmatpush.bf16.msra.mxu0 %v637
    %805 = vmatpush.bf16.msra.mxu0 %v633
    %806 = vmatpush.bf16.msra.mxu0 %v629
    %807 = vmatpush.bf16.msra.mxu0 %v625
    %808 = vmatpush.bf16.msra.mxu0 %v621
    %809 = vmatpush.bf16.msra.mxu0 %v617
    %810 = vmatpush.bf16.msra.mxu0 %v613
    %811 = vmatmul.bf16.gmra.mxu0 %v771
    %v812 = vpop.f32.mrf.mxu0
    %v813 = vadd.f32 %v783, %v812
    %v814 = vpop.f32.mrf.mxu0
    %815 = vdwg.mxu0
    %816 = vmatpush.bf16.msra.mxu0 %v642
    %817 = vmatpush.bf16.msra.mxu0 %v638
    %818 = vmatpush.bf16.msra.mxu0 %v634
    %819 = vmatpush.bf16.msra.mxu0 %v630
    %820 = vmatpush.bf16.msra.mxu0 %v626
    %821 = vmatpush.bf16.msra.mxu0 %v622
    %822 = vmatpush.bf16.msra.mxu0 %v618
    %823 = vmatpush.bf16.msra.mxu0 %v614
    %824 = vmatmul.bf16.gmra.mxu0 %v771
    %v825 = vpop.f32.mrf.mxu0
    %v826 = vadd.f32 %v784, %v825
    %v827 = vpop.f32.mrf.mxu0
    %828 = vdwg.mxu0
    %829 = vmatpush.bf16.msra.mxu0 %v643
    %830 = vmatpush.bf16.msra.mxu0 %v639
    %831 = vmatpush.bf16.msra.mxu0 %v635
    %832 = vmatpush.bf16.msra.mxu0 %v631
    %833 = vmatpush.bf16.msra.mxu0 %v627
    %834 = vmatpush.bf16.msra.mxu0 %v623
    %835 = vmatpush.bf16.msra.mxu0 %v619
    %836 = vmatpush.bf16.msra.mxu0 %v615
    %837 = vmatmul.bf16.gmra.mxu0 %v771
    %v838 = vpop.f32.mrf.mxu0
    %v839 = vadd.f32 %v785, %v838
    %v840 = vpop.f32.mrf.mxu0
    %841 = vdwg.mxu0
    %v842 = vmul.f32 %v800, %v498
    %v843 = vmul.f32 %v813, %v499
    %v844 = vmul.f32 %v826, %v500
    %v845 = vmul.f32 %v839, %v501
    %v846 = vtanh.pop %v842
    %v847 = vtanh.pop %v843
    %v848 = vtanh.pop %v844
    %v849 = vtanh.pop %v845
    %v850 = vmul.f32 %v846, %v498
    %v851 = vmul.f32 %v847, %v499
    %v852 = vmul.f32 %v848, %v500
    %v853 = vmul.f32 %v849, %v501
    %v854 = vadd.f32 %v850, %v502
    %v855 = vadd.f32 %v851, %v503
    %v856 = vadd.f32 %v852, %v504
    %v857 = vadd.f32 %v853, %v505
    %859 = vrot.lane.b32.xlu0 %v856, 64
    %v860 = vpop.permute.xlu0 %859
    %v862 = vsel %vm748, %v854, %v860
    %864 = vrot.lane.b32.xlu0 %v854, 64
    %v865 = vpop.permute.xlu0 %864
    %v867 = vsel %vm748, %v865, %v856
    %869 = vrot.lane.b32.xlu0 %v857, 64
    %v870 = vpop.permute.xlu0 %869
    %v872 = vsel %vm748, %v855, %v870
    %874 = vrot.lane.b32.xlu0 %v855, 64
    %v875 = vpop.permute.xlu0 %874
    %v877 = vsel %vm748, %v875, %v857
    %v878 = vmul.f32 %v867, %v767
    %v879 = vmul.f32 %v862, %v872
    %v880 = vadd.f32 %v878, %v879
    %v881 = vtanh.pop %v880
    %v882 = vmul.f32 %v877, %v881
    %v883 = vadd.f32 %v770, %v882
    %v884 = vpack.c.bf16 %v882, %v882
    %v885 = vld [vmem:[#allocation2] sm:$0x30]
    %v886 = vld [vmem:[#allocation2 + $0x8] sm:$0x30]
    %v887 = vld [vmem:[#allocation2 + $0x30] sm:$0xc]
    %v888 = vld [vmem:[#allocation2 + $0x38] sm:$0xc]
    %v891 = vrot.slane %v887, 6
    %v892 = vrot.slane %v888, 6
    %v895 = vrot.slane %v885, 4
    %v896 = vrot.slane %v886, 4
    %v897 = vrot.slane %v891, 4
    %v898 = vrot.slane %v892, 4
    %903 = vmatpush.bf16.msra.mxu0 %v640
    %904 = vmatpush.bf16.msra.mxu0 %v636
    %905 = vmatpush.bf16.msra.mxu0 %v632
    %906 = vmatpush.bf16.msra.mxu0 %v628
    %907 = vmatpush.bf16.msra.mxu0 %v624
    %908 = vmatpush.bf16.msra.mxu0 %v620
    %909 = vmatpush.bf16.msra.mxu0 %v616
    %910 = vmatpush.bf16.msra.mxu0 %v612
    %911 = vmatmul.bf16.gmra.mxu0 %v884
    %v912 = vpop.f32.mrf.mxu0
    %v913 = vadd.f32 %v895, %v912
    %v914 = vpop.f32.mrf.mxu0
    %915 = vdwg.mxu0
    %916 = vmatpush.bf16.msra.mxu0 %v641
    %917 = vmatpush.bf16.msra.mxu0 %v637
    %918 = vmatpush.bf16.msra.mxu0 %v633
    %919 = vmatpush.bf16.msra.mxu0 %v629
    %920 = vmatpush.bf16.msra.mxu0 %v625
    %921 = vmatpush.bf16.msra.mxu0 %v621
    %922 = vmatpush.bf16.msra.mxu0 %v617
    %923 = vmatpush.bf16.msra.mxu0 %v613
    %924 = vmatmul.bf16.gmra.mxu0 %v884
    %v925 = vpop.f32.mrf.mxu0
    %v926 = vadd.f32 %v896, %v925
    %v927 = vpop.f32.mrf.mxu0
    %928 = vdwg.mxu0
    %929 = vmatpush.bf16.msra.mxu0 %v642
    %930 = vmatpush.bf16.msra.mxu0 %v638
    %931 = vmatpush.bf16.msra.mxu0 %v634
    %932 = vmatpush.bf16.msra.mxu0 %v630
    %933 = vmatpush.bf16.msra.mxu0 %v626
    %934 = vmatpush.bf16.msra.mxu0 %v622
    %935 = vmatpush.bf16.msra.mxu0 %v618
    %936 = vmatpush.bf16.msra.mxu0 %v614
    %937 = vmatmul.bf16.gmra.mxu0 %v884
    %v938 = vpop.f32.mrf.mxu0
    %v939 = vadd.f32 %v897, %v938
    %v940 = vpop.f32.mrf.mxu0
    %941 = vdwg.mxu0
    %942 = vmatpush.bf16.msra.mxu0 %v643
    %943 = vmatpush.bf16.msra.mxu0 %v639
    %944 = vmatpush.bf16.msra.mxu0 %v635
    %945 = vmatpush.bf16.msra.mxu0 %v631
    %946 = vmatpush.bf16.msra.mxu0 %v627
    %947 = vmatpush.bf16.msra.mxu0 %v623
    %948 = vmatpush.bf16.msra.mxu0 %v619
    %949 = vmatpush.bf16.msra.mxu0 %v615
    %950 = vmatmul.bf16.gmra.mxu0 %v884
    %v951 = vpop.f32.mrf.mxu0
    %v952 = vadd.f32 %v898, %v951
    %v953 = vpop.f32.mrf.mxu0
    %954 = vdwg.mxu0
    %v955 = vmul.f32 %v913, %v498
    %v956 = vmul.f32 %v926, %v499
    %v957 = vmul.f32 %v939, %v500
    %v958 = vmul.f32 %v952, %v501
    %v959 = vtanh.pop %v955
    %v960 = vtanh.pop %v956
    %v961 = vtanh.pop %v957
    %v962 = vtanh.pop %v958
    %v963 = vmul.f32 %v959, %v498
    %v964 = vmul.f32 %v960, %v499
    %v965 = vmul.f32 %v961, %v500
    %v966 = vmul.f32 %v962, %v501
    %v967 = vadd.f32 %v963, %v502
    %v968 = vadd.f32 %v964, %v503
    %v969 = vadd.f32 %v965, %v504
    %v970 = vadd.f32 %v966, %v505
    %972 = vrot.lane.b32.xlu0 %v969, 64
    %v973 = vpop.permute.xlu0 %972
    %v975 = vsel %vm748, %v967, %v973
    %977 = vrot.lane.b32.xlu0 %v967, 64
    %v978 = vpop.permute.xlu0 %977
    %v980 = vsel %vm748, %v978, %v969
    %982 = vrot.lane.b32.xlu0 %v970, 64
    %v983 = vpop.permute.xlu0 %982
    %v985 = vsel %vm748, %v968, %v983
    %987 = vrot.lane.b32.xlu0 %v968, 64
    %v988 = vpop.permute.xlu0 %987
    %v990 = vsel %vm748, %v988, %v970
    %v991 = vmul.f32 %v980, %v880
    %v992 = vmul.f32 %v975, %v985
    %v993 = vadd.f32 %v991, %v992
    %v994 = vtanh.pop %v993
    %v995 = vmul.f32 %v990, %v994
    %v996 = vadd.f32 %v883, %v995
    %v997 = vpack.c.bf16 %v995, %v995
    %v998 = vld [vmem:[#allocation2] sm:$0xc0]
    %v999 = vld [vmem:[#allocation2 + $0x8] sm:$0xc0]
    %v1000 = vld [vmem:[#allocation2 + $0x30] sm:$0x3]
    %v1001 = vld [vmem:[#allocation2 + $0x38] sm:$0x3]
    %v1004 = vrot.slane %v1000, 2
    %v1005 = vrot.slane %v1001, 2
    %v1008 = vrot.slane %v998, 6
    %v1009 = vrot.slane %v999, 6
    %v1010 = vrot.slane %v1004, 6
    %v1011 = vrot.slane %v1005, 6
    %1016 = vmatpush.bf16.msra.mxu0 %v640
    %1017 = vmatpush.bf16.msra.mxu0 %v636
    %1018 = vmatpush.bf16.msra.mxu0 %v632
    %1019 = vmatpush.bf16.msra.mxu0 %v628
    %1020 = vmatpush.bf16.msra.mxu0 %v624
    %1021 = vmatpush.bf16.msra.mxu0 %v620
    %1022 = vmatpush.bf16.msra.mxu0 %v616
    %1023 = vmatpush.bf16.msra.mxu0 %v612
    %1024 = vmatmul.bf16.gmra.mxu0 %v997
    %v1025 = vpop.f32.mrf.mxu0
    %v1026 = vadd.f32 %v1008, %v1025
    %v1027 = vpop.f32.mrf.mxu0
    %1028 = vdwg.mxu0
    %1029 = vmatpush.bf16.msra.mxu0 %v641
    %1030 = vmatpush.bf16.msra.mxu0 %v637
    %1031 = vmatpush.bf16.msra.mxu0 %v633
    %1032 = vmatpush.bf16.msra.mxu0 %v629
    %1033 = vmatpush.bf16.msra.mxu0 %v625
    %1034 = vmatpush.bf16.msra.mxu0 %v621
    %1035 = vmatpush.bf16.msra.mxu0 %v617
    %1036 = vmatpush.bf16.msra.mxu0 %v613
    %1037 = vmatmul.bf16.gmra.mxu0 %v997
    %v1038 = vpop.f32.mrf.mxu0
    %v1039 = vadd.f32 %v1009, %v1038
    %v1040 = vpop.f32.mrf.mxu0
    %1041 = vdwg.mxu0
    %1042 = vmatpush.bf16.msra.mxu0 %v642
    %1043 = vmatpush.bf16.msra.mxu0 %v638
    %1044 = vmatpush.bf16.msra.mxu0 %v634
    %1045 = vmatpush.bf16.msra.mxu0 %v630
    %1046 = vmatpush.bf16.msra.mxu0 %v626
    %1047 = vmatpush.bf16.msra.mxu0 %v622
    %1048 = vmatpush.bf16.msra.mxu0 %v618
    %1049 = vmatpush.bf16.msra.mxu0 %v614
    %1050 = vmatmul.bf16.gmra.mxu0 %v997
    %v1051 = vpop.f32.mrf.mxu0
    %v1052 = vadd.f32 %v1010, %v1051
    %v1053 = vpop.f32.mrf.mxu0
    %1054 = vdwg.mxu0
    %1055 = vmatpush.bf16.msra.mxu0 %v643
    %1056 = vmatpush.bf16.msra.mxu0 %v639
    %1057 = vmatpush.bf16.msra.mxu0 %v635
    %1058 = vmatpush.bf16.msra.mxu0 %v631
    %1059 = vmatpush.bf16.msra.mxu0 %v627
    %1060 = vmatpush.bf16.msra.mxu0 %v623
    %1061 = vmatpush.bf16.msra.mxu0 %v619
    %1062 = vmatpush.bf16.msra.mxu0 %v615
    %1063 = vmatmul.bf16.gmra.mxu0 %v997
    %v1064 = vpop.f32.mrf.mxu0
    %v1065 = vadd.f32 %v1011, %v1064
    %v1066 = vpop.f32.mrf.mxu0
    %1067 = vdwg.mxu0
    %v1068 = vmul.f32 %v1026, %v498
    %v1069 = vmul.f32 %v1039, %v499
    %v1070 = vmul.f32 %v1052, %v500
    %v1071 = vmul.f32 %v1065, %v501
    %v1072 = vtanh.pop %v1068
    %v1073 = vtanh.pop %v1069
    %v1074 = vtanh.pop %v1070
    %v1075 = vtanh.pop %v1071
    %v1076 = vmul.f32 %v1072, %v498
    %v1077 = vmul.f32 %v1073, %v499
    %v1078 = vmul.f32 %v1074, %v500
    %v1079 = vmul.f32 %v1075, %v501
    %v1080 = vadd.f32 %v1076, %v502
    %v1081 = vadd.f32 %v1077, %v503
    %v1082 = vadd.f32 %v1078, %v504
    %v1083 = vadd.f32 %v1079, %v505
    %1085 = vrot.lane.b32.xlu0 %v1082, 64
    %v1086 = vpop.permute.xlu0 %1085
    %v1088 = vsel %vm748, %v1080, %v1086
    %1090 = vrot.lane.b32.xlu0 %v1080, 64
    %v1091 = vpop.permute.xlu0 %1090
    %v1093 = vsel %vm748, %v1091, %v1082
    %1095 = vrot.lane.b32.xlu0 %v1083, 64
    %v1096 = vpop.permute.xlu0 %1095
    %v1098 = vsel %vm748, %v1081, %v1096
    %1100 = vrot.lane.b32.xlu0 %v1081, 64
    %v1101 = vpop.permute.xlu0 %1100
    %v1103 = vsel %vm748, %v1101, %v1083
    %v1104 = vmul.f32 %v1093, %v993
    %v1105 = vmul.f32 %v1088, %v1098
    %v1106 = vadd.f32 %v1104, %v1105
    %v1107 = vtanh.pop %v1106
    %v1108 = vmul.f32 %v1103, %v1107
    %v1109 = vadd.f32 %v996, %v1108
    %v1110 = vpack.c.bf16 %v1108, %v1108
    %v1111 = vld [vmem:[#allocation2 + $0x20] sm:$0x3]
    %v1112 = vld [vmem:[#allocation2 + $0x28] sm:$0x3]
    %v1113 = vld [vmem:[#allocation2 + $0x10] sm:$0xc0]
    %v1114 = vld [vmem:[#allocation2 + $0x18] sm:$0xc0]
    %v1117 = vrot.slane %v1113, 6
    %v1118 = vrot.slane %v1114, 6
    %1121 = vmatpush.bf16.msra.mxu0 %v640
    %1122 = vmatpush.bf16.msra.mxu0 %v636
    %1123 = vmatpush.bf16.msra.mxu0 %v632
    %1124 = vmatpush.bf16.msra.mxu0 %v628
    %1125 = vmatpush.bf16.msra.mxu0 %v624
    %1126 = vmatpush.bf16.msra.mxu0 %v620
    %1127 = vmatpush.bf16.msra.mxu0 %v616
    %1128 = vmatpush.bf16.msra.mxu0 %v612
    %1129 = vmatmul.bf16.gmra.mxu0 %v1110
    %v1130 = vpop.f32.mrf.mxu0
    %v1131 = vadd.f32 %v1111, %v1130
    %v1132 = vpop.f32.mrf.mxu0
    %1133 = vdwg.mxu0
    %1134 = vmatpush.bf16.msra.mxu0 %v641
    %1135 = vmatpush.bf16.msra.mxu0 %v637
    %1136 = vmatpush.bf16.msra.mxu0 %v633
    %1137 = vmatpush.bf16.msra.mxu0 %v629
    %1138 = vmatpush.bf16.msra.mxu0 %v625
    %1139 = vmatpush.bf16.msra.mxu0 %v621
    %1140 = vmatpush.bf16.msra.mxu0 %v617
    %1141 = vmatpush.bf16.msra.mxu0 %v613
    %1142 = vmatmul.bf16.gmra.mxu0 %v1110
    %v1143 = vpop.f32.mrf.mxu0
    %v1144 = vadd.f32 %v1112, %v1143
    %v1145 = vpop.f32.mrf.mxu0
    %1146 = vdwg.mxu0
    %1147 = vmatpush.bf16.msra.mxu0 %v642
    %1148 = vmatpush.bf16.msra.mxu0 %v638
    %1149 = vmatpush.bf16.msra.mxu0 %v634
    %1150 = vmatpush.bf16.msra.mxu0 %v630
    %1151 = vmatpush.bf16.msra.mxu0 %v626
    %1152 = vmatpush.bf16.msra.mxu0 %v622
    %1153 = vmatpush.bf16.msra.mxu0 %v618
    %1154 = vmatpush.bf16.msra.mxu0 %v614
    %1155 = vmatmul.bf16.gmra.mxu0 %v1110
    %v1156 = vpop.f32.mrf.mxu0
    %v1157 = vadd.f32 %v1117, %v1156
    %v1158 = vpop.f32.mrf.mxu0
    %1159 = vdwg.mxu0
    %1160 = vmatpush.bf16.msra.mxu0 %v643
    %1161 = vmatpush.bf16.msra.mxu0 %v639
    %1162 = vmatpush.bf16.msra.mxu0 %v635
    %1163 = vmatpush.bf16.msra.mxu0 %v631
    %1164 = vmatpush.bf16.msra.mxu0 %v627
    %1165 = vmatpush.bf16.msra.mxu0 %v623
    %1166 = vmatpush.bf16.msra.mxu0 %v619
    %1167 = vmatpush.bf16.msra.mxu0 %v615
    %1168 = vmatmul.bf16.gmra.mxu0 %v1110
    %v1169 = vpop.f32.mrf.mxu0
    %v1170 = vadd.f32 %v1118, %v1169
    %v1171 = vpop.f32.mrf.mxu0
    %1172 = vdwg.mxu0
    %v1173 = vmul.f32 %v1131, %v498
    %v1174 = vmul.f32 %v1144, %v499
    %v1175 = vmul.f32 %v1157, %v500
    %v1176 = vmul.f32 %v1170, %v501
    %v1177 = vtanh.pop %v1173
    %v1178 = vtanh.pop %v1174
    %v1179 = vtanh.pop %v1175
    %v1180 = vtanh.pop %v1176
    %v1181 = vmul.f32 %v1177, %v498
    %v1182 = vmul.f32 %v1178, %v499
    %v1183 = vmul.f32 %v1179, %v500
    %v1184 = vmul.f32 %v1180, %v501
    %v1185 = vadd.f32 %v1181, %v502
    %v1186 = vadd.f32 %v1182, %v503
    %v1187 = vadd.f32 %v1183, %v504
    %v1188 = vadd.f32 %v1184, %v505
    %1190 = vrot.lane.b32.xlu0 %v1187, 64
    %v1191 = vpop.permute.xlu0 %1190
    %v1193 = vsel %vm748, %v1185, %v1191
    %1195 = vrot.lane.b32.xlu0 %v1185, 64
    %v1196 = vpop.permute.xlu0 %1195
    %v1198 = vsel %vm748, %v1196, %v1187
    %1200 = vrot.lane.b32.xlu0 %v1188, 64
    %v1201 = vpop.permute.xlu0 %1200
    %v1203 = vsel %vm748, %v1186, %v1201
    %1205 = vrot.lane.b32.xlu0 %v1186, 64
    %v1206 = vpop.permute.xlu0 %1205
    %v1208 = vsel %vm748, %v1206, %v1188
    %v1209 = vmul.f32 %v1198, %v1106
    %v1210 = vmul.f32 %v1193, %v1203
    %v1211 = vadd.f32 %v1209, %v1210
    %v1212 = vtanh.pop %v1211
    %v1213 = vmul.f32 %v1208, %v1212
    %v1214 = vadd.f32 %v1109, %v1213
    %v1215 = vpack.c.bf16 %v1213, %v1213
    %v1216 = vld [vmem:[#allocation2 + $0x20] sm:$0xc]
    %v1217 = vld [vmem:[#allocation2 + $0x28] sm:$0xc]
    %v1218 = vld [vmem:[#allocation2 + $0x10] sm:$0x30]
    %v1219 = vld [vmem:[#allocation2 + $0x18] sm:$0x30]
    %v1222 = vrot.slane %v1218, 2
    %v1223 = vrot.slane %v1219, 2
    %v1226 = vrot.slane %v1216, 2
    %v1227 = vrot.slane %v1217, 2
    %v1228 = vrot.slane %v1222, 2
    %v1229 = vrot.slane %v1223, 2
    %1234 = vmatpush.bf16.msra.mxu0 %v640
    %1235 = vmatpush.bf16.msra.mxu0 %v636
    %1236 = vmatpush.bf16.msra.mxu0 %v632
    %1237 = vmatpush.bf16.msra.mxu0 %v628
    %1238 = vmatpush.bf16.msra.mxu0 %v624
    %1239 = vmatpush.bf16.msra.mxu0 %v620
    %1240 = vmatpush.bf16.msra.mxu0 %v616
    %1241 = vmatpush.bf16.msra.mxu0 %v612
    %1242 = vmatmul.bf16.gmra.mxu0 %v1215
    %v1243 = vpop.f32.mrf.mxu0
    %v1244 = vadd.f32 %v1226, %v1243
    %v1245 = vpop.f32.mrf.mxu0
    %1246 = vdwg.mxu0
    %1247 = vmatpush.bf16.msra.mxu0 %v641
    %1248 = vmatpush.bf16.msra.mxu0 %v637
    %1249 = vmatpush.bf16.msra.mxu0 %v633
    %1250 = vmatpush.bf16.msra.mxu0 %v629
    %1251 = vmatpush.bf16.msra.mxu0 %v625
    %1252 = vmatpush.bf16.msra.mxu0 %v621
    %1253 = vmatpush.bf16.msra.mxu0 %v617
    %1254 = vmatpush.bf16.msra.mxu0 %v613
    %1255 = vmatmul.bf16.gmra.mxu0 %v1215
    %v1256 = vpop.f32.mrf.mxu0
    %v1257 = vadd.f32 %v1227, %v1256
    %v1258 = vpop.f32.mrf.mxu0
    %1259 = vdwg.mxu0
    %1260 = vmatpush.bf16.msra.mxu0 %v642
    %1261 = vmatpush.bf16.msra.mxu0 %v638
    %1262 = vmatpush.bf16.msra.mxu0 %v634
    %1263 = vmatpush.bf16.msra.mxu0 %v630
    %1264 = vmatpush.bf16.msra.mxu0 %v626
    %1265 = vmatpush.bf16.msra.mxu0 %v622
    %1266 = vmatpush.bf16.msra.mxu0 %v618
    %1267 = vmatpush.bf16.msra.mxu0 %v614
    %1268 = vmatmul.bf16.gmra.mxu0 %v1215
    %v1269 = vpop.f32.mrf.mxu0
    %v1270 = vadd.f32 %v1228, %v1269
    %v1271 = vpop.f32.mrf.mxu0
    %1272 = vdwg.mxu0
    %1273 = vmatpush.bf16.msra.mxu0 %v643
    %1274 = vmatpush.bf16.msra.mxu0 %v639
    %1275 = vmatpush.bf16.msra.mxu0 %v635
    %1276 = vmatpush.bf16.msra.mxu0 %v631
    %1277 = vmatpush.bf16.msra.mxu0 %v627
    %1278 = vmatpush.bf16.msra.mxu0 %v623
    %1279 = vmatpush.bf16.msra.mxu0 %v619
    %1280 = vmatpush.bf16.msra.mxu0 %v615
    %1281 = vmatmul.bf16.gmra.mxu0 %v1215
    %v1282 = vpop.f32.mrf.mxu0
    %v1283 = vadd.f32 %v1229, %v1282
    %v1284 = vpop.f32.mrf.mxu0
    %1285 = vdwg.mxu0
    %v1286 = vmul.f32 %v1244, %v498
    %v1287 = vmul.f32 %v1257, %v499
    %v1288 = vmul.f32 %v1270, %v500
    %v1289 = vmul.f32 %v1283, %v501
    %v1290 = vtanh.pop %v1286
    %v1291 = vtanh.pop %v1287
    %v1292 = vtanh.pop %v1288
    %v1293 = vtanh.pop %v1289
    %v1294 = vmul.f32 %v1290, %v498
    %v1295 = vmul.f32 %v1291, %v499
    %v1296 = vmul.f32 %v1292, %v500
    %v1297 = vmul.f32 %v1293, %v501
    %v1298 = vadd.f32 %v1294, %v502
    %v1299 = vadd.f32 %v1295, %v503
    %v1300 = vadd.f32 %v1296, %v504
    %v1301 = vadd.f32 %v1297, %v505
    %1303 = vrot.lane.b32.xlu0 %v1300, 64
    %v1304 = vpop.permute.xlu0 %1303
    %v1306 = vsel %vm748, %v1298, %v1304
    %1308 = vrot.lane.b32.xlu0 %v1298, 64
    %v1309 = vpop.permute.xlu0 %1308
    %v1311 = vsel %vm748, %v1309, %v1300
    %1313 = vrot.lane.b32.xlu0 %v1301, 64
    %v1314 = vpop.permute.xlu0 %1313
    %v1316 = vsel %vm748, %v1299, %v1314
    %1318 = vrot.lane.b32.xlu0 %v1299, 64
    %v1319 = vpop.permute.xlu0 %1318
    %v1321 = vsel %vm748, %v1319, %v1301
    %v1322 = vmul.f32 %v1311, %v1211
    %v1323 = vmul.f32 %v1306, %v1316
    %v1324 = vadd.f32 %v1322, %v1323
    %v1325 = vtanh.pop %v1324
    %v1326 = vmul.f32 %v1321, %v1325
    %v1327 = vadd.f32 %v1214, %v1326
    %v1328 = vpack.c.bf16 %v1326, %v1326
    %v1329 = vld [vmem:[#allocation2 + $0x20] sm:$0x30]
    %v1330 = vld [vmem:[#allocation2 + $0x28] sm:$0x30]
    %v1331 = vld [vmem:[#allocation2 + $0x10] sm:$0xc]
    %v1332 = vld [vmem:[#allocation2 + $0x18] sm:$0xc]
    %v1335 = vrot.slane %v1331, 6
    %v1336 = vrot.slane %v1332, 6
    %v1339 = vrot.slane %v1329, 4
    %v1340 = vrot.slane %v1330, 4
    %v1341 = vrot.slane %v1335, 4
    %v1342 = vrot.slane %v1336, 4
    %1347 = vmatpush.bf16.msra.mxu0 %v640
    %1348 = vmatpush.bf16.msra.mxu0 %v636
    %1349 = vmatpush.bf16.msra.mxu0 %v632
    %1350 = vmatpush.bf16.msra.mxu0 %v628
    %1351 = vmatpush.bf16.msra.mxu0 %v624
    %1352 = vmatpush.bf16.msra.mxu0 %v620
    %1353 = vmatpush.bf16.msra.mxu0 %v616
    %1354 = vmatpush.bf16.msra.mxu0 %v612
    %1355 = vmatmul.bf16.gmra.mxu0 %v1328
    %v1356 = vpop.f32.mrf.mxu0
    %v1357 = vadd.f32 %v1339, %v1356
    %v1358 = vpop.f32.mrf.mxu0
    %1359 = vdwg.mxu0
    %1360 = vmatpush.bf16.msra.mxu0 %v641
    %1361 = vmatpush.bf16.msra.mxu0 %v637
    %1362 = vmatpush.bf16.msra.mxu0 %v633
    %1363 = vmatpush.bf16.msra.mxu0 %v629
    %1364 = vmatpush.bf16.msra.mxu0 %v625
    %1365 = vmatpush.bf16.msra.mxu0 %v621
    %1366 = vmatpush.bf16.msra.mxu0 %v617
    %1367 = vmatpush.bf16.msra.mxu0 %v613
    %1368 = vmatmul.bf16.gmra.mxu0 %v1328
    %v1369 = vpop.f32.mrf.mxu0
    %v1370 = vadd.f32 %v1340, %v1369
    %v1371 = vpop.f32.mrf.mxu0
    %1372 = vdwg.mxu0
    %1373 = vmatpush.bf16.msra.mxu0 %v642
    %1374 = vmatpush.bf16.msra.mxu0 %v638
    %1375 = vmatpush.bf16.msra.mxu0 %v634
    %1376 = vmatpush.bf16.msra.mxu0 %v630
    %1377 = vmatpush.bf16.msra.mxu0 %v626
    %1378 = vmatpush.bf16.msra.mxu0 %v622
    %1379 = vmatpush.bf16.msra.mxu0 %v618
    %1380 = vmatpush.bf16.msra.mxu0 %v614
    %1381 = vmatmul.bf16.gmra.mxu0 %v1328
    %v1382 = vpop.f32.mrf.mxu0
    %v1383 = vadd.f32 %v1341, %v1382
    %v1384 = vpop.f32.mrf.mxu0
    %1385 = vdwg.mxu0
    %1386 = vmatpush.bf16.msra.mxu0 %v643
    %1387 = vmatpush.bf16.msra.mxu0 %v639
    %1388 = vmatpush.bf16.msra.mxu0 %v635
    %1389 = vmatpush.bf16.msra.mxu0 %v631
    %1390 = vmatpush.bf16.msra.mxu0 %v627
    %1391 = vmatpush.bf16.msra.mxu0 %v623
    %1392 = vmatpush.bf16.msra.mxu0 %v619
    %1393 = vmatpush.bf16.msra.mxu0 %v615
    %1394 = vmatmul.bf16.gmra.mxu0 %v1328
    %v1395 = vpop.f32.mrf.mxu0
    %v1396 = vadd.f32 %v1342, %v1395
    %v1397 = vpop.f32.mrf.mxu0
    %1398 = vdwg.mxu0
    %v1399 = vmul.f32 %v1357, %v498
    %v1400 = vmul.f32 %v1370, %v499
    %v1401 = vmul.f32 %v1383, %v500
    %v1402 = vmul.f32 %v1396, %v501
    %v1403 = vtanh.pop %v1399
    %v1404 = vtanh.pop %v1400
    %v1405 = vtanh.pop %v1401
    %v1406 = vtanh.pop %v1402
    %v1407 = vmul.f32 %v1403, %v498
    %v1408 = vmul.f32 %v1404, %v499
    %v1409 = vmul.f32 %v1405, %v500
    %v1410 = vmul.f32 %v1406, %v501
    %v1411 = vadd.f32 %v1407, %v502
    %v1412 = vadd.f32 %v1408, %v503
    %v1413 = vadd.f32 %v1409, %v504
    %v1414 = vadd.f32 %v1410, %v505
    %1416 = vrot.lane.b32.xlu0 %v1413, 64
    %v1417 = vpop.permute.xlu0 %1416
    %v1419 = vsel %vm748, %v1411, %v1417
    %1421 = vrot.lane.b32.xlu0 %v1411, 64
    %v1422 = vpop.permute.xlu0 %1421
    %v1424 = vsel %vm748, %v1422, %v1413
    %1426 = vrot.lane.b32.xlu0 %v1414, 64
    %v1427 = vpop.permute.xlu0 %1426
    %v1429 = vsel %vm748, %v1412, %v1427
    %1431 = vrot.lane.b32.xlu0 %v1412, 64
    %v1432 = vpop.permute.xlu0 %1431
    %v1434 = vsel %vm748, %v1432, %v1414
    %v1435 = vmul.f32 %v1424, %v1324
    %v1436 = vmul.f32 %v1419, %v1429
    %v1437 = vadd.f32 %v1435, %v1436
    %v1438 = vtanh.pop %v1437
    %v1439 = vmul.f32 %v1434, %v1438
    %v1440 = vadd.f32 %v1327, %v1439
    %v1441 = vpack.c.bf16 %v1439, %v1439
    %v1442 = vld [vmem:[#allocation2 + $0x20] sm:$0xc0]
    %v1443 = vld [vmem:[#allocation2 + $0x28] sm:$0xc0]
    %v1444 = vld [vmem:[#allocation2 + $0x10] sm:$0x3]
    %v1445 = vld [vmem:[#allocation2 + $0x18] sm:$0x3]
    %v1448 = vrot.slane %v1444, 2
    %v1449 = vrot.slane %v1445, 2
    %v1452 = vrot.slane %v1442, 6
    %v1453 = vrot.slane %v1443, 6
    %v1454 = vrot.slane %v1448, 6
    %v1455 = vrot.slane %v1449, 6
    %1460 = vmatpush.bf16.msra.mxu0 %v640
    %1461 = vmatpush.bf16.msra.mxu0 %v636
    %1462 = vmatpush.bf16.msra.mxu0 %v632
    %1463 = vmatpush.bf16.msra.mxu0 %v628
    %1464 = vmatpush.bf16.msra.mxu0 %v624
    %1465 = vmatpush.bf16.msra.mxu0 %v620
    %1466 = vmatpush.bf16.msra.mxu0 %v616
    %1467 = vmatpush.bf16.msra.mxu0 %v612
    %1468 = vmatmul.bf16.gmra.mxu0 %v1441
    %v1469 = vpop.f32.mrf.mxu0
    %v1470 = vadd.f32 %v1452, %v1469
    %v1471 = vpop.f32.mrf.mxu0
    %1472 = vdwg.mxu0
    %1473 = vmatpush.bf16.msra.mxu0 %v641
    %1474 = vmatpush.bf16.msra.mxu0 %v637
    %1475 = vmatpush.bf16.msra.mxu0 %v633
    %1476 = vmatpush.bf16.msra.mxu0 %v629
    %1477 = vmatpush.bf16.msra.mxu0 %v625
    %1478 = vmatpush.bf16.msra.mxu0 %v621
    %1479 = vmatpush.bf16.msra.mxu0 %v617
    %1480 = vmatpush.bf16.msra.mxu0 %v613
    %1481 = vmatmul.bf16.gmra.mxu0 %v1441
    %v1482 = vpop.f32.mrf.mxu0
    %v1483 = vadd.f32 %v1453, %v1482
    %v1484 = vpop.f32.mrf.mxu0
    %1485 = vdwg.mxu0
    %1486 = vmatpush.bf16.msra.mxu0 %v642
    %1487 = vmatpush.bf16.msra.mxu0 %v638
    %1488 = vmatpush.bf16.msra.mxu0 %v634
    %1489 = vmatpush.bf16.msra.mxu0 %v630
    %1490 = vmatpush.bf16.msra.mxu0 %v626
    %1491 = vmatpush.bf16.msra.mxu0 %v622
    %1492 = vmatpush.bf16.msra.mxu0 %v618
    %1493 = vmatpush.bf16.msra.mxu0 %v614
    %1494 = vmatmul.bf16.gmra.mxu0 %v1441
    %v1495 = vpop.f32.mrf.mxu0
    %v1496 = vadd.f32 %v1454, %v1495
    %v1497 = vpop.f32.mrf.mxu0
    %1498 = vdwg.mxu0
    %1499 = vmatpush.bf16.msra.mxu0 %v643
    %1500 = vmatpush.bf16.msra.mxu0 %v639
    %1501 = vmatpush.bf16.msra.mxu0 %v635
    %1502 = vmatpush.bf16.msra.mxu0 %v631
    %1503 = vmatpush.bf16.msra.mxu0 %v627
    %1504 = vmatpush.bf16.msra.mxu0 %v623
    %1505 = vmatpush.bf16.msra.mxu0 %v619
    %1506 = vmatpush.bf16.msra.mxu0 %v615
    %1507 = vmatmul.bf16.gmra.mxu0 %v1441
    %v1508 = vpop.f32.mrf.mxu0
    %v1509 = vadd.f32 %v1455, %v1508
    %v1510 = vpop.f32.mrf.mxu0
    %1511 = vdwg.mxu0
    %v1512 = vmul.f32 %v1470, %v498
    %v1513 = vmul.f32 %v1483, %v499
    %v1514 = vmul.f32 %v1496, %v500
    %v1515 = vmul.f32 %v1509, %v501
    %v1516 = vtanh.pop %v1512
    %v1517 = vtanh.pop %v1513
    %v1518 = vtanh.pop %v1514
    %v1519 = vtanh.pop %v1515
    %v1520 = vmul.f32 %v1516, %v498
    %v1521 = vmul.f32 %v1517, %v499
    %v1522 = vmul.f32 %v1518, %v500
    %v1523 = vmul.f32 %v1519, %v501
    %v1524 = vadd.f32 %v1520, %v502
    %v1525 = vadd.f32 %v1521, %v503
    %v1526 = vadd.f32 %v1522, %v504
    %v1527 = vadd.f32 %v1523, %v505
    %1529 = vrot.lane.b32.xlu0 %v1526, 64
    %v1530 = vpop.permute.xlu0 %1529
    %v1532 = vsel %vm748, %v1524, %v1530
    %1534 = vrot.lane.b32.xlu0 %v1524, 64
    %v1535 = vpop.permute.xlu0 %1534
    %v1537 = vsel %vm748, %v1535, %v1526
    %1539 = vrot.lane.b32.xlu0 %v1527, 64
    %v1540 = vpop.permute.xlu0 %1539
    %v1542 = vsel %vm748, %v1525, %v1540
    %1544 = vrot.lane.b32.xlu0 %v1525, 64
    %v1545 = vpop.permute.xlu0 %1544
    %v1547 = vsel %vm748, %v1545, %v1527
    %v1548 = vmul.f32 %v1537, %v1437
    %v1549 = vmul.f32 %v1532, %v1542
    %v1550 = vadd.f32 %v1548, %v1549
    %v1551 = vtanh.pop %v1550
    %v1552 = vmul.f32 %v1547, %v1551
    %v1553 = vadd.f32 %v1440, %v1552
    %v1554 = vmul.f32 %v1553, 0.125
    %vm1555 = vcmask 1041408
    %v1556 = vsel %vm1555, %v1554, 0.0
    %1557 = vadd.xlane.f32.xlu0 %v1556
    %v1558 = vpop.xlane.xlu0 %1557
    %v1559 = vrcp.pop 128.0
    %v1560 = vmul.f32 128.0, %v1559
    %v1561 = vsub.f32 1.0, %v1560
    %v1562 = vmul.f32 %v1559, %v1561
    %v1563 = vadd.f32 %v1559, %v1562
    %vm1564 = vweird.f32 %v1559
    %v1565 = vsel %vm1564, %v1559, %v1563
    %v1566 = vmul.f32 %v1558, %v1565
    %v1567 = vsub.f32 %v1554, %v1566
    %v1568 = vmul.f32 %v1567, %v1567
    %v1569 = vsel %vm1555, %v1568, 0.0
    %1570 = vadd.xlane.f32.xlu0 %v1569
    %v1571 = vpop.xlane.xlu0 %1570
    %v1572 = vmul.f32 %v1571, %v1565
    %v1573 = vadd.f32 %v1572, 1e-05
    %v1574 = vrsqrt.pop %v1573
    %v1575 = vmul.f32 %v1574, %v1573
    %v1576 = vmul.f32 %v1575, %v1574
    %v1577 = vmul.f32 0.5, %v1576
    %v1578 = vsub.f32 1.5, %v1577
    %v1579 = vmul.f32 %v1574, %v1578
    %vm1580 = vweird.f32 %v1573
    %vm1581 = vweird.f32 %v1574
    %vm1582 = vmor %vm1580, %vm1581
    %v1583 = vsel %vm1582, %v1574, %v1579
    %v1584 = vmul.f32 %v1567, %v1583
    %v1585 = vld [vmem:[#allocation9] sm:$0x1]
    %v1587 = vperm.slane %v1585, 0
    %v1589 = vmul.f32 %v1584, %v1587
    %v1590 = vld [vmem:[#allocation11] sm:$0x1]
    %v1592 = vperm.slane %v1590, 0
    %v1594 = vadd.f32 %v1589, %v1592
    %v1595 = vld [vmem:[#allocation12] sm:$0xff]
    %v1596 = vld [vmem:[#allocation12 + $0x8] sm:$0xff]
    %v1597 = vld [vmem:[#allocation12 + $0x10] sm:$0xff]
    %v1598 = vld [vmem:[#allocation12 + $0x18] sm:$0xff]
    %v1599 = vld [vmem:[#allocation12 + $0x20] sm:$0xff]
    %v1600 = vld [vmem:[#allocation12 + $0x28] sm:$0xff]
    %v1601 = vld [vmem:[#allocation12 + $0x30] sm:$0xff]
    %v1602 = vld [vmem:[#allocation12 + $0x38] sm:$0xff]
    %v1603 = vld [vmem:[#allocation12 + $0x40] sm:$0xff]
    %v1604 = vld [vmem:[#allocation12 + $0x48] sm:$0xff]
    %v1605 = vld [vmem:[#allocation12 + $0x50] sm:$0xff]
    %v1606 = vld [vmem:[#allocation12 + $0x58] sm:$0xff]
    %v1607 = vld [vmem:[#allocation12 + $0x60] sm:$0xff]
    %v1608 = vld [vmem:[#allocation12 + $0x68] sm:$0xff]
    %v1609 = vld [vmem:[#allocation12 + $0x70] sm:$0xff]
    %v1610 = vld [vmem:[#allocation12 + $0x78] sm:$0xff]
    %v1611 = vld [vmem:[#allocation14] sm:$0x1]
    %v1613 = vperm.slane %v1611, 0
    %1615 = vmatpush.msra.mxu0 %v1610
    %1616 = vmatpush.msra.mxu0 %v1609
    %1617 = vmatpush.msra.mxu0 %v1608
    %1618 = vmatpush.msra.mxu0 %v1607
    %1619 = vmatpush.msra.mxu0 %v1606
    %1620 = vmatpush.msra.mxu0 %v1605
    %1621 = vmatpush.msra.mxu0 %v1604
    %1622 = vmatpush.msra.mxu0 %v1603
    %1623 = vmatpush.msra.mxu0 %v1602
    %1624 = vmatpush.msra.mxu0 %v1601
    %1625 = vmatpush.msra.mxu0 %v1600
    %1626 = vmatpush.msra.mxu0 %v1599
    %1627 = vmatpush.msra.mxu0 %v1598
    %1628 = vmatpush.msra.mxu0 %v1597
    %1629 = vmatpush.msra.mxu0 %v1596
    %1630 = vmatpush.msra.mxu0 %v1595
    %1631 = vmatmul.f32.gmra.mxu0 %v1594
    %v1632 = vpop.f32.mrf.mxu0
    %v1633 = vadd.f32 %v1613, %v1632
    %1634 = vdwg.mxu0
    %1635 = vst [vmem:[#allocation15] sm:$0x3] %v1633
    // Predicated region
    $region62: #{forward.3} parent=1 // pred_check
      _
    $region63: #{forward.3} parent=1 // pred_check_branch
      %1637 = sbr.rel (0) target = $region65
    $region64: #{forward.3} parent=1 // pred_region
      %1639 = vsyncadd [#allocation5], 0
      %s1641 = sshll.u32 [#allocation15], 4
      %s1642 = int_to_ptr.vmem [resolvable:$true] %s1641
      %s1643 = sshll.u32 %s8, 4
      %s1644 = int_to_ptr.hbm [resolvable:$true] %s1643
      %1646 = dma.vmem_to_hbm [thread:$0]  %s1642, 32, %s1644, [#allocation5]
    $region65: #{forward.3} parent=1 // pred_fallthru
      _
    // Predicated region
    $region66: #{forward.3} parent=1 // pred_check
      _
    $region67: #{forward.3} parent=1 // pred_check_branch
      %1648 = sbr.rel (0) target = $region69
    $region68: #{forward.3} parent=1 // pred_region
      %1650 = dma.done [#allocation5], 32
    $region69: #{forward.3} parent=1 // pred_fallthru
      _
    %1651 = vsyncpa [#allocation4], 1
    %1652 = vsyncpa [#allocation7], 1
    %1653 = vsyncpa [#allocation10], 1
    %1654 = vsyncpa [#allocation13], 1
    %1655 = vsyncpa [#allocation5], 1

// kernel: forward.2
$region0: #{forward.2}
  #allocation0 [shape = 'u32[]', space=smem, size = 0x4, offset = 0x4, fixed_abs, tag = 'smem constant byte address 0x4 - core index']
  #allocation1 [shape = 'u32[72,128]{1,0:T(1,128)}', space=vmem, size = 0x9000, scoped, tag = 'internal scratch']
  #allocation2 [shape = 'f32[16,512]{1,0:T(8,128)}', space=vmem, size = 0x8000, scoped, tag = 'scratch operand']
  %s0 = inlined_call_operand.vmem [shape: bf16[16,768], index: 0, kind: input, shape index: {}]
  %s1 = inlined_call_operand.hbm [shape: bf16[768,512], index: 1, kind: input, shape index: {}]
  %s2 = inlined_call_operand.hbm [shape: bf16[128,512], index: 2, kind: input, shape index: {}]
  %s3 = inlined_call_operand.hbm [shape: f32[1,512], index: 3, kind: input, shape index: {}]
  %s4 = inlined_call_operand.vmem [shape: f32[16,128], index: 4, kind: output, shape index: {}]
  %s5 = sld [smem:[#allocation0]]
  $region38: #{forward.2} parent=0
    _
  %s7 = ssub.s32 1, %s5
  %s8 = scalar_select 0, %s7, %s5
  $region1: #{forward.2} parent=0
    #allocation3 [shape = 'u8[786432]{0}', space=vmem, size = 0xc0000, scoped, tag = 'input window, operand 1, single buffered']
    #allocation4 [shape = 's32[1]{0}', space=sflag, size = 0x4, scoped, tag = 'scoped memory for forward.2']
    #allocation5 [shape = 'u8[131072]{0}', space=vmem, size = 0x20000, scoped, tag = 'input window, operand 2, single buffered']
    #allocation6 [shape = 's32[1]{0}', space=sflag, size = 0x4, scoped, tag = 'scoped memory for forward.2']
    #allocation7 [shape = 'u8[2048]{0}', space=vmem, size = 0x800, scoped, tag = 'input window, operand 3, single buffered']
    %9 = vsyncpa [#allocation4], 0
    %10 = vsyncpa [#allocation6], 0
    // Predicated region
    $region2: #{forward.2} parent=1 // pred_check
      _
    $region3: #{forward.2} parent=1 // pred_check_branch
      %12 = sbr.rel (0) target = $region5
    $region4: #{forward.2} parent=1 // pred_region
      _
    $region5: #{forward.2} parent=1 // pred_fallthru
      _
    // Predicated region
    $region6: #{forward.2} parent=1 // pred_check
      _
    $region7: #{forward.2} parent=1 // pred_check_branch
      %14 = sbr.rel (0) target = $region9
    $region8: #{forward.2} parent=1 // pred_region
      %16 = vsyncadd [#allocation4], 0
      %s17 = sshll.u32 %s1, 4
      %s18 = int_to_ptr.hbm [resolvable:$true] %s17
      %s19 = sshll.u32 [#allocation3], 4
      %s20 = int_to_ptr.vmem [resolvable:$true] %s19
      %25 = dma.hbm_to_vmem [thread:$0]  %s18, 24576, %s20, [#allocation4], 256, 256, 16
    $region9: #{forward.2} parent=1 // pred_fallthru
      _
    // Predicated region
    $region10: #{forward.2} parent=1 // pred_check
      _
    $region11: #{forward.2} parent=1 // pred_check_branch
      %27 = sbr.rel (0) target = $region13
    $region12: #{forward.2} parent=1 // pred_region
      %29 = vsyncadd [#allocation6], 0
      %s30 = sshll.u32 %s2, 4
      %s31 = int_to_ptr.hbm [resolvable:$true] %s30
      %s32 = sshll.u32 [#allocation5], 4
      %s33 = int_to_ptr.vmem [resolvable:$true] %s32
      %38 = dma.hbm_to_vmem [thread:$0]  %s31, 4096, %s33, [#allocation6], 256, 256, 16
    $region13: #{forward.2} parent=1 // pred_fallthru
      _
    // Predicated region
    $region14: #{forward.2} parent=1 // pred_check
      _
    $region15: #{forward.2} parent=1 // pred_check_branch
      %40 = sbr.rel (0) target = $region17
    $region16: #{forward.2} parent=1 // pred_region
      %42 = vsyncadd [#allocation6], 0
      %s44 = sshll.u32 %s3, 4
      %s45 = int_to_ptr.hbm [resolvable:$true] %s44
      %s46 = sshll.u32 [#allocation7], 4
      %s47 = int_to_ptr.vmem [resolvable:$true] %s46
      %49 = dma.hbm_to_vmem [thread:$0]  %s45, 64, %s47, [#allocation6]
    $region17: #{forward.2} parent=1 // pred_fallthru
      _
    // Predicated region
    $region18: #{forward.2} parent=1 // pred_check
      _
    $region19: #{forward.2} parent=1 // pred_check_branch
      %51 = sbr.rel (0) target = $region21
    $region20: #{forward.2} parent=1 // pred_region
      %53 = dma.done [#allocation4], 24576
    $region21: #{forward.2} parent=1 // pred_fallthru
      _
    // Predicated region
    $region22: #{forward.2} parent=1 // pred_check
      _
    $region23: #{forward.2} parent=1 // pred_check_branch
      %55 = sbr.rel (0) target = $region25
    $region24: #{forward.2} parent=1 // pred_region
      %57 = dma.done [#allocation6], 4096
    $region25: #{forward.2} parent=1 // pred_fallthru
      _
    // Predicated region
    $region26: #{forward.2} parent=1 // pred_check
      _
    $region27: #{forward.2} parent=1 // pred_check_branch
      %59 = sbr.rel (0) target = $region29
    $region28: #{forward.2} parent=1 // pred_region
      %61 = dma.done [#allocation6], 64
    $region29: #{forward.2} parent=1 // pred_fallthru
      _
    %v63 = vld [vmem:[%s0] sm:$0xff]
    %v64 = vld [vmem:[%s0 + $0x8] sm:$0xff]
    %v65 = vld [vmem:[%s0 + $0x10] sm:$0xff]
    %v66 = vld [vmem:[%s0 + $0x18] sm:$0xff]
    %v67 = vld [vmem:[%s0 + $0x20] sm:$0xff]
    %v68 = vld [vmem:[%s0 + $0x28] sm:$0xff]
    %v69 = vld [vmem:[#allocation3] sm:$0xff]
    %v70 = vld [vmem:[#allocation3 + $0x8] sm:$0xff]
    %v71 = vld [vmem:[#allocation3 + $0x10] sm:$0xff]
    %v72 = vld [vmem:[#allocation3 + $0x18] sm:$0xff]
    %v73 = vld [vmem:[#allocation3 + $0x20] sm:$0xff]
    %v74 = vld [vmem:[#allocation3 + $0x28] sm:$0xff]
    %v75 = vld [vmem:[#allocation3 + $0x30] sm:$0xff]
    %v76 = vld [vmem:[#allocation3 + $0x38] sm:$0xff]
    %v77 = vld [vmem:[#allocation3 + $0x40] sm:$0xff]
    %v78 = vld [vmem:[#allocation3 + $0x48] sm:$0xff]
    %v79 = vld [vmem:[#allocation3 + $0x50] sm:$0xff]
    %v80 = vld [vmem:[#allocation3 + $0x58] sm:$0xff]
    %v81 = vld [vmem:[#allocation3 + $0x60] sm:$0xff]
    %v82 = vld [vmem:[#allocation3 + $0x68] sm:$0xff]
    %v83 = vld [vmem:[#allocation3 + $0x70] sm:$0xff]
    %v84 = vld [vmem:[#allocation3 + $0x78] sm:$0xff]
    %v85 = vld [vmem:[#allocation3 + $0x80] sm:$0xff]
    %v86 = vld [vmem:[#allocation3 + $0x88] sm:$0xff]
    %v87 = vld [vmem:[#allocation3 + $0x90] sm:$0xff]
    %v88 = vld [vmem:[#allocation3 + $0x98] sm:$0xff]
    %v89 = vld [vmem:[#allocation3 + $0xa0] sm:$0xff]
    %v90 = vld [vmem:[#allocation3 + $0xa8] sm:$0xff]
    %v91 = vld [vmem:[#allocation3 + $0xb0] sm:$0xff]
    %v92 = vld [vmem:[#allocation3 + $0xb8] sm:$0xff]
    %v93 = vld [vmem:[#allocation3 + $0xc0] sm:$0xff]
    %v94 = vld [vmem:[#allocation3 + $0xc8] sm:$0xff]
    %v95 = vld [vmem:[#allocation3 + $0xd0] sm:$0xff]
    %v96 = vld [vmem:[#allocation3 + $0xd8] sm:$0xff]
    %v97 = vld [vmem:[#allocation3 + $0xe0] sm:$0xff]
    %v98 = vld [vmem:[#allocation3 + $0xe8] sm:$0xff]
    %v99 = vld [vmem:[#allocation3 + $0xf0] sm:$0xff]
    %v100 = vld [vmem:[#allocation3 + $0xf8] sm:$0xff]
    %v101 = vld [vmem:[#allocation3 + $0x100] sm:$0xff]
    %v102 = vld [vmem:[#allocation3 + $0x108] sm:$0xff]
    %v103 = vld [vmem:[#allocation3 + $0x110] sm:$0xff]
    %v104 = vld [vmem:[#allocation3 + $0x118] sm:$0xff]
    %v105 = vld [vmem:[#allocation3 + $0x120] sm:$0xff]
    %v106 = vld [vmem:[#allocation3 + $0x128] sm:$0xff]
    %v107 = vld [vmem:[#allocation3 + $0x130] sm:$0xff]
    %v108 = vld [vmem:[#allocation3 + $0x138] sm:$0xff]
    %v109 = vld [vmem:[#allocation3 + $0x140] sm:$0xff]
    %v110 = vld [vmem:[#allocation3 + $0x148] sm:$0xff]
    %v111 = vld [vmem:[#allocation3 + $0x150] sm:$0xff]
    %v112 = vld [vmem:[#allocation3 + $0x158] sm:$0xff]
    %v113 = vld [vmem:[#allocation3 + $0x160] sm:$0xff]
    %v114 = vld [vmem:[#allocation3 + $0x168] sm:$0xff]
    %v115 = vld [vmem:[#allocation3 + $0x170] sm:$0xff]
    %v116 = vld [vmem:[#allocation3 + $0x178] sm:$0xff]
    %v117 = vld [vmem:[#allocation3 + $0x180] sm:$0xff]
    %v118 = vld [vmem:[#allocation3 + $0x188] sm:$0xff]
    %v119 = vld [vmem:[#allocation3 + $0x190] sm:$0xff]
    %v120 = vld [vmem:[#allocation3 + $0x198] sm:$0xff]
    %v121 = vld [vmem:[#allocation3 + $0x1a0] sm:$0xff]
    %v122 = vld [vmem:[#allocation3 + $0x1a8] sm:$0xff]
    %v123 = vld [vmem:[#allocation3 + $0x1b0] sm:$0xff]
    %v124 = vld [vmem:[#allocation3 + $0x1b8] sm:$0xff]
    %v125 = vld [vmem:[#allocation3 + $0x1c0] sm:$0xff]
    %v126 = vld [vmem:[#allocation3 + $0x1c8] sm:$0xff]
    %v127 = vld [vmem:[#allocation3 + $0x1d0] sm:$0xff]
    %v128 = vld [vmem:[#allocation3 + $0x1d8] sm:$0xff]
    %v129 = vld [vmem:[#allocation3 + $0x1e0] sm:$0xff]
    %v130 = vld [vmem:[#allocation3 + $0x1e8] sm:$0xff]
    %v131 = vld [vmem:[#allocation3 + $0x1f0] sm:$0xff]
    %v132 = vld [vmem:[#allocation3 + $0x1f8] sm:$0xff]
    %v133 = vld [vmem:[#allocation3 + $0x200] sm:$0xff]
    %v134 = vld [vmem:[#allocation3 + $0x208] sm:$0xff]
    %v135 = vld [vmem:[#allocation3 + $0x210] sm:$0xff]
    %v136 = vld [vmem:[#allocation3 + $0x218] sm:$0xff]
    %v137 = vld [vmem:[#allocation3 + $0x220] sm:$0xff]
    %v138 = vld [vmem:[#allocation3 + $0x228] sm:$0xff]
    %v139 = vld [vmem:[#allocation3 + $0x230] sm:$0xff]
    %v140 = vld [vmem:[#allocation3 + $0x238] sm:$0xff]
    %v141 = vld [vmem:[#allocation3 + $0x240] sm:$0xff]
    %v142 = vld [vmem:[#allocation3 + $0x248] sm:$0xff]
    %v143 = vld [vmem:[#allocation3 + $0x250] sm:$0xff]
    %v144 = vld [vmem:[#allocation3 + $0x258] sm:$0xff]
    %v145 = vld [vmem:[#allocation3 + $0x260] sm:$0xff]
    %v146 = vld [vmem:[#allocation3 + $0x268] sm:$0xff]
    %v147 = vld [vmem:[#allocation3 + $0x270] sm:$0xff]
    %v148 = vld [vmem:[#allocation3 + $0x278] sm:$0xff]
    %v149 = vld [vmem:[#allocation3 + $0x280] sm:$0xff]
    %v150 = vld [vmem:[#allocation3 + $0x288] sm:$0xff]
    %v151 = vld [vmem:[#allocation3 + $0x290] sm:$0xff]
    %v152 = vld [vmem:[#allocation3 + $0x298] sm:$0xff]
    %v153 = vld [vmem:[#allocation3 + $0x2a0] sm:$0xff]
    %v154 = vld [vmem:[#allocation3 + $0x2a8] sm:$0xff]
    %v155 = vld [vmem:[#allocation3 + $0x2b0] sm:$0xff]
    %v156 = vld [vmem:[#allocation3 + $0x2b8] sm:$0xff]
    %v157 = vld [vmem:[#allocation3 + $0x2c0] sm:$0xff]
    %v158 = vld [vmem:[#allocation3 + $0x2c8] sm:$0xff]
    %v159 = vld [vmem:[#allocation3 + $0x2d0] sm:$0xff]
    %v160 = vld [vmem:[#allocation3 + $0x2d8] sm:$0xff]
    %v161 = vld [vmem:[#allocation3 + $0x2e0] sm:$0xff]
    %v162 = vld [vmem:[#allocation3 + $0x2e8] sm:$0xff]
    %v163 = vld [vmem:[#allocation3 + $0x2f0] sm:$0xff]
    %v164 = vld [vmem:[#allocation3 + $0x2f8] sm:$0xff]
    %v165 = vld [vmem:[#allocation3 + $0x300] sm:$0xff]
    %v166 = vld [vmem:[#allocation3 + $0x308] sm:$0xff]
    %v167 = vld [vmem:[#allocation3 + $0x310] sm:$0xff]
    %v168 = vld [vmem:[#allocation3 + $0x318] sm:$0xff]
    %v169 = vld [vmem:[#allocation3 + $0x320] sm:$0xff]
    %v170 = vld [vmem:[#allocation3 + $0x328] sm:$0xff]
    %v171 = vld [vmem:[#allocation3 + $0x330] sm:$0xff]
    %v172 = vld [vmem:[#allocation3 + $0x338] sm:$0xff]
    %v173 = vld [vmem:[#allocation3 + $0x340] sm:$0xff]
    %v174 = vld [vmem:[#allocation3 + $0x348] sm:$0xff]
    %v175 = vld [vmem:[#allocation3 + $0x350] sm:$0xff]
    %v176 = vld [vmem:[#allocation3 + $0x358] sm:$0xff]
    %v177 = vld [vmem:[#allocation3 + $0x360] sm:$0xff]
    %v178 = vld [vmem:[#allocation3 + $0x368] sm:$0xff]
    %v179 = vld [vmem:[#allocation3 + $0x370] sm:$0xff]
    %v180 = vld [vmem:[#allocation3 + $0x378] sm:$0xff]
    %v181 = vld [vmem:[#allocation3 + $0x380] sm:$0xff]
    %v182 = vld [vmem:[#allocation3 + $0x388] sm:$0xff]
    %v183 = vld [vmem:[#allocation3 + $0x390] sm:$0xff]
    %v184 = vld [vmem:[#allocation3 + $0x398] sm:$0xff]
    %v185 = vld [vmem:[#allocation3 + $0x3a0] sm:$0xff]
    %v186 = vld [vmem:[#allocation3 + $0x3a8] sm:$0xff]
    %v187 = vld [vmem:[#allocation3 + $0x3b0] sm:$0xff]
    %v188 = vld [vmem:[#allocation3 + $0x3b8] sm:$0xff]
    %v189 = vld [vmem:[#allocation3 + $0x3c0] sm:$0xff]
    %v190 = vld [vmem:[#allocation3 + $0x3c8] sm:$0xff]
    %v191 = vld [vmem:[#allocation3 + $0x3d0] sm:$0xff]
    %v192 = vld [vmem:[#allocation3 + $0x3d8] sm:$0xff]
    %v193 = vld [vmem:[#allocation3 + $0x3e0] sm:$0xff]
    %v194 = vld [vmem:[#allocation3 + $0x3e8] sm:$0xff]
    %v195 = vld [vmem:[#allocation3 + $0x3f0] sm:$0xff]
    %v196 = vld [vmem:[#allocation3 + $0x3f8] sm:$0xff]
    %v197 = vld [vmem:[#allocation3 + $0x400] sm:$0xff]
    %v198 = vld [vmem:[#allocation3 + $0x408] sm:$0xff]
    %v199 = vld [vmem:[#allocation3 + $0x410] sm:$0xff]
    %v200 = vld [vmem:[#allocation3 + $0x418] sm:$0xff]
    %v201 = vld [vmem:[#allocation3 + $0x420] sm:$0xff]
    %v202 = vld [vmem:[#allocation3 + $0x428] sm:$0xff]
    %v203 = vld [vmem:[#allocation3 + $0x430] sm:$0xff]
    %v204 = vld [vmem:[#allocation3 + $0x438] sm:$0xff]
    %v205 = vld [vmem:[#allocation3 + $0x440] sm:$0xff]
    %v206 = vld [vmem:[#allocation3 + $0x448] sm:$0xff]
    %v207 = vld [vmem:[#allocation3 + $0x450] sm:$0xff]
    %v208 = vld [vmem:[#allocation3 + $0x458] sm:$0xff]
    %v209 = vld [vmem:[#allocation3 + $0x460] sm:$0xff]
    %v210 = vld [vmem:[#allocation3 + $0x468] sm:$0xff]
    %v211 = vld [vmem:[#allocation3 + $0x470] sm:$0xff]
    %v212 = vld [vmem:[#allocation3 + $0x478] sm:$0xff]
    %v213 = vld [vmem:[#allocation3 + $0x480] sm:$0xff]
    %v214 = vld [vmem:[#allocation3 + $0x488] sm:$0xff]
    %v215 = vld [vmem:[#allocation3 + $0x490] sm:$0xff]
    %v216 = vld [vmem:[#allocation3 + $0x498] sm:$0xff]
    %v217 = vld [vmem:[#allocation3 + $0x4a0] sm:$0xff]
    %v218 = vld [vmem:[#allocation3 + $0x4a8] sm:$0xff]
    %v219 = vld [vmem:[#allocation3 + $0x4b0] sm:$0xff]
    %v220 = vld [vmem:[#allocation3 + $0x4b8] sm:$0xff]
    %v221 = vld [vmem:[#allocation3 + $0x4c0] sm:$0xff]
    %v222 = vld [vmem:[#allocation3 + $0x4c8] sm:$0xff]
    %v223 = vld [vmem:[#allocation3 + $0x4d0] sm:$0xff]
    %v224 = vld [vmem:[#allocation3 + $0x4d8] sm:$0xff]
    %v225 = vld [vmem:[#allocation3 + $0x4e0] sm:$0xff]
    %v226 = vld [vmem:[#allocation3 + $0x4e8] sm:$0xff]
    %v227 = vld [vmem:[#allocation3 + $0x4f0] sm:$0xff]
    %v228 = vld [vmem:[#allocation3 + $0x4f8] sm:$0xff]
    %v229 = vld [vmem:[#allocation3 + $0x500] sm:$0xff]
    %v230 = vld [vmem:[#allocation3 + $0x508] sm:$0xff]
    %v231 = vld [vmem:[#allocation3 + $0x510] sm:$0xff]
    %v232 = vld [vmem:[#allocation3 + $0x518] sm:$0xff]
    %v233 = vld [vmem:[#allocation3 + $0x520] sm:$0xff]
    %v234 = vld [vmem:[#allocation3 + $0x528] sm:$0xff]
    %v235 = vld [vmem:[#allocation3 + $0x530] sm:$0xff]
    %v236 = vld [vmem:[#allocation3 + $0x538] sm:$0xff]
    %v237 = vld [vmem:[#allocation3 + $0x540] sm:$0xff]
    %v238 = vld [vmem:[#allocation3 + $0x548] sm:$0xff]
    %v239 = vld [vmem:[#allocation3 + $0x550] sm:$0xff]
    %v240 = vld [vmem:[#allocation3 + $0x558] sm:$0xff]
    %v241 = vld [vmem:[#allocation3 + $0x560] sm:$0xff]
    %v242 = vld [vmem:[#allocation3 + $0x568] sm:$0xff]
    %v243 = vld [vmem:[#allocation3 + $0x570] sm:$0xff]
    %v244 = vld [vmem:[#allocation3 + $0x578] sm:$0xff]
    %v245 = vld [vmem:[#allocation3 + $0x580] sm:$0xff]
    %v246 = vld [vmem:[#allocation3 + $0x588] sm:$0xff]
    %v247 = vld [vmem:[#allocation3 + $0x590] sm:$0xff]
    %v248 = vld [vmem:[#allocation3 + $0x598] sm:$0xff]
    %v249 = vld [vmem:[#allocation3 + $0x5a0] sm:$0xff]
    %v250 = vld [vmem:[#allocation3 + $0x5a8] sm:$0xff]
    %v251 = vld [vmem:[#allocation3 + $0x5b0] sm:$0xff]
    %v252 = vld [vmem:[#allocation3 + $0x5b8] sm:$0xff]
    %v253 = vld [vmem:[#allocation3 + $0x5c0] sm:$0xff]
    %v254 = vld [vmem:[#allocation3 + $0x5c8] sm:$0xff]
    %v255 = vld [vmem:[#allocation3 + $0x5d0] sm:$0xff]
    %v256 = vld [vmem:[#allocation3 + $0x5d8] sm:$0xff]
    %v257 = vld [vmem:[#allocation3 + $0x5e0] sm:$0xff]
    %v258 = vld [vmem:[#allocation3 + $0x5e8] sm:$0xff]
    %v259 = vld [vmem:[#allocation3 + $0x5f0] sm:$0xff]
    %v260 = vld [vmem:[#allocation3 + $0x5f8] sm:$0xff]
    %v261 = vld [vmem:[#allocation7] sm:$0xf]
    %v263 = vperm.slane %v261, 0
    %v264 = vperm.slane %v261, 1
    %v265 = vperm.slane %v261, 2
    %v266 = vperm.slane %v261, 3
    %v277 = vunpack.c.l.b16 %v63
    %v278 = vunpack.c.h.b16 %v63
    %v279 = vunpack.c.l.b16 %v64
    %v280 = vunpack.c.h.b16 %v64
    %v281 = vunpack.c.l.b16 %v65
    %v282 = vunpack.c.h.b16 %v65
    %v283 = vunpack.c.l.b16 %v66
    %v284 = vunpack.c.h.b16 %v66
    %v285 = vunpack.c.l.b16 %v67
    %v286 = vunpack.c.h.b16 %v67
    %v287 = vunpack.c.l.b16 %v68
    %v288 = vunpack.c.h.b16 %v68
    %v289 = vpack.c.b16 %v283, %v277
    %v290 = vpack.c.b16 %v284, %v278
    %v291 = vpack.c.b16 %v285, %v279
    %v292 = vpack.c.b16 %v286, %v280
    %v293 = vpack.c.b16 %v287, %v281
    %v294 = vpack.c.b16 %v288, %v282
    %v493 = vunpack.c.l.b16 %v69
    %v494 = vunpack.c.h.b16 %v69
    %v495 = vunpack.c.l.b16 %v70
    %v496 = vunpack.c.h.b16 %v70
    %v497 = vunpack.c.l.b16 %v71
    %v498 = vunpack.c.h.b16 %v71
    %v499 = vunpack.c.l.b16 %v72
    %v500 = vunpack.c.h.b16 %v72
    %v501 = vunpack.c.l.b16 %v73
    %v502 = vunpack.c.h.b16 %v73
    %v503 = vunpack.c.l.b16 %v74
    %v504 = vunpack.c.h.b16 %v74
    %v505 = vunpack.c.l.b16 %v75
    %v506 = vunpack.c.h.b16 %v75
    %v507 = vunpack.c.l.b16 %v76
    %v508 = vunpack.c.h.b16 %v76
    %v509 = vunpack.c.l.b16 %v77
    %v510 = vunpack.c.h.b16 %v77
    %v511 = vunpack.c.l.b16 %v78
    %v512 = vunpack.c.h.b16 %v78
    %v513 = vunpack.c.l.b16 %v79
    %v514 = vunpack.c.h.b16 %v79
    %v515 = vunpack.c.l.b16 %v80
    %v516 = vunpack.c.h.b16 %v80
    %v517 = vunpack.c.l.b16 %v81
    %v518 = vunpack.c.h.b16 %v81
    %v519 = vunpack.c.l.b16 %v82
    %v520 = vunpack.c.h.b16 %v82
    %v521 = vunpack.c.l.b16 %v83
    %v522 = vunpack.c.h.b16 %v83
    %v523 = vunpack.c.l.b16 %v84
    %v524 = vunpack.c.h.b16 %v84
    %v525 = vunpack.c.l.b16 %v85
    %v526 = vunpack.c.h.b16 %v85
    %v527 = vunpack.c.l.b16 %v86
    %v528 = vunpack.c.h.b16 %v86
    %v529 = vunpack.c.l.b16 %v87
    %v530 = vunpack.c.h.b16 %v87
    %v531 = vunpack.c.l.b16 %v88
    %v532 = vunpack.c.h.b16 %v88
    %v533 = vunpack.c.l.b16 %v89
    %v534 = vunpack.c.h.b16 %v89
    %v535 = vunpack.c.l.b16 %v90
    %v536 = vunpack.c.h.b16 %v90
    %v537 = vunpack.c.l.b16 %v91
    %v538 = vunpack.c.h.b16 %v91
    %v539 = vunpack.c.l.b16 %v92
    %v540 = vunpack.c.h.b16 %v92
    %v541 = vunpack.c.l.b16 %v93
    %v542 = vunpack.c.h.b16 %v93
    %v543 = vunpack.c.l.b16 %v94
    %v544 = vunpack.c.h.b16 %v94
    %v545 = vunpack.c.l.b16 %v95
    %v546 = vunpack.c.h.b16 %v95
    %v547 = vunpack.c.l.b16 %v96
    %v548 = vunpack.c.h.b16 %v96
    %v549 = vunpack.c.l.b16 %v97
    %v550 = vunpack.c.h.b16 %v97
    %v551 = vunpack.c.l.b16 %v98
    %v552 = vunpack.c.h.b16 %v98
    %v553 = vunpack.c.l.b16 %v99
    %v554 = vunpack.c.h.b16 %v99
    %v555 = vunpack.c.l.b16 %v100
    %v556 = vunpack.c.h.b16 %v100
    %v557 = vunpack.c.l.b16 %v101
    %v558 = vunpack.c.h.b16 %v101
    %v559 = vunpack.c.l.b16 %v102
    %v560 = vunpack.c.h.b16 %v102
    %v561 = vunpack.c.l.b16 %v103
    %v562 = vunpack.c.h.b16 %v103
    %v563 = vunpack.c.l.b16 %v104
    %v564 = vunpack.c.h.b16 %v104
    %v565 = vunpack.c.l.b16 %v105
    %v566 = vunpack.c.h.b16 %v105
    %v567 = vunpack.c.l.b16 %v106
    %v568 = vunpack.c.h.b16 %v106
    %v569 = vunpack.c.l.b16 %v107
    %v570 = vunpack.c.h.b16 %v107
    %v571 = vunpack.c.l.b16 %v108
    %v572 = vunpack.c.h.b16 %v108
    %v573 = vunpack.c.l.b16 %v109
    %v574 = vunpack.c.h.b16 %v109
    %v575 = vunpack.c.l.b16 %v110
    %v576 = vunpack.c.h.b16 %v110
    %v577 = vunpack.c.l.b16 %v111
    %v578 = vunpack.c.h.b16 %v111
    %v579 = vunpack.c.l.b16 %v112
    %v580 = vunpack.c.h.b16 %v112
    %v581 = vunpack.c.l.b16 %v113
    %v582 = vunpack.c.h.b16 %v113
    %v583 = vunpack.c.l.b16 %v114
    %v584 = vunpack.c.h.b16 %v114
    %v585 = vunpack.c.l.b16 %v115
    %v586 = vunpack.c.h.b16 %v115
    %v587 = vunpack.c.l.b16 %v116
    %v588 = vunpack.c.h.b16 %v116
    %v589 = vunpack.c.l.b16 %v117
    %v590 = vunpack.c.h.b16 %v117
    %v591 = vunpack.c.l.b16 %v118
    %v592 = vunpack.c.h.b16 %v118
    %v593 = vunpack.c.l.b16 %v119
    %v594 = vunpack.c.h.b16 %v119
    %v595 = vunpack.c.l.b16 %v120
    %v596 = vunpack.c.h.b16 %v120
    %v597 = vunpack.c.l.b16 %v121
    %v598 = vunpack.c.h.b16 %v121
    %v599 = vunpack.c.l.b16 %v122
    %v600 = vunpack.c.h.b16 %v122
    %v601 = vunpack.c.l.b16 %v123
    %v602 = vunpack.c.h.b16 %v123
    %v603 = vunpack.c.l.b16 %v124
    %v604 = vunpack.c.h.b16 %v124
    %v605 = vunpack.c.l.b16 %v125
    %v606 = vunpack.c.h.b16 %v125
    %v607 = vunpack.c.l.b16 %v126
    %v608 = vunpack.c.h.b16 %v126
    %v609 = vunpack.c.l.b16 %v127
    %v610 = vunpack.c.h.b16 %v127
    %v611 = vunpack.c.l.b16 %v128
    %v612 = vunpack.c.h.b16 %v128
    %v613 = vunpack.c.l.b16 %v129
    %v614 = vunpack.c.h.b16 %v129
    %v615 = vunpack.c.l.b16 %v130
    %v616 = vunpack.c.h.b16 %v130
    %v617 = vunpack.c.l.b16 %v131
    %v618 = vunpack.c.h.b16 %v131
    %v619 = vunpack.c.l.b16 %v132
    %v620 = vunpack.c.h.b16 %v132
    %v621 = vunpack.c.l.b16 %v133
    %v622 = vunpack.c.h.b16 %v133
    %v623 = vunpack.c.l.b16 %v134
    %v624 = vunpack.c.h.b16 %v134
    %v625 = vunpack.c.l.b16 %v135
    %v626 = vunpack.c.h.b16 %v135
    %v627 = vunpack.c.l.b16 %v136
    %v628 = vunpack.c.h.b16 %v136
    %v629 = vunpack.c.l.b16 %v137
    %v630 = vunpack.c.h.b16 %v137
    %v631 = vunpack.c.l.b16 %v138
    %v632 = vunpack.c.h.b16 %v138
    %v633 = vunpack.c.l.b16 %v139
    %v634 = vunpack.c.h.b16 %v139
    %v635 = vunpack.c.l.b16 %v140
    %v636 = vunpack.c.h.b16 %v140
    %v637 = vunpack.c.l.b16 %v141
    %v638 = vunpack.c.h.b16 %v141
    %v639 = vunpack.c.l.b16 %v142
    %v640 = vunpack.c.h.b16 %v142
    %v641 = vunpack.c.l.b16 %v143
    %v642 = vunpack.c.h.b16 %v143
    %v643 = vunpack.c.l.b16 %v144
    %v644 = vunpack.c.h.b16 %v144
    %v645 = vunpack.c.l.b16 %v145
    %v646 = vunpack.c.h.b16 %v145
    %v647 = vunpack.c.l.b16 %v146
    %v648 = vunpack.c.h.b16 %v146
    %v649 = vunpack.c.l.b16 %v147
    %v650 = vunpack.c.h.b16 %v147
    %v651 = vunpack.c.l.b16 %v148
    %v652 = vunpack.c.h.b16 %v148
    %v653 = vunpack.c.l.b16 %v149
    %v654 = vunpack.c.h.b16 %v149
    %v655 = vunpack.c.l.b16 %v150
    %v656 = vunpack.c.h.b16 %v150
    %v657 = vunpack.c.l.b16 %v151
    %v658 = vunpack.c.h.b16 %v151
    %v659 = vunpack.c.l.b16 %v152
    %v660 = vunpack.c.h.b16 %v152
    %v661 = vunpack.c.l.b16 %v153
    %v662 = vunpack.c.h.b16 %v153
    %v663 = vunpack.c.l.b16 %v154
    %v664 = vunpack.c.h.b16 %v154
    %v665 = vunpack.c.l.b16 %v155
    %v666 = vunpack.c.h.b16 %v155
    %v667 = vunpack.c.l.b16 %v156
    %v668 = vunpack.c.h.b16 %v156
    %v669 = vunpack.c.l.b16 %v157
    %v670 = vunpack.c.h.b16 %v157
    %v671 = vunpack.c.l.b16 %v158
    %v672 = vunpack.c.h.b16 %v158
    %v673 = vunpack.c.l.b16 %v159
    %v674 = vunpack.c.h.b16 %v159
    %v675 = vunpack.c.l.b16 %v160
    %v676 = vunpack.c.h.b16 %v160
    %v677 = vunpack.c.l.b16 %v161
    %v678 = vunpack.c.h.b16 %v161
    %v679 = vunpack.c.l.b16 %v162
    %v680 = vunpack.c.h.b16 %v162
    %v681 = vunpack.c.l.b16 %v163
    %v682 = vunpack.c.h.b16 %v163
    %v683 = vunpack.c.l.b16 %v164
    %v684 = vunpack.c.h.b16 %v164
    %v685 = vunpack.c.l.b16 %v165
    %v686 = vunpack.c.h.b16 %v165
    %v687 = vunpack.c.l.b16 %v166
    %v688 = vunpack.c.h.b16 %v166
    %v689 = vunpack.c.l.b16 %v167
    %v690 = vunpack.c.h.b16 %v167
    %v691 = vunpack.c.l.b16 %v168
    %v692 = vunpack.c.h.b16 %v168
    %v693 = vunpack.c.l.b16 %v169
    %v694 = vunpack.c.h.b16 %v169
    %v695 = vunpack.c.l.b16 %v170
    %v696 = vunpack.c.h.b16 %v170
    %v697 = vunpack.c.l.b16 %v171
    %v698 = vunpack.c.h.b16 %v171
    %v699 = vunpack.c.l.b16 %v172
    %v700 = vunpack.c.h.b16 %v172
    %v701 = vunpack.c.l.b16 %v173
    %v702 = vunpack.c.h.b16 %v173
    %v703 = vunpack.c.l.b16 %v174
    %v704 = vunpack.c.h.b16 %v174
    %v705 = vunpack.c.l.b16 %v175
    %v706 = vunpack.c.h.b16 %v175
    %v707 = vunpack.c.l.b16 %v176
    %v708 = vunpack.c.h.b16 %v176
    %v709 = vunpack.c.l.b16 %v177
    %v710 = vunpack.c.h.b16 %v177
    %v711 = vunpack.c.l.b16 %v178
    %v712 = vunpack.c.h.b16 %v178
    %v713 = vunpack.c.l.b16 %v179
    %v714 = vunpack.c.h.b16 %v179
    %v715 = vunpack.c.l.b16 %v180
    %v716 = vunpack.c.h.b16 %v180
    %v717 = vunpack.c.l.b16 %v181
    %v718 = vunpack.c.h.b16 %v181
    %v719 = vunpack.c.l.b16 %v182
    %v720 = vunpack.c.h.b16 %v182
    %v721 = vunpack.c.l.b16 %v183
    %v722 = vunpack.c.h.b16 %v183
    %v723 = vunpack.c.l.b16 %v184
    %v724 = vunpack.c.h.b16 %v184
    %v725 = vunpack.c.l.b16 %v185
    %v726 = vunpack.c.h.b16 %v185
    %v727 = vunpack.c.l.b16 %v186
    %v728 = vunpack.c.h.b16 %v186
    %v729 = vunpack.c.l.b16 %v187
    %v730 = vunpack.c.h.b16 %v187
    %v731 = vunpack.c.l.b16 %v188
    %v732 = vunpack.c.h.b16 %v188
    %v733 = vunpack.c.l.b16 %v189
    %v734 = vunpack.c.h.b16 %v189
    %v735 = vunpack.c.l.b16 %v190
    %v736 = vunpack.c.h.b16 %v190
    %v737 = vunpack.c.l.b16 %v191
    %v738 = vunpack.c.h.b16 %v191
    %v739 = vunpack.c.l.b16 %v192
    %v740 = vunpack.c.h.b16 %v192
    %v741 = vunpack.c.l.b16 %v193
    %v742 = vunpack.c.h.b16 %v193
    %v743 = vunpack.c.l.b16 %v194
    %v744 = vunpack.c.h.b16 %v194
    %v745 = vunpack.c.l.b16 %v195
    %v746 = vunpack.c.h.b16 %v195
    %v747 = vunpack.c.l.b16 %v196
    %v748 = vunpack.c.h.b16 %v196
    %v749 = vunpack.c.l.b16 %v197
    %v750 = vunpack.c.h.b16 %v197
    %v751 = vunpack.c.l.b16 %v198
    %v752 = vunpack.c.h.b16 %v198
    %v753 = vunpack.c.l.b16 %v199
    %v754 = vunpack.c.h.b16 %v199
    %v755 = vunpack.c.l.b16 %v200
    %v756 = vunpack.c.h.b16 %v200
    %v757 = vunpack.c.l.b16 %v201
    %v758 = vunpack.c.h.b16 %v201
    %v759 = vunpack.c.l.b16 %v202
    %v760 = vunpack.c.h.b16 %v202
    %v761 = vunpack.c.l.b16 %v203
    %v762 = vunpack.c.h.b16 %v203
    %v763 = vunpack.c.l.b16 %v204
    %v764 = vunpack.c.h.b16 %v204
    %v765 = vunpack.c.l.b16 %v205
    %v766 = vunpack.c.h.b16 %v205
    %v767 = vunpack.c.l.b16 %v206
    %v768 = vunpack.c.h.b16 %v206
    %v769 = vunpack.c.l.b16 %v207
    %v770 = vunpack.c.h.b16 %v207
    %v771 = vunpack.c.l.b16 %v208
    %v772 = vunpack.c.h.b16 %v208
    %v773 = vunpack.c.l.b16 %v209
    %v774 = vunpack.c.h.b16 %v209
    %v775 = vunpack.c.l.b16 %v210
    %v776 = vunpack.c.h.b16 %v210
    %v777 = vunpack.c.l.b16 %v211
    %v778 = vunpack.c.h.b16 %v211
    %v779 = vunpack.c.l.b16 %v212
    %v780 = vunpack.c.h.b16 %v212
    %v781 = vunpack.c.l.b16 %v213
    %v782 = vunpack.c.h.b16 %v213
    %v783 = vunpack.c.l.b16 %v214
    %v784 = vunpack.c.h.b16 %v214
    %v785 = vunpack.c.l.b16 %v215
    %v786 = vunpack.c.h.b16 %v215
    %v787 = vunpack.c.l.b16 %v216
    %v788 = vunpack.c.h.b16 %v216
    %v789 = vunpack.c.l.b16 %v217
    %v790 = vunpack.c.h.b16 %v217
    %v791 = vunpack.c.l.b16 %v218
    %v792 = vunpack.c.h.b16 %v218
    %v793 = vunpack.c.l.b16 %v219
    %v794 = vunpack.c.h.b16 %v219
    %v795 = vunpack.c.l.b16 %v220
    %v796 = vunpack.c.h.b16 %v220
    %v797 = vunpack.c.l.b16 %v221
    %v798 = vunpack.c.h.b16 %v221
    %v799 = vunpack.c.l.b16 %v222
    %v800 = vunpack.c.h.b16 %v222
    %v801 = vunpack.c.l.b16 %v223
    %v802 = vunpack.c.h.b16 %v223
    %v803 = vunpack.c.l.b16 %v224
    %v804 = vunpack.c.h.b16 %v224
    %v805 = vunpack.c.l.b16 %v225
    %v806 = vunpack.c.h.b16 %v225
    %v807 = vunpack.c.l.b16 %v226
    %v808 = vunpack.c.h.b16 %v226
    %v809 = vunpack.c.l.b16 %v227
    %v810 = vunpack.c.h.b16 %v227
    %v811 = vunpack.c.l.b16 %v228
    %v812 = vunpack.c.h.b16 %v228
    %v813 = vunpack.c.l.b16 %v229
    %v814 = vunpack.c.h.b16 %v229
    %v815 = vunpack.c.l.b16 %v230
    %v816 = vunpack.c.h.b16 %v230
    %v817 = vunpack.c.l.b16 %v231
    %v818 = vunpack.c.h.b16 %v231
    %v819 = vunpack.c.l.b16 %v232
    %v820 = vunpack.c.h.b16 %v232
    %v821 = vunpack.c.l.b16 %v233
    %v822 = vunpack.c.h.b16 %v233
    %v823 = vunpack.c.l.b16 %v234
    %v824 = vunpack.c.h.b16 %v234
    %v825 = vunpack.c.l.b16 %v235
    %v826 = vunpack.c.h.b16 %v235
    %v827 = vunpack.c.l.b16 %v236
    %v828 = vunpack.c.h.b16 %v236
    %v829 = vunpack.c.l.b16 %v237
    %v830 = vunpack.c.h.b16 %v237
    %v831 = vunpack.c.l.b16 %v238
    %v832 = vunpack.c.h.b16 %v238
    %v833 = vunpack.c.l.b16 %v239
    %v834 = vunpack.c.h.b16 %v239
    %v835 = vunpack.c.l.b16 %v240
    %v836 = vunpack.c.h.b16 %v240
    %v837 = vunpack.c.l.b16 %v241
    %v838 = vunpack.c.h.b16 %v241
    %v839 = vunpack.c.l.b16 %v242
    %v840 = vunpack.c.h.b16 %v242
    %v841 = vunpack.c.l.b16 %v243
    %v842 = vunpack.c.h.b16 %v243
    %v843 = vunpack.c.l.b16 %v244
    %v844 = vunpack.c.h.b16 %v244
    %v845 = vunpack.c.l.b16 %v245
    %v846 = vunpack.c.h.b16 %v245
    %v847 = vunpack.c.l.b16 %v246
    %v848 = vunpack.c.h.b16 %v246
    %v849 = vunpack.c.l.b16 %v247
    %v850 = vunpack.c.h.b16 %v247
    %v851 = vunpack.c.l.b16 %v248
    %v852 = vunpack.c.h.b16 %v248
    %v853 = vunpack.c.l.b16 %v249
    %v854 = vunpack.c.h.b16 %v249
    %v855 = vunpack.c.l.b16 %v250
    %v856 = vunpack.c.h.b16 %v250
    %v857 = vunpack.c.l.b16 %v251
    %v858 = vunpack.c.h.b16 %v251
    %v859 = vunpack.c.l.b16 %v252
    %v860 = vunpack.c.h.b16 %v252
    %v861 = vunpack.c.l.b16 %v253
    %v862 = vunpack.c.h.b16 %v253
    %v863 = vunpack.c.l.b16 %v254
    %v864 = vunpack.c.h.b16 %v254
    %v865 = vunpack.c.l.b16 %v255
    %v866 = vunpack.c.h.b16 %v255
    %v867 = vunpack.c.l.b16 %v256
    %v868 = vunpack.c.h.b16 %v256
    %v869 = vunpack.c.l.b16 %v257
    %v870 = vunpack.c.h.b16 %v257
    %v871 = vunpack.c.l.b16 %v258
    %v872 = vunpack.c.h.b16 %v258
    %v873 = vunpack.c.l.b16 %v259
    %v874 = vunpack.c.h.b16 %v259
    %v875 = vunpack.c.l.b16 %v260
    %v876 = vunpack.c.h.b16 %v260
    %v877 = vpack.c.b16 %v497, %v493
    %v878 = vpack.c.b16 %v498, %v494
    %v879 = vpack.c.b16 %v499, %v495
    %v880 = vpack.c.b16 %v500, %v496
    %v881 = vpack.c.b16 %v505, %v501
    %v882 = vpack.c.b16 %v506, %v502
    %v883 = vpack.c.b16 %v507, %v503
    %v884 = vpack.c.b16 %v508, %v504
    %v885 = vpack.c.b16 %v513, %v509
    %v886 = vpack.c.b16 %v514, %v510
    %v887 = vpack.c.b16 %v515, %v511
    %v888 = vpack.c.b16 %v516, %v512
    %v889 = vpack.c.b16 %v521, %v517
    %v890 = vpack.c.b16 %v522, %v518
    %v891 = vpack.c.b16 %v523, %v519
    %v892 = vpack.c.b16 %v524, %v520
    %v893 = vpack.c.b16 %v529, %v525
    %v894 = vpack.c.b16 %v530, %v526
    %v895 = vpack.c.b16 %v531, %v527
    %v896 = vpack.c.b16 %v532, %v528
    %v897 = vpack.c.b16 %v537, %v533
    %v898 = vpack.c.b16 %v538, %v534
    %v899 = vpack.c.b16 %v539, %v535
    %v900 = vpack.c.b16 %v540, %v536
    %v901 = vpack.c.b16 %v545, %v541
    %v902 = vpack.c.b16 %v546, %v542
    %v903 = vpack.c.b16 %v547, %v543
    %v904 = vpack.c.b16 %v548, %v544
    %v905 = vpack.c.b16 %v553, %v549
    %v906 = vpack.c.b16 %v554, %v550
    %v907 = vpack.c.b16 %v555, %v551
    %v908 = vpack.c.b16 %v556, %v552
    %v909 = vpack.c.b16 %v561, %v557
    %v910 = vpack.c.b16 %v562, %v558
    %v911 = vpack.c.b16 %v563, %v559
    %v912 = vpack.c.b16 %v564, %v560
    %v913 = vpack.c.b16 %v569, %v565
    %v914 = vpack.c.b16 %v570, %v566
    %v915 = vpack.c.b16 %v571, %v567
    %v916 = vpack.c.b16 %v572, %v568
    %v917 = vpack.c.b16 %v577, %v573
    %v918 = vpack.c.b16 %v578, %v574
    %v919 = vpack.c.b16 %v579, %v575
    %v920 = vpack.c.b16 %v580, %v576
    %v921 = vpack.c.b16 %v585, %v581
    %v922 = vpack.c.b16 %v586, %v582
    %v923 = vpack.c.b16 %v587, %v583
    %v924 = vpack.c.b16 %v588, %v584
    %v925 = vpack.c.b16 %v593, %v589
    %v926 = vpack.c.b16 %v594, %v590
    %v927 = vpack.c.b16 %v595, %v591
    %v928 = vpack.c.b16 %v596, %v592
    %v929 = vpack.c.b16 %v601, %v597
    %v930 = vpack.c.b16 %v602, %v598
    %v931 = vpack.c.b16 %v603, %v599
    %v932 = vpack.c.b16 %v604, %v600
    %v933 = vpack.c.b16 %v609, %v605
    %v934 = vpack.c.b16 %v610, %v606
    %v935 = vpack.c.b16 %v611, %v607
    %v936 = vpack.c.b16 %v612, %v608
    %v937 = vpack.c.b16 %v617, %v613
    %v938 = vpack.c.b16 %v618, %v614
    %v939 = vpack.c.b16 %v619, %v615
    %v940 = vpack.c.b16 %v620, %v616
    %v941 = vpack.c.b16 %v625, %v621
    %v942 = vpack.c.b16 %v626, %v622
    %v943 = vpack.c.b16 %v627, %v623
    %v944 = vpack.c.b16 %v628, %v624
    %v945 = vpack.c.b16 %v633, %v629
    %v946 = vpack.c.b16 %v634, %v630
    %v947 = vpack.c.b16 %v635, %v631
    %v948 = vpack.c.b16 %v636, %v632
    %v949 = vpack.c.b16 %v641, %v637
    %v950 = vpack.c.b16 %v642, %v638
    %v951 = vpack.c.b16 %v643, %v639
    %v952 = vpack.c.b16 %v644, %v640
    %v953 = vpack.c.b16 %v649, %v645
    %v954 = vpack.c.b16 %v650, %v646
    %v955 = vpack.c.b16 %v651, %v647
    %v956 = vpack.c.b16 %v652, %v648
    %v957 = vpack.c.b16 %v657, %v653
    %v958 = vpack.c.b16 %v658, %v654
    %v959 = vpack.c.b16 %v659, %v655
    %v960 = vpack.c.b16 %v660, %v656
    %v961 = vpack.c.b16 %v665, %v661
    %v962 = vpack.c.b16 %v666, %v662
    %v963 = vpack.c.b16 %v667, %v663
    %v964 = vpack.c.b16 %v668, %v664
    %v965 = vpack.c.b16 %v673, %v669
    %v966 = vpack.c.b16 %v674, %v670
    %v967 = vpack.c.b16 %v675, %v671
    %v968 = vpack.c.b16 %v676, %v672
    %v969 = vpack.c.b16 %v681, %v677
    %v970 = vpack.c.b16 %v682, %v678
    %v971 = vpack.c.b16 %v683, %v679
    %v972 = vpack.c.b16 %v684, %v680
    %v973 = vpack.c.b16 %v689, %v685
    %v974 = vpack.c.b16 %v690, %v686
    %v975 = vpack.c.b16 %v691, %v687
    %v976 = vpack.c.b16 %v692, %v688
    %v977 = vpack.c.b16 %v697, %v693
    %v978 = vpack.c.b16 %v698, %v694
    %v979 = vpack.c.b16 %v699, %v695
    %v980 = vpack.c.b16 %v700, %v696
    %v981 = vpack.c.b16 %v705, %v701
    %v982 = vpack.c.b16 %v706, %v702
    %v983 = vpack.c.b16 %v707, %v703
    %v984 = vpack.c.b16 %v708, %v704
    %v985 = vpack.c.b16 %v713, %v709
    %v986 = vpack.c.b16 %v714, %v710
    %v987 = vpack.c.b16 %v715, %v711
    %v988 = vpack.c.b16 %v716, %v712
    %v989 = vpack.c.b16 %v721, %v717
    %v990 = vpack.c.b16 %v722, %v718
    %v991 = vpack.c.b16 %v723, %v719
    %v992 = vpack.c.b16 %v724, %v720
    %v993 = vpack.c.b16 %v729, %v725
    %v994 = vpack.c.b16 %v730, %v726
    %v995 = vpack.c.b16 %v731, %v727
    %v996 = vpack.c.b16 %v732, %v728
    %v997 = vpack.c.b16 %v737, %v733
    %v998 = vpack.c.b16 %v738, %v734
    %v999 = vpack.c.b16 %v739, %v735
    %v1000 = vpack.c.b16 %v740, %v736
    %v1001 = vpack.c.b16 %v745, %v741
    %v1002 = vpack.c.b16 %v746, %v742
    %v1003 = vpack.c.b16 %v747, %v743
    %v1004 = vpack.c.b16 %v748, %v744
    %v1005 = vpack.c.b16 %v753, %v749
    %v1006 = vpack.c.b16 %v754, %v750
    %v1007 = vpack.c.b16 %v755, %v751
    %v1008 = vpack.c.b16 %v756, %v752
    %v1009 = vpack.c.b16 %v761, %v757
    %v1010 = vpack.c.b16 %v762, %v758
    %v1011 = vpack.c.b16 %v763, %v759
    %v1012 = vpack.c.b16 %v764, %v760
    %v1013 = vpack.c.b16 %v769, %v765
    %v1014 = vpack.c.b16 %v770, %v766
    %v1015 = vpack.c.b16 %v771, %v767
    %v1016 = vpack.c.b16 %v772, %v768
    %v1017 = vpack.c.b16 %v777, %v773
    %v1018 = vpack.c.b16 %v778, %v774
    %v1019 = vpack.c.b16 %v779, %v775
    %v1020 = vpack.c.b16 %v780, %v776
    %v1021 = vpack.c.b16 %v785, %v781
    %v1022 = vpack.c.b16 %v786, %v782
    %v1023 = vpack.c.b16 %v787, %v783
    %v1024 = vpack.c.b16 %v788, %v784
    %v1025 = vpack.c.b16 %v793, %v789
    %v1026 = vpack.c.b16 %v794, %v790
    %v1027 = vpack.c.b16 %v795, %v791
    %v1028 = vpack.c.b16 %v796, %v792
    %v1029 = vpack.c.b16 %v801, %v797
    %v1030 = vpack.c.b16 %v802, %v798
    %v1031 = vpack.c.b16 %v803, %v799
    %v1032 = vpack.c.b16 %v804, %v800
    %v1033 = vpack.c.b16 %v809, %v805
    %v1034 = vpack.c.b16 %v810, %v806
    %v1035 = vpack.c.b16 %v811, %v807
    %v1036 = vpack.c.b16 %v812, %v808
    %v1037 = vpack.c.b16 %v817, %v813
    %v1038 = vpack.c.b16 %v818, %v814
    %v1039 = vpack.c.b16 %v819, %v815
    %v1040 = vpack.c.b16 %v820, %v816
    %v1041 = vpack.c.b16 %v825, %v821
    %v1042 = vpack.c.b16 %v826, %v822
    %v1043 = vpack.c.b16 %v827, %v823
    %v1044 = vpack.c.b16 %v828, %v824
    %v1045 = vpack.c.b16 %v833, %v829
    %v1046 = vpack.c.b16 %v834, %v830
    %v1047 = vpack.c.b16 %v835, %v831
    %v1048 = vpack.c.b16 %v836, %v832
    %v1049 = vpack.c.b16 %v841, %v837
    %v1050 = vpack.c.b16 %v842, %v838
    %v1051 = vpack.c.b16 %v843, %v839
    %v1052 = vpack.c.b16 %v844, %v840
    %v1053 = vpack.c.b16 %v849, %v845
    %v1054 = vpack.c.b16 %v850, %v846
    %v1055 = vpack.c.b16 %v851, %v847
    %v1056 = vpack.c.b16 %v852, %v848
    %v1057 = vpack.c.b16 %v857, %v853
    %v1058 = vpack.c.b16 %v858, %v854
    %v1059 = vpack.c.b16 %v859, %v855
    %v1060 = vpack.c.b16 %v860, %v856
    %v1061 = vpack.c.b16 %v865, %v861
    %v1062 = vpack.c.b16 %v866, %v862
    %v1063 = vpack.c.b16 %v867, %v863
    %v1064 = vpack.c.b16 %v868, %v864
    %v1065 = vpack.c.b16 %v873, %v869
    %v1066 = vpack.c.b16 %v874, %v870
    %v1067 = vpack.c.b16 %v875, %v871
    %v1068 = vpack.c.b16 %v876, %v872
    %1261 = vmatpush.bf16.msra.mxu0 %v905
    %1262 = vmatpush.bf16.msra.mxu0 %v901
    %1263 = vmatpush.bf16.msra.mxu0 %v897
    %1264 = vmatpush.bf16.msra.mxu0 %v893
    %1265 = vmatpush.bf16.msra.mxu0 %v889
    %1266 = vmatpush.bf16.msra.mxu0 %v885
    %1267 = vmatpush.bf16.msra.mxu0 %v881
    %1268 = vmatpush.bf16.msra.mxu0 %v877
    %1269 = vmatmul.bf16.gmra.mxu0 %v289
    %v1270 = vpop.f32.mrf.mxu0
    %v1271 = vadd.f32 %v263, %v1270
    %v1272 = vpop.f32.mrf.mxu0
    %v1273 = vadd.f32 %v263, %v1272
    %1274 = vdwg.mxu0
    %1275 = vmatpush.bf16.msra.mxu0 %v937
    %1276 = vmatpush.bf16.msra.mxu0 %v933
    %1277 = vmatpush.bf16.msra.mxu0 %v929
    %1278 = vmatpush.bf16.msra.mxu0 %v925
    %1279 = vmatpush.bf16.msra.mxu0 %v921
    %1280 = vmatpush.bf16.msra.mxu0 %v917
    %1281 = vmatpush.bf16.msra.mxu0 %v913
    %1282 = vmatpush.bf16.msra.mxu0 %v909
    %1283 = vmatmul.bf16.gmra.mxu0 %v290
    %v1284 = vpop.f32.mrf.mxu0
    %v1285 = vadd.f32 %v1271, %v1284
    %v1286 = vpop.f32.mrf.mxu0
    %v1287 = vadd.f32 %v1273, %v1286
    %1288 = vdwg.mxu0
    %1289 = vmatpush.bf16.msra.mxu0 %v969
    %1290 = vmatpush.bf16.msra.mxu0 %v965
    %1291 = vmatpush.bf16.msra.mxu0 %v961
    %1292 = vmatpush.bf16.msra.mxu0 %v957
    %1293 = vmatpush.bf16.msra.mxu0 %v953
    %1294 = vmatpush.bf16.msra.mxu0 %v949
    %1295 = vmatpush.bf16.msra.mxu0 %v945
    %1296 = vmatpush.bf16.msra.mxu0 %v941
    %1297 = vmatmul.bf16.gmra.mxu0 %v291
    %v1298 = vpop.f32.mrf.mxu0
    %v1299 = vadd.f32 %v1285, %v1298
    %v1300 = vpop.f32.mrf.mxu0
    %v1301 = vadd.f32 %v1287, %v1300
    %1302 = vdwg.mxu0
    %1303 = vmatpush.bf16.msra.mxu0 %v1001
    %1304 = vmatpush.bf16.msra.mxu0 %v997
    %1305 = vmatpush.bf16.msra.mxu0 %v993
    %1306 = vmatpush.bf16.msra.mxu0 %v989
    %1307 = vmatpush.bf16.msra.mxu0 %v985
    %1308 = vmatpush.bf16.msra.mxu0 %v981
    %1309 = vmatpush.bf16.msra.mxu0 %v977
    %1310 = vmatpush.bf16.msra.mxu0 %v973
    %1311 = vmatmul.bf16.gmra.mxu0 %v292
    %v1312 = vpop.f32.mrf.mxu0
    %v1313 = vadd.f32 %v1299, %v1312
    %v1314 = vpop.f32.mrf.mxu0
    %v1315 = vadd.f32 %v1301, %v1314
    %1316 = vdwg.mxu0
    %1317 = vmatpush.bf16.msra.mxu0 %v1033
    %1318 = vmatpush.bf16.msra.mxu0 %v1029
    %1319 = vmatpush.bf16.msra.mxu0 %v1025
    %1320 = vmatpush.bf16.msra.mxu0 %v1021
    %1321 = vmatpush.bf16.msra.mxu0 %v1017
    %1322 = vmatpush.bf16.msra.mxu0 %v1013
    %1323 = vmatpush.bf16.msra.mxu0 %v1009
    %1324 = vmatpush.bf16.msra.mxu0 %v1005
    %1325 = vmatmul.bf16.gmra.mxu0 %v293
    %v1326 = vpop.f32.mrf.mxu0
    %v1327 = vadd.f32 %v1313, %v1326
    %v1328 = vpop.f32.mrf.mxu0
    %v1329 = vadd.f32 %v1315, %v1328
    %1330 = vdwg.mxu0
    %1331 = vmatpush.bf16.msra.mxu0 %v1065
    %1332 = vmatpush.bf16.msra.mxu0 %v1061
    %1333 = vmatpush.bf16.msra.mxu0 %v1057
    %1334 = vmatpush.bf16.msra.mxu0 %v1053
    %1335 = vmatpush.bf16.msra.mxu0 %v1049
    %1336 = vmatpush.bf16.msra.mxu0 %v1045
    %1337 = vmatpush.bf16.msra.mxu0 %v1041
    %1338 = vmatpush.bf16.msra.mxu0 %v1037
    %1339 = vmatmul.bf16.gmra.mxu0 %v294
    %v1340 = vpop.f32.mrf.mxu0
    %v1341 = vadd.f32 %v1327, %v1340
    %v1342 = vpop.f32.mrf.mxu0
    %v1343 = vadd.f32 %v1329, %v1342
    %1344 = vdwg.mxu0
    %1345 = vmatpush.bf16.msra.mxu0 %v906
    %1346 = vmatpush.bf16.msra.mxu0 %v902
    %1347 = vmatpush.bf16.msra.mxu0 %v898
    %1348 = vmatpush.bf16.msra.mxu0 %v894
    %1349 = vmatpush.bf16.msra.mxu0 %v890
    %1350 = vmatpush.bf16.msra.mxu0 %v886
    %1351 = vmatpush.bf16.msra.mxu0 %v882
    %1352 = vmatpush.bf16.msra.mxu0 %v878
    %1353 = vmatmul.bf16.gmra.mxu0 %v289
    %v1354 = vpop.f32.mrf.mxu0
    %v1355 = vadd.f32 %v264, %v1354
    %v1356 = vpop.f32.mrf.mxu0
    %v1357 = vadd.f32 %v264, %v1356
    %1358 = vdwg.mxu0
    %1359 = vmatpush.bf16.msra.mxu0 %v938
    %1360 = vmatpush.bf16.msra.mxu0 %v934
    %1361 = vmatpush.bf16.msra.mxu0 %v930
    %1362 = vmatpush.bf16.msra.mxu0 %v926
    %1363 = vmatpush.bf16.msra.mxu0 %v922
    %1364 = vmatpush.bf16.msra.mxu0 %v918
    %1365 = vmatpush.bf16.msra.mxu0 %v914
    %1366 = vmatpush.bf16.msra.mxu0 %v910
    %1367 = vmatmul.bf16.gmra.mxu0 %v290
    %v1368 = vpop.f32.mrf.mxu0
    %v1369 = vadd.f32 %v1355, %v1368
    %v1370 = vpop.f32.mrf.mxu0
    %v1371 = vadd.f32 %v1357, %v1370
    %1372 = vdwg.mxu0
    %1373 = vmatpush.bf16.msra.mxu0 %v970
    %1374 = vmatpush.bf16.msra.mxu0 %v966
    %1375 = vmatpush.bf16.msra.mxu0 %v962
    %1376 = vmatpush.bf16.msra.mxu0 %v958
    %1377 = vmatpush.bf16.msra.mxu0 %v954
    %1378 = vmatpush.bf16.msra.mxu0 %v950
    %1379 = vmatpush.bf16.msra.mxu0 %v946
    %1380 = vmatpush.bf16.msra.mxu0 %v942
    %1381 = vmatmul.bf16.gmra.mxu0 %v291
    %v1382 = vpop.f32.mrf.mxu0
    %v1383 = vadd.f32 %v1369, %v1382
    %v1384 = vpop.f32.mrf.mxu0
    %v1385 = vadd.f32 %v1371, %v1384
    %1386 = vdwg.mxu0
    %1387 = vmatpush.bf16.msra.mxu0 %v1002
    %1388 = vmatpush.bf16.msra.mxu0 %v998
    %1389 = vmatpush.bf16.msra.mxu0 %v994
    %1390 = vmatpush.bf16.msra.mxu0 %v990
    %1391 = vmatpush.bf16.msra.mxu0 %v986
    %1392 = vmatpush.bf16.msra.mxu0 %v982
    %1393 = vmatpush.bf16.msra.mxu0 %v978
    %1394 = vmatpush.bf16.msra.mxu0 %v974
    %1395 = vmatmul.bf16.gmra.mxu0 %v292
    %v1396 = vpop.f32.mrf.mxu0
    %v1397 = vadd.f32 %v1383, %v1396
    %v1398 = vpop.f32.mrf.mxu0
    %v1399 = vadd.f32 %v1385, %v1398
    %1400 = vdwg.mxu0
    %1401 = vmatpush.bf16.msra.mxu0 %v1034
    %1402 = vmatpush.bf16.msra.mxu0 %v1030
    %1403 = vmatpush.bf16.msra.mxu0 %v1026
    %1404 = vmatpush.bf16.msra.mxu0 %v1022
    %1405 = vmatpush.bf16.msra.mxu0 %v1018
    %1406 = vmatpush.bf16.msra.mxu0 %v1014
    %1407 = vmatpush.bf16.msra.mxu0 %v1010
    %1408 = vmatpush.bf16.msra.mxu0 %v1006
    %1409 = vmatmul.bf16.gmra.mxu0 %v293
    %v1410 = vpop.f32.mrf.mxu0
    %v1411 = vadd.f32 %v1397, %v1410
    %v1412 = vpop.f32.mrf.mxu0
    %v1413 = vadd.f32 %v1399, %v1412
    %1414 = vdwg.mxu0
    %1415 = vmatpush.bf16.msra.mxu0 %v1066
    %1416 = vmatpush.bf16.msra.mxu0 %v1062
    %1417 = vmatpush.bf16.msra.mxu0 %v1058
    %1418 = vmatpush.bf16.msra.mxu0 %v1054
    %1419 = vmatpush.bf16.msra.mxu0 %v1050
    %1420 = vmatpush.bf16.msra.mxu0 %v1046
    %1421 = vmatpush.bf16.msra.mxu0 %v1042
    %1422 = vmatpush.bf16.msra.mxu0 %v1038
    %1423 = vmatmul.bf16.gmra.mxu0 %v294
    %v1424 = vpop.f32.mrf.mxu0
    %v1425 = vadd.f32 %v1411, %v1424
    %v1426 = vpop.f32.mrf.mxu0
    %v1427 = vadd.f32 %v1413, %v1426
    %1428 = vdwg.mxu0
    %1429 = vmatpush.bf16.msra.mxu0 %v907
    %1430 = vmatpush.bf16.msra.mxu0 %v903
    %1431 = vmatpush.bf16.msra.mxu0 %v899
    %1432 = vmatpush.bf16.msra.mxu0 %v895
    %1433 = vmatpush.bf16.msra.mxu0 %v891
    %1434 = vmatpush.bf16.msra.mxu0 %v887
    %1435 = vmatpush.bf16.msra.mxu0 %v883
    %1436 = vmatpush.bf16.msra.mxu0 %v879
    %1437 = vmatmul.bf16.gmra.mxu0 %v289
    %v1438 = vpop.f32.mrf.mxu0
    %v1439 = vadd.f32 %v265, %v1438
    %v1440 = vpop.f32.mrf.mxu0
    %v1441 = vadd.f32 %v265, %v1440
    %1442 = vdwg.mxu0
    %1443 = vmatpush.bf16.msra.mxu0 %v939
    %1444 = vmatpush.bf16.msra.mxu0 %v935
    %1445 = vmatpush.bf16.msra.mxu0 %v931
    %1446 = vmatpush.bf16.msra.mxu0 %v927
    %1447 = vmatpush.bf16.msra.mxu0 %v923
    %1448 = vmatpush.bf16.msra.mxu0 %v919
    %1449 = vmatpush.bf16.msra.mxu0 %v915
    %1450 = vmatpush.bf16.msra.mxu0 %v911
    %1451 = vmatmul.bf16.gmra.mxu0 %v290
    %v1452 = vpop.f32.mrf.mxu0
    %v1453 = vadd.f32 %v1439, %v1452
    %v1454 = vpop.f32.mrf.mxu0
    %v1455 = vadd.f32 %v1441, %v1454
    %1456 = vdwg.mxu0
    %1457 = vmatpush.bf16.msra.mxu0 %v971
    %1458 = vmatpush.bf16.msra.mxu0 %v967
    %1459 = vmatpush.bf16.msra.mxu0 %v963
    %1460 = vmatpush.bf16.msra.mxu0 %v959
    %1461 = vmatpush.bf16.msra.mxu0 %v955
    %1462 = vmatpush.bf16.msra.mxu0 %v951
    %1463 = vmatpush.bf16.msra.mxu0 %v947
    %1464 = vmatpush.bf16.msra.mxu0 %v943
    %1465 = vmatmul.bf16.gmra.mxu0 %v291
    %v1466 = vpop.f32.mrf.mxu0
    %v1467 = vadd.f32 %v1453, %v1466
    %v1468 = vpop.f32.mrf.mxu0
    %v1469 = vadd.f32 %v1455, %v1468
    %1470 = vdwg.mxu0
    %1471 = vmatpush.bf16.msra.mxu0 %v1003
    %1472 = vmatpush.bf16.msra.mxu0 %v999
    %1473 = vmatpush.bf16.msra.mxu0 %v995
    %1474 = vmatpush.bf16.msra.mxu0 %v991
    %1475 = vmatpush.bf16.msra.mxu0 %v987
    %1476 = vmatpush.bf16.msra.mxu0 %v983
    %1477 = vmatpush.bf16.msra.mxu0 %v979
    %1478 = vmatpush.bf16.msra.mxu0 %v975
    %1479 = vmatmul.bf16.gmra.mxu0 %v292
    %v1480 = vpop.f32.mrf.mxu0
    %v1481 = vadd.f32 %v1467, %v1480
    %v1482 = vpop.f32.mrf.mxu0
    %v1483 = vadd.f32 %v1469, %v1482
    %1484 = vdwg.mxu0
    %1485 = vmatpush.bf16.msra.mxu0 %v1035
    %1486 = vmatpush.bf16.msra.mxu0 %v1031
    %1487 = vmatpush.bf16.msra.mxu0 %v1027
    %1488 = vmatpush.bf16.msra.mxu0 %v1023
    %1489 = vmatpush.bf16.msra.mxu0 %v1019
    %1490 = vmatpush.bf16.msra.mxu0 %v1015
    %1491 = vmatpush.bf16.msra.mxu0 %v1011
    %1492 = vmatpush.bf16.msra.mxu0 %v1007
    %1493 = vmatmul.bf16.gmra.mxu0 %v293
    %v1494 = vpop.f32.mrf.mxu0
    %v1495 = vadd.f32 %v1481, %v1494
    %v1496 = vpop.f32.mrf.mxu0
    %v1497 = vadd.f32 %v1483, %v1496
    %1498 = vdwg.mxu0
    %1499 = vmatpush.bf16.msra.mxu0 %v1067
    %1500 = vmatpush.bf16.msra.mxu0 %v1063
    %1501 = vmatpush.bf16.msra.mxu0 %v1059
    %1502 = vmatpush.bf16.msra.mxu0 %v1055
    %1503 = vmatpush.bf16.msra.mxu0 %v1051
    %1504 = vmatpush.bf16.msra.mxu0 %v1047
    %1505 = vmatpush.bf16.msra.mxu0 %v1043
    %1506 = vmatpush.bf16.msra.mxu0 %v1039
    %1507 = vmatmul.bf16.gmra.mxu0 %v294
    %v1508 = vpop.f32.mrf.mxu0
    %v1509 = vadd.f32 %v1495, %v1508
    %v1510 = vpop.f32.mrf.mxu0
    %v1511 = vadd.f32 %v1497, %v1510
    %1512 = vdwg.mxu0
    %1513 = vmatpush.bf16.msra.mxu0 %v908
    %1514 = vmatpush.bf16.msra.mxu0 %v904
    %1515 = vmatpush.bf16.msra.mxu0 %v900
    %1516 = vmatpush.bf16.msra.mxu0 %v896
    %1517 = vmatpush.bf16.msra.mxu0 %v892
    %1518 = vmatpush.bf16.msra.mxu0 %v888
    %1519 = vmatpush.bf16.msra.mxu0 %v884
    %1520 = vmatpush.bf16.msra.mxu0 %v880
    %1521 = vmatmul.bf16.gmra.mxu0 %v289
    %v1522 = vpop.f32.mrf.mxu0
    %v1523 = vadd.f32 %v266, %v1522
    %v1524 = vpop.f32.mrf.mxu0
    %v1525 = vadd.f32 %v266, %v1524
    %1526 = vdwg.mxu0
    %1527 = vmatpush.bf16.msra.mxu0 %v940
    %1528 = vmatpush.bf16.msra.mxu0 %v936
    %1529 = vmatpush.bf16.msra.mxu0 %v932
    %1530 = vmatpush.bf16.msra.mxu0 %v928
    %1531 = vmatpush.bf16.msra.mxu0 %v924
    %1532 = vmatpush.bf16.msra.mxu0 %v920
    %1533 = vmatpush.bf16.msra.mxu0 %v916
    %1534 = vmatpush.bf16.msra.mxu0 %v912
    %1535 = vmatmul.bf16.gmra.mxu0 %v290
    %v1536 = vpop.f32.mrf.mxu0
    %v1537 = vadd.f32 %v1523, %v1536
    %v1538 = vpop.f32.mrf.mxu0
    %v1539 = vadd.f32 %v1525, %v1538
    %1540 = vdwg.mxu0
    %1541 = vmatpush.bf16.msra.mxu0 %v972
    %1542 = vmatpush.bf16.msra.mxu0 %v968
    %1543 = vmatpush.bf16.msra.mxu0 %v964
    %1544 = vmatpush.bf16.msra.mxu0 %v960
    %1545 = vmatpush.bf16.msra.mxu0 %v956
    %1546 = vmatpush.bf16.msra.mxu0 %v952
    %1547 = vmatpush.bf16.msra.mxu0 %v948
    %1548 = vmatpush.bf16.msra.mxu0 %v944
    %1549 = vmatmul.bf16.gmra.mxu0 %v291
    %v1550 = vpop.f32.mrf.mxu0
    %v1551 = vadd.f32 %v1537, %v1550
    %v1552 = vpop.f32.mrf.mxu0
    %v1553 = vadd.f32 %v1539, %v1552
    %1554 = vdwg.mxu0
    %1555 = vmatpush.bf16.msra.mxu0 %v1004
    %1556 = vmatpush.bf16.msra.mxu0 %v1000
    %1557 = vmatpush.bf16.msra.mxu0 %v996
    %1558 = vmatpush.bf16.msra.mxu0 %v992
    %1559 = vmatpush.bf16.msra.mxu0 %v988
    %1560 = vmatpush.bf16.msra.mxu0 %v984
    %1561 = vmatpush.bf16.msra.mxu0 %v980
    %1562 = vmatpush.bf16.msra.mxu0 %v976
    %1563 = vmatmul.bf16.gmra.mxu0 %v292
    %v1564 = vpop.f32.mrf.mxu0
    %v1565 = vadd.f32 %v1551, %v1564
    %v1566 = vpop.f32.mrf.mxu0
    %v1567 = vadd.f32 %v1553, %v1566
    %1568 = vdwg.mxu0
    %1569 = vmatpush.bf16.msra.mxu0 %v1036
    %1570 = vmatpush.bf16.msra.mxu0 %v1032
    %1571 = vmatpush.bf16.msra.mxu0 %v1028
    %1572 = vmatpush.bf16.msra.mxu0 %v1024
    %1573 = vmatpush.bf16.msra.mxu0 %v1020
    %1574 = vmatpush.bf16.msra.mxu0 %v1016
    %1575 = vmatpush.bf16.msra.mxu0 %v1012
    %1576 = vmatpush.bf16.msra.mxu0 %v1008
    %1577 = vmatmul.bf16.gmra.mxu0 %v293
    %v1578 = vpop.f32.mrf.mxu0
    %v1579 = vadd.f32 %v1565, %v1578
    %v1580 = vpop.f32.mrf.mxu0
    %v1581 = vadd.f32 %v1567, %v1580
    %1582 = vdwg.mxu0
    %1583 = vmatpush.bf16.msra.mxu0 %v1068
    %1584 = vmatpush.bf16.msra.mxu0 %v1064
    %1585 = vmatpush.bf16.msra.mxu0 %v1060
    %1586 = vmatpush.bf16.msra.mxu0 %v1056
    %1587 = vmatpush.bf16.msra.mxu0 %v1052
    %1588 = vmatpush.bf16.msra.mxu0 %v1048
    %1589 = vmatpush.bf16.msra.mxu0 %v1044
    %1590 = vmatpush.bf16.msra.mxu0 %v1040
    %1591 = vmatmul.bf16.gmra.mxu0 %v294
    %v1592 = vpop.f32.mrf.mxu0
    %v1593 = vadd.f32 %v1579, %v1592
    %v1594 = vpop.f32.mrf.mxu0
    %v1595 = vadd.f32 %v1581, %v1594
    %1596 = vdwg.mxu0
    %1597 = vst [vmem:[#allocation2] sm:$0xff] %v1341
    %1598 = vst [vmem:[#allocation2 + $0x8] sm:$0xff] %v1425
    %1599 = vst [vmem:[#allocation2 + $0x10] sm:$0xff] %v1509
    %1600 = vst [vmem:[#allocation2 + $0x18] sm:$0xff] %v1593
    %1601 = vst [vmem:[#allocation2 + $0x20] sm:$0xff] %v1343
    %1602 = vst [vmem:[#allocation2 + $0x28] sm:$0xff] %v1427
    %1603 = vst [vmem:[#allocation2 + $0x30] sm:$0xff] %v1511
    %1604 = vst [vmem:[#allocation2 + $0x38] sm:$0xff] %v1595
    %v1605 = vld [vmem:[#allocation5] sm:$0xff]
    %v1606 = vld [vmem:[#allocation5 + $0x8] sm:$0xff]
    %v1607 = vld [vmem:[#allocation5 + $0x10] sm:$0xff]
    %v1608 = vld [vmem:[#allocation5 + $0x18] sm:$0xff]
    %v1609 = vld [vmem:[#allocation5 + $0x20] sm:$0xff]
    %v1610 = vld [vmem:[#allocation5 + $0x28] sm:$0xff]
    %v1611 = vld [vmem:[#allocation5 + $0x30] sm:$0xff]
    %v1612 = vld [vmem:[#allocation5 + $0x38] sm:$0xff]
    %v1613 = vld [vmem:[#allocation5 + $0x40] sm:$0xff]
    %v1614 = vld [vmem:[#allocation5 + $0x48] sm:$0xff]
    %v1615 = vld [vmem:[#allocation5 + $0x50] sm:$0xff]
    %v1616 = vld [vmem:[#allocation5 + $0x58] sm:$0xff]
    %v1617 = vld [vmem:[#allocation5 + $0x60] sm:$0xff]
    %v1618 = vld [vmem:[#allocation5 + $0x68] sm:$0xff]
    %v1619 = vld [vmem:[#allocation5 + $0x70] sm:$0xff]
    %v1620 = vld [vmem:[#allocation5 + $0x78] sm:$0xff]
    %v1621 = vld [vmem:[#allocation5 + $0x80] sm:$0xff]
    %v1622 = vld [vmem:[#allocation5 + $0x88] sm:$0xff]
    %v1623 = vld [vmem:[#allocation5 + $0x90] sm:$0xff]
    %v1624 = vld [vmem:[#allocation5 + $0x98] sm:$0xff]
    %v1625 = vld [vmem:[#allocation5 + $0xa0] sm:$0xff]
    %v1626 = vld [vmem:[#allocation5 + $0xa8] sm:$0xff]
    %v1627 = vld [vmem:[#allocation5 + $0xb0] sm:$0xff]
    %v1628 = vld [vmem:[#allocation5 + $0xb8] sm:$0xff]
    %v1629 = vld [vmem:[#allocation5 + $0xc0] sm:$0xff]
    %v1630 = vld [vmem:[#allocation5 + $0xc8] sm:$0xff]
    %v1631 = vld [vmem:[#allocation5 + $0xd0] sm:$0xff]
    %v1632 = vld [vmem:[#allocation5 + $0xd8] sm:$0xff]
    %v1633 = vld [vmem:[#allocation5 + $0xe0] sm:$0xff]
    %v1634 = vld [vmem:[#allocation5 + $0xe8] sm:$0xff]
    %v1635 = vld [vmem:[#allocation5 + $0xf0] sm:$0xff]
    %v1636 = vld [vmem:[#allocation5 + $0xf8] sm:$0xff]
    %v1637 = vlaneseq
    %v1638 = vand.u32 %v1637, 127
    %v1639 = vadd.s32 %v1638, 128
    %v1640 = vadd.s32 %v1638, 256
    %v1641 = vadd.s32 %v1638, 384
    %vm1642 = vcmp.lt.s32.totalorder %v1638, 0
    %v1643 = vsub.s32 0, %v1638
    %v1644 = vsel %vm1642, %v1643, %v1638
    %v1645 = vshrl.u32 %v1644, 8
    %v1646 = vand.u32 %v1644, 255
    %v1647 = vsub.s32 0, %v1646
    %v1648 = vsel %vm1642, %v1647, %v1646
    %vm1649 = vcmp.lt.s32.totalorder %v1639, 0
    %v1650 = vsub.s32 0, %v1639
    %v1651 = vsel %vm1649, %v1650, %v1639
    %v1652 = vshrl.u32 %v1651, 8
    %v1653 = vand.u32 %v1651, 255
    %v1654 = vsub.s32 0, %v1653
    %v1655 = vsel %vm1649, %v1654, %v1653
    %vm1656 = vcmp.lt.s32.totalorder %v1640, 0
    %v1657 = vsub.s32 0, %v1640
    %v1658 = vsel %vm1656, %v1657, %v1640
    %v1659 = vshrl.u32 %v1658, 8
    %v1660 = vand.u32 %v1658, 255
    %v1661 = vsub.s32 0, %v1660
    %v1662 = vsel %vm1656, %v1661, %v1660
    %vm1663 = vcmp.lt.s32.totalorder %v1641, 0
    %v1664 = vsub.s32 0, %v1641
    %v1665 = vsel %vm1663, %v1664, %v1641
    %v1666 = vshrl.u32 %v1665, 8
    %v1667 = vand.u32 %v1665, 255
    %v1668 = vsub.s32 0, %v1667
    %v1669 = vsel %vm1663, %v1668, %v1667
    %vm1670 = vcmp.ne.s32.totalorder %v1648, 0
    %vm1671 = vcmp.ne.s32.totalorder %v1655, 0
    %vm1672 = vcmp.ne.s32.totalorder %v1662, 0
    %vm1673 = vcmp.ne.s32.totalorder %v1669, 0
    %vm1674 = vcmp.lt.s32.totalorder %v1648, 0
    %vm1675 = vcmp.lt.s32.totalorder %v1655, 0
    %vm1676 = vcmp.lt.s32.totalorder %v1662, 0
    %vm1677 = vcmp.lt.s32.totalorder %v1669, 0
    %vm1678 = vmand %vm1674, %vm1670
    %vm1679 = vmand %vm1675, %vm1671
    %vm1680 = vmand %vm1676, %vm1672
    %vm1681 = vmand %vm1677, %vm1673
    %v1682 = vadd.s32 %v1648, 256
    %v1683 = vadd.s32 %v1655, 256
    %v1684 = vadd.s32 %v1662, 256
    %v1685 = vadd.s32 %v1669, 256
    %v1686 = vsel %vm1678, %v1682, %v1648
    %v1687 = vsel %vm1679, %v1683, %v1655
    %v1688 = vsel %vm1680, %v1684, %v1662
    %v1689 = vsel %vm1681, %v1685, %v1669
    %vm1690 = vcmp.ge.s32.totalorder %v1686, 128
    %vm1691 = vcmp.ge.s32.totalorder %v1687, 128
    %vm1692 = vcmp.ge.s32.totalorder %v1688, 128
    %vm1693 = vcmp.ge.s32.totalorder %v1689, 128
    %vm1694 = vcmp.lt.s32.totalorder %v1686, 192
    %vm1695 = vcmp.lt.s32.totalorder %v1687, 192
    %vm1696 = vcmp.lt.s32.totalorder %v1688, 192
    %vm1697 = vcmp.lt.s32.totalorder %v1689, 192
    %vm1698 = vmand %vm1690, %vm1694
    %vm1699 = vmand %vm1691, %vm1695
    %vm1700 = vmand %vm1692, %vm1696
    %vm1701 = vmand %vm1693, %vm1697
    %v1702 = vsel %vm1698, 1.0, 0.5
    %v1703 = vsel %vm1699, 1.0, 0.5
    %v1704 = vsel %vm1700, 1.0, 0.5
    %v1705 = vsel %vm1701, 1.0, 0.5
    %v1706 = vsel %vm1698, 0.0, 0.5
    %v1707 = vsel %vm1699, 0.0, 0.5
    %v1708 = vsel %vm1700, 0.0, 0.5
    %v1709 = vsel %vm1701, 0.0, 0.5
    %v1710 = vld [vmem:[#allocation2] sm:$0x3]
    %v1711 = vld [vmem:[#allocation2 + $0x8] sm:$0x3]
    %v1712 = vld [vmem:[#allocation2 + $0x30] sm:$0xc0]
    %v1713 = vld [vmem:[#allocation2 + $0x38] sm:$0xc0]
    %v1716 = vrot.slane %v1712, 6
    %v1717 = vrot.slane %v1713, 6
    %v1752 = vunpack.c.l.b16 %v1605
    %v1753 = vunpack.c.h.b16 %v1605
    %v1754 = vunpack.c.l.b16 %v1606
    %v1755 = vunpack.c.h.b16 %v1606
    %v1756 = vunpack.c.l.b16 %v1607
    %v1757 = vunpack.c.h.b16 %v1607
    %v1758 = vunpack.c.l.b16 %v1608
    %v1759 = vunpack.c.h.b16 %v1608
    %v1760 = vunpack.c.l.b16 %v1609
    %v1761 = vunpack.c.h.b16 %v1609
    %v1762 = vunpack.c.l.b16 %v1610
    %v1763 = vunpack.c.h.b16 %v1610
    %v1764 = vunpack.c.l.b16 %v1611
    %v1765 = vunpack.c.h.b16 %v1611
    %v1766 = vunpack.c.l.b16 %v1612
    %v1767 = vunpack.c.h.b16 %v1612
    %v1768 = vunpack.c.l.b16 %v1613
    %v1769 = vunpack.c.h.b16 %v1613
    %v1770 = vunpack.c.l.b16 %v1614
    %v1771 = vunpack.c.h.b16 %v1614
    %v1772 = vunpack.c.l.b16 %v1615
    %v1773 = vunpack.c.h.b16 %v1615
    %v1774 = vunpack.c.l.b16 %v1616
    %v1775 = vunpack.c.h.b16 %v1616
    %v1776 = vunpack.c.l.b16 %v1617
    %v1777 = vunpack.c.h.b16 %v1617
    %v1778 = vunpack.c.l.b16 %v1618
    %v1779 = vunpack.c.h.b16 %v1618
    %v1780 = vunpack.c.l.b16 %v1619
    %v1781 = vunpack.c.h.b16 %v1619
    %v1782 = vunpack.c.l.b16 %v1620
    %v1783 = vunpack.c.h.b16 %v1620
    %v1784 = vunpack.c.l.b16 %v1621
    %v1785 = vunpack.c.h.b16 %v1621
    %v1786 = vunpack.c.l.b16 %v1622
    %v1787 = vunpack.c.h.b16 %v1622
    %v1788 = vunpack.c.l.b16 %v1623
    %v1789 = vunpack.c.h.b16 %v1623
    %v1790 = vunpack.c.l.b16 %v1624
    %v1791 = vunpack.c.h.b16 %v1624
    %v1792 = vunpack.c.l.b16 %v1625
    %v1793 = vunpack.c.h.b16 %v1625
    %v1794 = vunpack.c.l.b16 %v1626
    %v1795 = vunpack.c.h.b16 %v1626
    %v1796 = vunpack.c.l.b16 %v1627
    %v1797 = vunpack.c.h.b16 %v1627
    %v1798 = vunpack.c.l.b16 %v1628
    %v1799 = vunpack.c.h.b16 %v1628
    %v1800 = vunpack.c.l.b16 %v1629
    %v1801 = vunpack.c.h.b16 %v1629
    %v1802 = vunpack.c.l.b16 %v1630
    %v1803 = vunpack.c.h.b16 %v1630
    %v1804 = vunpack.c.l.b16 %v1631
    %v1805 = vunpack.c.h.b16 %v1631
    %v1806 = vunpack.c.l.b16 %v1632
    %v1807 = vunpack.c.h.b16 %v1632
    %v1808 = vunpack.c.l.b16 %v1633
    %v1809 = vunpack.c.h.b16 %v1633
    %v1810 = vunpack.c.l.b16 %v1634
    %v1811 = vunpack.c.h.b16 %v1634
    %v1812 = vunpack.c.l.b16 %v1635
    %v1813 = vunpack.c.h.b16 %v1635
    %v1814 = vunpack.c.l.b16 %v1636
    %v1815 = vunpack.c.h.b16 %v1636
    %v1816 = vpack.c.b16 %v1756, %v1752
    %v1817 = vpack.c.b16 %v1757, %v1753
    %v1818 = vpack.c.b16 %v1758, %v1754
    %v1819 = vpack.c.b16 %v1759, %v1755
    %v1820 = vpack.c.b16 %v1764, %v1760
    %v1821 = vpack.c.b16 %v1765, %v1761
    %v1822 = vpack.c.b16 %v1766, %v1762
    %v1823 = vpack.c.b16 %v1767, %v1763
    %v1824 = vpack.c.b16 %v1772, %v1768
    %v1825 = vpack.c.b16 %v1773, %v1769
    %v1826 = vpack.c.b16 %v1774, %v1770
    %v1827 = vpack.c.b16 %v1775, %v1771
    %v1828 = vpack.c.b16 %v1780, %v1776
    %v1829 = vpack.c.b16 %v1781, %v1777
    %v1830 = vpack.c.b16 %v1782, %v1778
    %v1831 = vpack.c.b16 %v1783, %v1779
    %v1832 = vpack.c.b16 %v1788, %v1784
    %v1833 = vpack.c.b16 %v1789, %v1785
    %v1834 = vpack.c.b16 %v1790, %v1786
    %v1835 = vpack.c.b16 %v1791, %v1787
    %v1836 = vpack.c.b16 %v1796, %v1792
    %v1837 = vpack.c.b16 %v1797, %v1793
    %v1838 = vpack.c.b16 %v1798, %v1794
    %v1839 = vpack.c.b16 %v1799, %v1795
    %v1840 = vpack.c.b16 %v1804, %v1800
    %v1841 = vpack.c.b16 %v1805, %v1801
    %v1842 = vpack.c.b16 %v1806, %v1802
    %v1843 = vpack.c.b16 %v1807, %v1803
    %v1844 = vpack.c.b16 %v1812, %v1808
    %v1845 = vpack.c.b16 %v1813, %v1809
    %v1846 = vpack.c.b16 %v1814, %v1810
    %v1847 = vpack.c.b16 %v1815, %v1811
    %1880 = vmatpush.bf16.msra.mxu0 %v1844
    %1881 = vmatpush.bf16.msra.mxu0 %v1840
    %1882 = vmatpush.bf16.msra.mxu0 %v1836
    %1883 = vmatpush.bf16.msra.mxu0 %v1832
    %1884 = vmatpush.bf16.msra.mxu0 %v1828
    %1885 = vmatpush.bf16.msra.mxu0 %v1824
    %1886 = vmatpush.bf16.msra.mxu0 %v1820
    %1887 = vmatpush.bf16.msra.mxu0 %v1816
    %1888 = vmatmul.bf16.gmra.mxu0 0
    %v1889 = vpop.f32.mrf.mxu0
    %v1890 = vadd.f32 %v1710, %v1889
    %v1891 = vpop.f32.mrf.mxu0
    %1892 = vdwg.mxu0
    %1893 = vmatpush.bf16.msra.mxu0 %v1845
    %1894 = vmatpush.bf16.msra.mxu0 %v1841
    %1895 = vmatpush.bf16.msra.mxu0 %v1837
    %1896 = vmatpush.bf16.msra.mxu0 %v1833
    %1897 = vmatpush.bf16.msra.mxu0 %v1829
    %1898 = vmatpush.bf16.msra.mxu0 %v1825
    %1899 = vmatpush.bf16.msra.mxu0 %v1821
    %1900 = vmatpush.bf16.msra.mxu0 %v1817
    %1901 = vmatmul.bf16.gmra.mxu0 0
    %v1902 = vpop.f32.mrf.mxu0
    %v1903 = vadd.f32 %v1711, %v1902
    %v1904 = vpop.f32.mrf.mxu0
    %1905 = vdwg.mxu0
    %1906 = vmatpush.bf16.msra.mxu0 %v1846
    %1907 = vmatpush.bf16.msra.mxu0 %v1842
    %1908 = vmatpush.bf16.msra.mxu0 %v1838
    %1909 = vmatpush.bf16.msra.mxu0 %v1834
    %1910 = vmatpush.bf16.msra.mxu0 %v1830
    %1911 = vmatpush.bf16.msra.mxu0 %v1826
    %1912 = vmatpush.bf16.msra.mxu0 %v1822
    %1913 = vmatpush.bf16.msra.mxu0 %v1818
    %1914 = vmatmul.bf16.gmra.mxu0 0
    %v1915 = vpop.f32.mrf.mxu0
    %v1916 = vadd.f32 %v1716, %v1915
    %v1917 = vpop.f32.mrf.mxu0
    %1918 = vdwg.mxu0
    %1919 = vmatpush.bf16.msra.mxu0 %v1847
    %1920 = vmatpush.bf16.msra.mxu0 %v1843
    %1921 = vmatpush.bf16.msra.mxu0 %v1839
    %1922 = vmatpush.bf16.msra.mxu0 %v1835
    %1923 = vmatpush.bf16.msra.mxu0 %v1831
    %1924 = vmatpush.bf16.msra.mxu0 %v1827
    %1925 = vmatpush.bf16.msra.mxu0 %v1823
    %1926 = vmatpush.bf16.msra.mxu0 %v1819
    %1927 = vmatmul.bf16.gmra.mxu0 0
    %v1928 = vpop.f32.mrf.mxu0
    %v1929 = vadd.f32 %v1717, %v1928
    %v1930 = vpop.f32.mrf.mxu0
    %1931 = vdwg.mxu0
    %v1932 = vmul.f32 %v1890, %v1702
    %v1933 = vmul.f32 %v1903, %v1703
    %v1934 = vmul.f32 %v1916, %v1704
    %v1935 = vmul.f32 %v1929, %v1705
    %v1936 = vtanh.pop %v1932
    %v1937 = vtanh.pop %v1933
    %v1938 = vtanh.pop %v1934
    %v1939 = vtanh.pop %v1935
    %v1940 = vmul.f32 %v1936, %v1702
    %v1941 = vmul.f32 %v1937, %v1703
    %v1942 = vmul.f32 %v1938, %v1704
    %v1943 = vmul.f32 %v1939, %v1705
    %v1944 = vadd.f32 %v1940, %v1706
    %v1945 = vadd.f32 %v1941, %v1707
    %v1946 = vadd.f32 %v1942, %v1708
    %v1947 = vadd.f32 %v1943, %v1709
    %1949 = vrot.lane.b32.xlu0 %v1946, 64
    %v1950 = vpop.permute.xlu0 %1949
    %vm1952 = vcmask 523264
    %v1953 = vsel %vm1952, %v1944, %v1950
    %1955 = vrot.lane.b32.xlu0 %v1944, 64
    %v1956 = vpop.permute.xlu0 %1955
    %v1958 = vsel %vm1952, %v1956, %v1946
    %1960 = vrot.lane.b32.xlu0 %v1947, 64
    %v1961 = vpop.permute.xlu0 %1960
    %v1963 = vsel %vm1952, %v1945, %v1961
    %1965 = vrot.lane.b32.xlu0 %v1945, 64
    %v1966 = vpop.permute.xlu0 %1965
    %v1968 = vsel %vm1952, %v1966, %v1947
    %v1969 = vmul.f32 %v1958, 0.0
    %v1970 = vmul.f32 %v1953, %v1963
    %v1971 = vadd.f32 %v1969, %v1970
    %v1972 = vtanh.pop %v1971
    %v1973 = vmul.f32 %v1968, %v1972
    %vm1974 = vcmask 517120
    %1975 = vst.msk [vmem:[%s4] sm:$0x3] %vm1974, %v1973
    %vm1976 = vcmask 1041920
    %1977 = vst.msk [vmem:[%s4 + $0xe] sm:$0x3] %vm1976, %v1973
    %v1978 = vpack.c.bf16 %v1973, %v1973
    %v1979 = vld [vmem:[#allocation2] sm:$0xc]
    %v1980 = vld [vmem:[#allocation2 + $0x8] sm:$0xc]
    %v1981 = vld [vmem:[#allocation2 + $0x30] sm:$0x30]
    %v1982 = vld [vmem:[#allocation2 + $0x38] sm:$0x30]
    %v1985 = vrot.slane %v1981, 2
    %v1986 = vrot.slane %v1982, 2
    %v1989 = vrot.slane %v1979, 2
    %v1990 = vrot.slane %v1980, 2
    %v1991 = vrot.slane %v1985, 2
    %v1992 = vrot.slane %v1986, 2
    %1997 = vmatpush.bf16.msra.mxu0 %v1844
    %1998 = vmatpush.bf16.msra.mxu0 %v1840
    %1999 = vmatpush.bf16.msra.mxu0 %v1836
    %2000 = vmatpush.bf16.msra.mxu0 %v1832
    %2001 = vmatpush.bf16.msra.mxu0 %v1828
    %2002 = vmatpush.bf16.msra.mxu0 %v1824
    %2003 = vmatpush.bf16.msra.mxu0 %v1820
    %2004 = vmatpush.bf16.msra.mxu0 %v1816
    %2005 = vmatmul.bf16.gmra.mxu0 %v1978
    %v2006 = vpop.f32.mrf.mxu0
    %v2007 = vadd.f32 %v1989, %v2006
    %v2008 = vpop.f32.mrf.mxu0
    %2009 = vdwg.mxu0
    %2010 = vmatpush.bf16.msra.mxu0 %v1845
    %2011 = vmatpush.bf16.msra.mxu0 %v1841
    %2012 = vmatpush.bf16.msra.mxu0 %v1837
    %2013 = vmatpush.bf16.msra.mxu0 %v1833
    %2014 = vmatpush.bf16.msra.mxu0 %v1829
    %2015 = vmatpush.bf16.msra.mxu0 %v1825
    %2016 = vmatpush.bf16.msra.mxu0 %v1821
    %2017 = vmatpush.bf16.msra.mxu0 %v1817
    %2018 = vmatmul.bf16.gmra.mxu0 %v1978
    %v2019 = vpop.f32.mrf.mxu0
    %v2020 = vadd.f32 %v1990, %v2019
    %v2021 = vpop.f32.mrf.mxu0
    %2022 = vdwg.mxu0
    %2023 = vmatpush.bf16.msra.mxu0 %v1846
    %2024 = vmatpush.bf16.msra.mxu0 %v1842
    %2025 = vmatpush.bf16.msra.mxu0 %v1838
    %2026 = vmatpush.bf16.msra.mxu0 %v1834
    %2027 = vmatpush.bf16.msra.mxu0 %v1830
    %2028 = vmatpush.bf16.msra.mxu0 %v1826
    %2029 = vmatpush.bf16.msra.mxu0 %v1822
    %2030 = vmatpush.bf16.msra.mxu0 %v1818
    %2031 = vmatmul.bf16.gmra.mxu0 %v1978
    %v2032 = vpop.f32.mrf.mxu0
    %v2033 = vadd.f32 %v1991, %v2032
    %v2034 = vpop.f32.mrf.mxu0
    %2035 = vdwg.mxu0
    %2036 = vmatpush.bf16.msra.mxu0 %v1847
    %2037 = vmatpush.bf16.msra.mxu0 %v1843
    %2038 = vmatpush.bf16.msra.mxu0 %v1839
    %2039 = vmatpush.bf16.msra.mxu0 %v1835
    %2040 = vmatpush.bf16.msra.mxu0 %v1831
    %2041 = vmatpush.bf16.msra.mxu0 %v1827
    %2042 = vmatpush.bf16.msra.mxu0 %v1823
    %2043 = vmatpush.bf16.msra.mxu0 %v1819
    %2044 = vmatmul.bf16.gmra.mxu0 %v1978
    %v2045 = vpop.f32.mrf.mxu0
    %v2046 = vadd.f32 %v1992, %v2045
    %v2047 = vpop.f32.mrf.mxu0
    %2048 = vdwg.mxu0
    %v2049 = vmul.f32 %v2007, %v1702
    %v2050 = vmul.f32 %v2020, %v1703
    %v2051 = vmul.f32 %v2033, %v1704
    %v2052 = vmul.f32 %v2046, %v1705
    %v2053 = vtanh.pop %v2049
    %v2054 = vtanh.pop %v2050
    %v2055 = vtanh.pop %v2051
    %v2056 = vtanh.pop %v2052
    %v2057 = vmul.f32 %v2053, %v1702
    %v2058 = vmul.f32 %v2054, %v1703
    %v2059 = vmul.f32 %v2055, %v1704
    %v2060 = vmul.f32 %v2056, %v1705
    %v2061 = vadd.f32 %v2057, %v1706
    %v2062 = vadd.f32 %v2058, %v1707
    %v2063 = vadd.f32 %v2059, %v1708
    %v2064 = vadd.f32 %v2060, %v1709
    %2066 = vrot.lane.b32.xlu0 %v2063, 64
    %v2067 = vpop.permute.xlu0 %2066
    %v2069 = vsel %vm1952, %v2061, %v2067
    %2071 = vrot.lane.b32.xlu0 %v2061, 64
    %v2072 = vpop.permute.xlu0 %2071
    %v2074 = vsel %vm1952, %v2072, %v2063
    %2076 = vrot.lane.b32.xlu0 %v2064, 64
    %v2077 = vpop.permute.xlu0 %2076
    %v2079 = vsel %vm1952, %v2062, %v2077
    %2081 = vrot.lane.b32.xlu0 %v2062, 64
    %v2082 = vpop.permute.xlu0 %2081
    %v2084 = vsel %vm1952, %v2082, %v2064
    %v2085 = vmul.f32 %v2074, %v1971
    %v2086 = vmul.f32 %v2069, %v2079
    %v2087 = vadd.f32 %v2085, %v2086
    %v2088 = vtanh.pop %v2087
    %v2089 = vmul.f32 %v2084, %v2088
    %2090 = vst.msk [vmem:[%s4 + $0x2] sm:$0x3] %vm1974, %v2089
    %2091 = vst.msk [vmem:[%s4 + $0xc] sm:$0x3] %vm1976, %v2089
    %v2092 = vpack.c.bf16 %v2089, %v2089
    %v2093 = vld [vmem:[#allocation2] sm:$0x30]
    %v2094 = vld [vmem:[#allocation2 + $0x8] sm:$0x30]
    %v2095 = vld [vmem:[#allocation2 + $0x30] sm:$0xc]
    %v2096 = vld [vmem:[#allocation2 + $0x38] sm:$0xc]
    %v2099 = vrot.slane %v2095, 6
    %v2100 = vrot.slane %v2096, 6
    %v2103 = vrot.slane %v2093, 4
    %v2104 = vrot.slane %v2094, 4
    %v2105 = vrot.slane %v2099, 4
    %v2106 = vrot.slane %v2100, 4
    %2111 = vmatpush.bf16.msra.mxu0 %v1844
    %2112 = vmatpush.bf16.msra.mxu0 %v1840
    %2113 = vmatpush.bf16.msra.mxu0 %v1836
    %2114 = vmatpush.bf16.msra.mxu0 %v1832
    %2115 = vmatpush.bf16.msra.mxu0 %v1828
    %2116 = vmatpush.bf16.msra.mxu0 %v1824
    %2117 = vmatpush.bf16.msra.mxu0 %v1820
    %2118 = vmatpush.bf16.msra.mxu0 %v1816
    %2119 = vmatmul.bf16.gmra.mxu0 %v2092
    %v2120 = vpop.f32.mrf.mxu0
    %v2121 = vadd.f32 %v2103, %v2120
    %v2122 = vpop.f32.mrf.mxu0
    %2123 = vdwg.mxu0
    %2124 = vmatpush.bf16.msra.mxu0 %v1845
    %2125 = vmatpush.bf16.msra.mxu0 %v1841
    %2126 = vmatpush.bf16.msra.mxu0 %v1837
    %2127 = vmatpush.bf16.msra.mxu0 %v1833
    %2128 = vmatpush.bf16.msra.mxu0 %v1829
    %2129 = vmatpush.bf16.msra.mxu0 %v1825
    %2130 = vmatpush.bf16.msra.mxu0 %v1821
    %2131 = vmatpush.bf16.msra.mxu0 %v1817
    %2132 = vmatmul.bf16.gmra.mxu0 %v2092
    %v2133 = vpop.f32.mrf.mxu0
    %v2134 = vadd.f32 %v2104, %v2133
    %v2135 = vpop.f32.mrf.mxu0
    %2136 = vdwg.mxu0
    %2137 = vmatpush.bf16.msra.mxu0 %v1846
    %2138 = vmatpush.bf16.msra.mxu0 %v1842
    %2139 = vmatpush.bf16.msra.mxu0 %v1838
    %2140 = vmatpush.bf16.msra.mxu0 %v1834
    %2141 = vmatpush.bf16.msra.mxu0 %v1830
    %2142 = vmatpush.bf16.msra.mxu0 %v1826
    %2143 = vmatpush.bf16.msra.mxu0 %v1822
    %2144 = vmatpush.bf16.msra.mxu0 %v1818
    %2145 = vmatmul.bf16.gmra.mxu0 %v2092
    %v2146 = vpop.f32.mrf.mxu0
    %v2147 = vadd.f32 %v2105, %v2146
    %v2148 = vpop.f32.mrf.mxu0
    %2149 = vdwg.mxu0
    %2150 = vmatpush.bf16.msra.mxu0 %v1847
    %2151 = vmatpush.bf16.msra.mxu0 %v1843
    %2152 = vmatpush.bf16.msra.mxu0 %v1839
    %2153 = vmatpush.bf16.msra.mxu0 %v1835
    %2154 = vmatpush.bf16.msra.mxu0 %v1831
    %2155 = vmatpush.bf16.msra.mxu0 %v1827
    %2156 = vmatpush.bf16.msra.mxu0 %v1823
    %2157 = vmatpush.bf16.msra.mxu0 %v1819
    %2158 = vmatmul.bf16.gmra.mxu0 %v2092
    %v2159 = vpop.f32.mrf.mxu0
    %v2160 = vadd.f32 %v2106, %v2159
    %v2161 = vpop.f32.mrf.mxu0
    %2162 = vdwg.mxu0
    %v2163 = vmul.f32 %v2121, %v1702
    %v2164 = vmul.f32 %v2134, %v1703
    %v2165 = vmul.f32 %v2147, %v1704
    %v2166 = vmul.f32 %v2160, %v1705
    %v2167 = vtanh.pop %v2163
    %v2168 = vtanh.pop %v2164
    %v2169 = vtanh.pop %v2165
    %v2170 = vtanh.pop %v2166
    %v2171 = vmul.f32 %v2167, %v1702
    %v2172 = vmul.f32 %v2168, %v1703
    %v2173 = vmul.f32 %v2169, %v1704
    %v2174 = vmul.f32 %v2170, %v1705
    %v2175 = vadd.f32 %v2171, %v1706
    %v2176 = vadd.f32 %v2172, %v1707
    %v2177 = vadd.f32 %v2173, %v1708
    %v2178 = vadd.f32 %v2174, %v1709
    %2180 = vrot.lane.b32.xlu0 %v2177, 64
    %v2181 = vpop.permute.xlu0 %2180
    %v2183 = vsel %vm1952, %v2175, %v2181
    %2185 = vrot.lane.b32.xlu0 %v2175, 64
    %v2186 = vpop.permute.xlu0 %2185
    %v2188 = vsel %vm1952, %v2186, %v2177
    %2190 = vrot.lane.b32.xlu0 %v2178, 64
    %v2191 = vpop.permute.xlu0 %2190
    %v2193 = vsel %vm1952, %v2176, %v2191
    %2195 = vrot.lane.b32.xlu0 %v2176, 64
    %v2196 = vpop.permute.xlu0 %2195
    %v2198 = vsel %vm1952, %v2196, %v2178
    %v2199 = vmul.f32 %v2188, %v2087
    %v2200 = vmul.f32 %v2183, %v2193
    %v2201 = vadd.f32 %v2199, %v2200
    %v2202 = vtanh.pop %v2201
    %v2203 = vmul.f32 %v2198, %v2202
    %2204 = vst.msk [vmem:[%s4 + $0x4] sm:$0x3] %vm1974, %v2203
    %2205 = vst.msk [vmem:[%s4 + $0xa] sm:$0x3] %vm1976, %v2203
    %v2206 = vpack.c.bf16 %v2203, %v2203
    %v2207 = vld [vmem:[#allocation2] sm:$0xc0]
    %v2208 = vld [vmem:[#allocation2 + $0x8] sm:$0xc0]
    %v2209 = vld [vmem:[#allocation2 + $0x30] sm:$0x3]
    %v2210 = vld [vmem:[#allocation2 + $0x38] sm:$0x3]
    %v2213 = vrot.slane %v2209, 2
    %v2214 = vrot.slane %v2210, 2
    %v2217 = vrot.slane %v2207, 6
    %v2218 = vrot.slane %v2208, 6
    %v2219 = vrot.slane %v2213, 6
    %v2220 = vrot.slane %v2214, 6
    %2225 = vmatpush.bf16.msra.mxu0 %v1844
    %2226 = vmatpush.bf16.msra.mxu0 %v1840
    %2227 = vmatpush.bf16.msra.mxu0 %v1836
    %2228 = vmatpush.bf16.msra.mxu0 %v1832
    %2229 = vmatpush.bf16.msra.mxu0 %v1828
    %2230 = vmatpush.bf16.msra.mxu0 %v1824
    %2231 = vmatpush.bf16.msra.mxu0 %v1820
    %2232 = vmatpush.bf16.msra.mxu0 %v1816
    %2233 = vmatmul.bf16.gmra.mxu0 %v2206
    %v2234 = vpop.f32.mrf.mxu0
    %v2235 = vadd.f32 %v2217, %v2234
    %v2236 = vpop.f32.mrf.mxu0
    %2237 = vdwg.mxu0
    %2238 = vmatpush.bf16.msra.mxu0 %v1845
    %2239 = vmatpush.bf16.msra.mxu0 %v1841
    %2240 = vmatpush.bf16.msra.mxu0 %v1837
    %2241 = vmatpush.bf16.msra.mxu0 %v1833
    %2242 = vmatpush.bf16.msra.mxu0 %v1829
    %2243 = vmatpush.bf16.msra.mxu0 %v1825
    %2244 = vmatpush.bf16.msra.mxu0 %v1821
    %2245 = vmatpush.bf16.msra.mxu0 %v1817
    %2246 = vmatmul.bf16.gmra.mxu0 %v2206
    %v2247 = vpop.f32.mrf.mxu0
    %v2248 = vadd.f32 %v2218, %v2247
    %v2249 = vpop.f32.mrf.mxu0
    %2250 = vdwg.mxu0
    %2251 = vmatpush.bf16.msra.mxu0 %v1846
    %2252 = vmatpush.bf16.msra.mxu0 %v1842
    %2253 = vmatpush.bf16.msra.mxu0 %v1838
    %2254 = vmatpush.bf16.msra.mxu0 %v1834
    %2255 = vmatpush.bf16.msra.mxu0 %v1830
    %2256 = vmatpush.bf16.msra.mxu0 %v1826
    %2257 = vmatpush.bf16.msra.mxu0 %v1822
    %2258 = vmatpush.bf16.msra.mxu0 %v1818
    %2259 = vmatmul.bf16.gmra.mxu0 %v2206
    %v2260 = vpop.f32.mrf.mxu0
    %v2261 = vadd.f32 %v2219, %v2260
    %v2262 = vpop.f32.mrf.mxu0
    %2263 = vdwg.mxu0
    %2264 = vmatpush.bf16.msra.mxu0 %v1847
    %2265 = vmatpush.bf16.msra.mxu0 %v1843
    %2266 = vmatpush.bf16.msra.mxu0 %v1839
    %2267 = vmatpush.bf16.msra.mxu0 %v1835
    %2268 = vmatpush.bf16.msra.mxu0 %v1831
    %2269 = vmatpush.bf16.msra.mxu0 %v1827
    %2270 = vmatpush.bf16.msra.mxu0 %v1823
    %2271 = vmatpush.bf16.msra.mxu0 %v1819
    %2272 = vmatmul.bf16.gmra.mxu0 %v2206
    %v2273 = vpop.f32.mrf.mxu0
    %v2274 = vadd.f32 %v2220, %v2273
    %v2275 = vpop.f32.mrf.mxu0
    %2276 = vdwg.mxu0
    %v2277 = vmul.f32 %v2235, %v1702
    %v2278 = vmul.f32 %v2248, %v1703
    %v2279 = vmul.f32 %v2261, %v1704
    %v2280 = vmul.f32 %v2274, %v1705
    %v2281 = vtanh.pop %v2277
    %v2282 = vtanh.pop %v2278
    %v2283 = vtanh.pop %v2279
    %v2284 = vtanh.pop %v2280
    %v2285 = vmul.f32 %v2281, %v1702
    %v2286 = vmul.f32 %v2282, %v1703
    %v2287 = vmul.f32 %v2283, %v1704
    %v2288 = vmul.f32 %v2284, %v1705
    %v2289 = vadd.f32 %v2285, %v1706
    %v2290 = vadd.f32 %v2286, %v1707
    %v2291 = vadd.f32 %v2287, %v1708
    %v2292 = vadd.f32 %v2288, %v1709
    %2294 = vrot.lane.b32.xlu0 %v2291, 64
    %v2295 = vpop.permute.xlu0 %2294
    %v2297 = vsel %vm1952, %v2289, %v2295
    %2299 = vrot.lane.b32.xlu0 %v2289, 64
    %v2300 = vpop.permute.xlu0 %2299
    %v2302 = vsel %vm1952, %v2300, %v2291
    %2304 = vrot.lane.b32.xlu0 %v2292, 64
    %v2305 = vpop.permute.xlu0 %2304
    %v2307 = vsel %vm1952, %v2290, %v2305
    %2309 = vrot.lane.b32.xlu0 %v2290, 64
    %v2310 = vpop.permute.xlu0 %2309
    %v2312 = vsel %vm1952, %v2310, %v2292
    %v2313 = vmul.f32 %v2302, %v2201
    %v2314 = vmul.f32 %v2297, %v2307
    %v2315 = vadd.f32 %v2313, %v2314
    %v2316 = vtanh.pop %v2315
    %v2317 = vmul.f32 %v2312, %v2316
    %2318 = vst.msk [vmem:[%s4 + $0x6] sm:$0x3] %vm1974, %v2317
    %2319 = vst.msk [vmem:[%s4 + $0x8] sm:$0x3] %vm1976, %v2317
    %v2320 = vpack.c.bf16 %v2317, %v2317
    %v2321 = vld [vmem:[#allocation2 + $0x20] sm:$0x3]
    %v2322 = vld [vmem:[#allocation2 + $0x28] sm:$0x3]
    %v2323 = vld [vmem:[#allocation2 + $0x10] sm:$0xc0]
    %v2324 = vld [vmem:[#allocation2 + $0x18] sm:$0xc0]
    %v2327 = vrot.slane %v2323, 6
    %v2328 = vrot.slane %v2324, 6
    %2331 = vmatpush.bf16.msra.mxu0 %v1844
    %2332 = vmatpush.bf16.msra.mxu0 %v1840
    %2333 = vmatpush.bf16.msra.mxu0 %v1836
    %2334 = vmatpush.bf16.msra.mxu0 %v1832
    %2335 = vmatpush.bf16.msra.mxu0 %v1828
    %2336 = vmatpush.bf16.msra.mxu0 %v1824
    %2337 = vmatpush.bf16.msra.mxu0 %v1820
    %2338 = vmatpush.bf16.msra.mxu0 %v1816
    %2339 = vmatmul.bf16.gmra.mxu0 %v2320
    %v2340 = vpop.f32.mrf.mxu0
    %v2341 = vadd.f32 %v2321, %v2340
    %v2342 = vpop.f32.mrf.mxu0
    %2343 = vdwg.mxu0
    %2344 = vmatpush.bf16.msra.mxu0 %v1845
    %2345 = vmatpush.bf16.msra.mxu0 %v1841
    %2346 = vmatpush.bf16.msra.mxu0 %v1837
    %2347 = vmatpush.bf16.msra.mxu0 %v1833
    %2348 = vmatpush.bf16.msra.mxu0 %v1829
    %2349 = vmatpush.bf16.msra.mxu0 %v1825
    %2350 = vmatpush.bf16.msra.mxu0 %v1821
    %2351 = vmatpush.bf16.msra.mxu0 %v1817
    %2352 = vmatmul.bf16.gmra.mxu0 %v2320
    %v2353 = vpop.f32.mrf.mxu0
    %v2354 = vadd.f32 %v2322, %v2353
    %v2355 = vpop.f32.mrf.mxu0
    %2356 = vdwg.mxu0
    %2357 = vmatpush.bf16.msra.mxu0 %v1846
    %2358 = vmatpush.bf16.msra.mxu0 %v1842
    %2359 = vmatpush.bf16.msra.mxu0 %v1838
    %2360 = vmatpush.bf16.msra.mxu0 %v1834
    %2361 = vmatpush.bf16.msra.mxu0 %v1830
    %2362 = vmatpush.bf16.msra.mxu0 %v1826
    %2363 = vmatpush.bf16.msra.mxu0 %v1822
    %2364 = vmatpush.bf16.msra.mxu0 %v1818
    %2365 = vmatmul.bf16.gmra.mxu0 %v2320
    %v2366 = vpop.f32.mrf.mxu0
    %v2367 = vadd.f32 %v2327, %v2366
    %v2368 = vpop.f32.mrf.mxu0
    %2369 = vdwg.mxu0
    %2370 = vmatpush.bf16.msra.mxu0 %v1847
    %2371 = vmatpush.bf16.msra.mxu0 %v1843
    %2372 = vmatpush.bf16.msra.mxu0 %v1839
    %2373 = vmatpush.bf16.msra.mxu0 %v1835
    %2374 = vmatpush.bf16.msra.mxu0 %v1831
    %2375 = vmatpush.bf16.msra.mxu0 %v1827
    %2376 = vmatpush.bf16.msra.mxu0 %v1823
    %2377 = vmatpush.bf16.msra.mxu0 %v1819
    %2378 = vmatmul.bf16.gmra.mxu0 %v2320
    %v2379 = vpop.f32.mrf.mxu0
    %v2380 = vadd.f32 %v2328, %v2379
    %v2381 = vpop.f32.mrf.mxu0
    %2382 = vdwg.mxu0
    %v2383 = vmul.f32 %v2341, %v1702
    %v2384 = vmul.f32 %v2354, %v1703
    %v2385 = vmul.f32 %v2367, %v1704
    %v2386 = vmul.f32 %v2380, %v1705
    %v2387 = vtanh.pop %v2383
    %v2388 = vtanh.pop %v2384
    %v2389 = vtanh.pop %v2385
    %v2390 = vtanh.pop %v2386
    %v2391 = vmul.f32 %v2387, %v1702
    %v2392 = vmul.f32 %v2388, %v1703
    %v2393 = vmul.f32 %v2389, %v1704
    %v2394 = vmul.f32 %v2390, %v1705
    %v2395 = vadd.f32 %v2391, %v1706
    %v2396 = vadd.f32 %v2392, %v1707
    %v2397 = vadd.f32 %v2393, %v1708
    %v2398 = vadd.f32 %v2394, %v1709
    %2400 = vrot.lane.b32.xlu0 %v2397, 64
    %v2401 = vpop.permute.xlu0 %2400
    %v2403 = vsel %vm1952, %v2395, %v2401
    %2405 = vrot.lane.b32.xlu0 %v2395, 64
    %v2406 = vpop.permute.xlu0 %2405
    %v2408 = vsel %vm1952, %v2406, %v2397
    %2410 = vrot.lane.b32.xlu0 %v2398, 64
    %v2411 = vpop.permute.xlu0 %2410
    %v2413 = vsel %vm1952, %v2396, %v2411
    %2415 = vrot.lane.b32.xlu0 %v2396, 64
    %v2416 = vpop.permute.xlu0 %2415
    %v2418 = vsel %vm1952, %v2416, %v2398
    %v2419 = vmul.f32 %v2408, %v2315
    %v2420 = vmul.f32 %v2403, %v2413
    %v2421 = vadd.f32 %v2419, %v2420
    %v2422 = vtanh.pop %v2421
    %v2423 = vmul.f32 %v2418, %v2422
    %2424 = vst.msk [vmem:[%s4 + $0x8] sm:$0x3] %vm1974, %v2423
    %2425 = vst.msk [vmem:[%s4 + $0x6] sm:$0x3] %vm1976, %v2423
    %v2426 = vpack.c.bf16 %v2423, %v2423
    %v2427 = vld [vmem:[#allocation2 + $0x20] sm:$0xc]
    %v2428 = vld [vmem:[#allocation2 + $0x28] sm:$0xc]
    %v2429 = vld [vmem:[#allocation2 + $0x10] sm:$0x30]
    %v2430 = vld [vmem:[#allocation2 + $0x18] sm:$0x30]
    %v2433 = vrot.slane %v2429, 2
    %v2434 = vrot.slane %v2430, 2
    %v2437 = vrot.slane %v2427, 2
    %v2438 = vrot.slane %v2428, 2
    %v2439 = vrot.slane %v2433, 2
    %v2440 = vrot.slane %v2434, 2
    %2445 = vmatpush.bf16.msra.mxu0 %v1844
    %2446 = vmatpush.bf16.msra.mxu0 %v1840
    %2447 = vmatpush.bf16.msra.mxu0 %v1836
    %2448 = vmatpush.bf16.msra.mxu0 %v1832
    %2449 = vmatpush.bf16.msra.mxu0 %v1828
    %2450 = vmatpush.bf16.msra.mxu0 %v1824
    %2451 = vmatpush.bf16.msra.mxu0 %v1820
    %2452 = vmatpush.bf16.msra.mxu0 %v1816
    %2453 = vmatmul.bf16.gmra.mxu0 %v2426
    %v2454 = vpop.f32.mrf.mxu0
    %v2455 = vadd.f32 %v2437, %v2454
    %v2456 = vpop.f32.mrf.mxu0
    %2457 = vdwg.mxu0
    %2458 = vmatpush.bf16.msra.mxu0 %v1845
    %2459 = vmatpush.bf16.msra.mxu0 %v1841
    %2460 = vmatpush.bf16.msra.mxu0 %v1837
    %2461 = vmatpush.bf16.msra.mxu0 %v1833
    %2462 = vmatpush.bf16.msra.mxu0 %v1829
    %2463 = vmatpush.bf16.msra.mxu0 %v1825
    %2464 = vmatpush.bf16.msra.mxu0 %v1821
    %2465 = vmatpush.bf16.msra.mxu0 %v1817
    %2466 = vmatmul.bf16.gmra.mxu0 %v2426
    %v2467 = vpop.f32.mrf.mxu0
    %v2468 = vadd.f32 %v2438, %v2467
    %v2469 = vpop.f32.mrf.mxu0
    %2470 = vdwg.mxu0
    %2471 = vmatpush.bf16.msra.mxu0 %v1846
    %2472 = vmatpush.bf16.msra.mxu0 %v1842
    %2473 = vmatpush.bf16.msra.mxu0 %v1838
    %2474 = vmatpush.bf16.msra.mxu0 %v1834
    %2475 = vmatpush.bf16.msra.mxu0 %v1830
    %2476 = vmatpush.bf16.msra.mxu0 %v1826
    %2477 = vmatpush.bf16.msra.mxu0 %v1822
    %2478 = vmatpush.bf16.msra.mxu0 %v1818
    %2479 = vmatmul.bf16.gmra.mxu0 %v2426
    %v2480 = vpop.f32.mrf.mxu0
    %v2481 = vadd.f32 %v2439, %v2480
    %v2482 = vpop.f32.mrf.mxu0
    %2483 = vdwg.mxu0
    %2484 = vmatpush.bf16.msra.mxu0 %v1847
    %2485 = vmatpush.bf16.msra.mxu0 %v1843
    %2486 = vmatpush.bf16.msra.mxu0 %v1839
    %2487 = vmatpush.bf16.msra.mxu0 %v1835
    %2488 = vmatpush.bf16.msra.mxu0 %v1831
    %2489 = vmatpush.bf16.msra.mxu0 %v1827
    %2490 = vmatpush.bf16.msra.mxu0 %v1823
    %2491 = vmatpush.bf16.msra.mxu0 %v1819
    %2492 = vmatmul.bf16.gmra.mxu0 %v2426
    %v2493 = vpop.f32.mrf.mxu0
    %v2494 = vadd.f32 %v2440, %v2493
    %v2495 = vpop.f32.mrf.mxu0
    %2496 = vdwg.mxu0
    %v2497 = vmul.f32 %v2455, %v1702
    %v2498 = vmul.f32 %v2468, %v1703
    %v2499 = vmul.f32 %v2481, %v1704
    %v2500 = vmul.f32 %v2494, %v1705
    %v2501 = vtanh.pop %v2497
    %v2502 = vtanh.pop %v2498
    %v2503 = vtanh.pop %v2499
    %v2504 = vtanh.pop %v2500
    %v2505 = vmul.f32 %v2501, %v1702
    %v2506 = vmul.f32 %v2502, %v1703
    %v2507 = vmul.f32 %v2503, %v1704
    %v2508 = vmul.f32 %v2504, %v1705
    %v2509 = vadd.f32 %v2505, %v1706
    %v2510 = vadd.f32 %v2506, %v1707
    %v2511 = vadd.f32 %v2507, %v1708
    %v2512 = vadd.f32 %v2508, %v1709
    %2514 = vrot.lane.b32.xlu0 %v2511, 64
    %v2515 = vpop.permute.xlu0 %2514
    %v2517 = vsel %vm1952, %v2509, %v2515
    %2519 = vrot.lane.b32.xlu0 %v2509, 64
    %v2520 = vpop.permute.xlu0 %2519
    %v2522 = vsel %vm1952, %v2520, %v2511
    %2524 = vrot.lane.b32.xlu0 %v2512, 64
    %v2525 = vpop.permute.xlu0 %2524
    %v2527 = vsel %vm1952, %v2510, %v2525
    %2529 = vrot.lane.b32.xlu0 %v2510, 64
    %v2530 = vpop.permute.xlu0 %2529
    %v2532 = vsel %vm1952, %v2530, %v2512
    %v2533 = vmul.f32 %v2522, %v2421
    %v2534 = vmul.f32 %v2517, %v2527
    %v2535 = vadd.f32 %v2533, %v2534
    %v2536 = vtanh.pop %v2535
    %v2537 = vmul.f32 %v2532, %v2536
    %2538 = vst.msk [vmem:[%s4 + $0xa] sm:$0x3] %vm1974, %v2537
    %2539 = vst.msk [vmem:[%s4 + $0x4] sm:$0x3] %vm1976, %v2537
    %v2540 = vpack.c.bf16 %v2537, %v2537
    %v2541 = vld [vmem:[#allocation2 + $0x20] sm:$0x30]
    %v2542 = vld [vmem:[#allocation2 + $0x28] sm:$0x30]
    %v2543 = vld [vmem:[#allocation2 + $0x10] sm:$0xc]
    %v2544 = vld [vmem:[#allocation2 + $0x18] sm:$0xc]
    %v2547 = vrot.slane %v2543, 6
    %v2548 = vrot.slane %v2544, 6
    %v2551 = vrot.slane %v2541, 4
    %v2552 = vrot.slane %v2542, 4
    %v2553 = vrot.slane %v2547, 4
    %v2554 = vrot.slane %v2548, 4
    %2559 = vmatpush.bf16.msra.mxu0 %v1844
    %2560 = vmatpush.bf16.msra.mxu0 %v1840
    %2561 = vmatpush.bf16.msra.mxu0 %v1836
    %2562 = vmatpush.bf16.msra.mxu0 %v1832
    %2563 = vmatpush.bf16.msra.mxu0 %v1828
    %2564 = vmatpush.bf16.msra.mxu0 %v1824
    %2565 = vmatpush.bf16.msra.mxu0 %v1820
    %2566 = vmatpush.bf16.msra.mxu0 %v1816
    %2567 = vmatmul.bf16.gmra.mxu0 %v2540
    %v2568 = vpop.f32.mrf.mxu0
    %v2569 = vadd.f32 %v2551, %v2568
    %v2570 = vpop.f32.mrf.mxu0
    %2571 = vdwg.mxu0
    %2572 = vmatpush.bf16.msra.mxu0 %v1845
    %2573 = vmatpush.bf16.msra.mxu0 %v1841
    %2574 = vmatpush.bf16.msra.mxu0 %v1837
    %2575 = vmatpush.bf16.msra.mxu0 %v1833
    %2576 = vmatpush.bf16.msra.mxu0 %v1829
    %2577 = vmatpush.bf16.msra.mxu0 %v1825
    %2578 = vmatpush.bf16.msra.mxu0 %v1821
    %2579 = vmatpush.bf16.msra.mxu0 %v1817
    %2580 = vmatmul.bf16.gmra.mxu0 %v2540
    %v2581 = vpop.f32.mrf.mxu0
    %v2582 = vadd.f32 %v2552, %v2581
    %v2583 = vpop.f32.mrf.mxu0
    %2584 = vdwg.mxu0
    %2585 = vmatpush.bf16.msra.mxu0 %v1846
    %2586 = vmatpush.bf16.msra.mxu0 %v1842
    %2587 = vmatpush.bf16.msra.mxu0 %v1838
    %2588 = vmatpush.bf16.msra.mxu0 %v1834
    %2589 = vmatpush.bf16.msra.mxu0 %v1830
    %2590 = vmatpush.bf16.msra.mxu0 %v1826
    %2591 = vmatpush.bf16.msra.mxu0 %v1822
    %2592 = vmatpush.bf16.msra.mxu0 %v1818
    %2593 = vmatmul.bf16.gmra.mxu0 %v2540
    %v2594 = vpop.f32.mrf.mxu0
    %v2595 = vadd.f32 %v2553, %v2594
    %v2596 = vpop.f32.mrf.mxu0
    %2597 = vdwg.mxu0
    %2598 = vmatpush.bf16.msra.mxu0 %v1847
    %2599 = vmatpush.bf16.msra.mxu0 %v1843
    %2600 = vmatpush.bf16.msra.mxu0 %v1839
    %2601 = vmatpush.bf16.msra.mxu0 %v1835
    %2602 = vmatpush.bf16.msra.mxu0 %v1831
    %2603 = vmatpush.bf16.msra.mxu0 %v1827
    %2604 = vmatpush.bf16.msra.mxu0 %v1823
    %2605 = vmatpush.bf16.msra.mxu0 %v1819
    %2606 = vmatmul.bf16.gmra.mxu0 %v2540
    %v2607 = vpop.f32.mrf.mxu0
    %v2608 = vadd.f32 %v2554, %v2607
    %v2609 = vpop.f32.mrf.mxu0
    %2610 = vdwg.mxu0
    %v2611 = vmul.f32 %v2569, %v1702
    %v2612 = vmul.f32 %v2582, %v1703
    %v2613 = vmul.f32 %v2595, %v1704
    %v2614 = vmul.f32 %v2608, %v1705
    %v2615 = vtanh.pop %v2611
    %v2616 = vtanh.pop %v2612
    %v2617 = vtanh.pop %v2613
    %v2618 = vtanh.pop %v2614
    %v2619 = vmul.f32 %v2615, %v1702
    %v2620 = vmul.f32 %v2616, %v1703
    %v2621 = vmul.f32 %v2617, %v1704
    %v2622 = vmul.f32 %v2618, %v1705
    %v2623 = vadd.f32 %v2619, %v1706
    %v2624 = vadd.f32 %v2620, %v1707
    %v2625 = vadd.f32 %v2621, %v1708
    %v2626 = vadd.f32 %v2622, %v1709
    %2628 = vrot.lane.b32.xlu0 %v2625, 64
    %v2629 = vpop.permute.xlu0 %2628
    %v2631 = vsel %vm1952, %v2623, %v2629
    %2633 = vrot.lane.b32.xlu0 %v2623, 64
    %v2634 = vpop.permute.xlu0 %2633
    %v2636 = vsel %vm1952, %v2634, %v2625
    %2638 = vrot.lane.b32.xlu0 %v2626, 64
    %v2639 = vpop.permute.xlu0 %2638
    %v2641 = vsel %vm1952, %v2624, %v2639
    %2643 = vrot.lane.b32.xlu0 %v2624, 64
    %v2644 = vpop.permute.xlu0 %2643
    %v2646 = vsel %vm1952, %v2644, %v2626
    %v2647 = vmul.f32 %v2636, %v2535
    %v2648 = vmul.f32 %v2631, %v2641
    %v2649 = vadd.f32 %v2647, %v2648
    %v2650 = vtanh.pop %v2649
    %v2651 = vmul.f32 %v2646, %v2650
    %2652 = vst.msk [vmem:[%s4 + $0xc] sm:$0x3] %vm1974, %v2651
    %2653 = vst.msk [vmem:[%s4 + $0x2] sm:$0x3] %vm1976, %v2651
    %v2654 = vpack.c.bf16 %v2651, %v2651
    %v2655 = vld [vmem:[#allocation2 + $0x20] sm:$0xc0]
    %v2656 = vld [vmem:[#allocation2 + $0x28] sm:$0xc0]
    %v2657 = vld [vmem:[#allocation2 + $0x10] sm:$0x3]
    %v2658 = vld [vmem:[#allocation2 + $0x18] sm:$0x3]
    %v2661 = vrot.slane %v2657, 2
    %v2662 = vrot.slane %v2658, 2
    %v2665 = vrot.slane %v2655, 6
    %v2666 = vrot.slane %v2656, 6
    %v2667 = vrot.slane %v2661, 6
    %v2668 = vrot.slane %v2662, 6
    %2673 = vmatpush.bf16.msra.mxu0 %v1844
    %2674 = vmatpush.bf16.msra.mxu0 %v1840
    %2675 = vmatpush.bf16.msra.mxu0 %v1836
    %2676 = vmatpush.bf16.msra.mxu0 %v1832
    %2677 = vmatpush.bf16.msra.mxu0 %v1828
    %2678 = vmatpush.bf16.msra.mxu0 %v1824
    %2679 = vmatpush.bf16.msra.mxu0 %v1820
    %2680 = vmatpush.bf16.msra.mxu0 %v1816
    %2681 = vmatmul.bf16.gmra.mxu0 %v2654
    %v2682 = vpop.f32.mrf.mxu0
    %v2683 = vadd.f32 %v2665, %v2682
    %v2684 = vpop.f32.mrf.mxu0
    %2685 = vdwg.mxu0
    %2686 = vmatpush.bf16.msra.mxu0 %v1845
    %2687 = vmatpush.bf16.msra.mxu0 %v1841
    %2688 = vmatpush.bf16.msra.mxu0 %v1837
    %2689 = vmatpush.bf16.msra.mxu0 %v1833
    %2690 = vmatpush.bf16.msra.mxu0 %v1829
    %2691 = vmatpush.bf16.msra.mxu0 %v1825
    %2692 = vmatpush.bf16.msra.mxu0 %v1821
    %2693 = vmatpush.bf16.msra.mxu0 %v1817
    %2694 = vmatmul.bf16.gmra.mxu0 %v2654
    %v2695 = vpop.f32.mrf.mxu0
    %v2696 = vadd.f32 %v2666, %v2695
    %v2697 = vpop.f32.mrf.mxu0
    %2698 = vdwg.mxu0
    %2699 = vmatpush.bf16.msra.mxu0 %v1846
    %2700 = vmatpush.bf16.msra.mxu0 %v1842
    %2701 = vmatpush.bf16.msra.mxu0 %v1838
    %2702 = vmatpush.bf16.msra.mxu0 %v1834
    %2703 = vmatpush.bf16.msra.mxu0 %v1830
    %2704 = vmatpush.bf16.msra.mxu0 %v1826
    %2705 = vmatpush.bf16.msra.mxu0 %v1822
    %2706 = vmatpush.bf16.msra.mxu0 %v1818
    %2707 = vmatmul.bf16.gmra.mxu0 %v2654
    %v2708 = vpop.f32.mrf.mxu0
    %v2709 = vadd.f32 %v2667, %v2708
    %v2710 = vpop.f32.mrf.mxu0
    %2711 = vdwg.mxu0
    %2712 = vmatpush.bf16.msra.mxu0 %v1847
    %2713 = vmatpush.bf16.msra.mxu0 %v1843
    %2714 = vmatpush.bf16.msra.mxu0 %v1839
    %2715 = vmatpush.bf16.msra.mxu0 %v1835
    %2716 = vmatpush.bf16.msra.mxu0 %v1831
    %2717 = vmatpush.bf16.msra.mxu0 %v1827
    %2718 = vmatpush.bf16.msra.mxu0 %v1823
    %2719 = vmatpush.bf16.msra.mxu0 %v1819
    %2720 = vmatmul.bf16.gmra.mxu0 %v2654
    %v2721 = vpop.f32.mrf.mxu0
    %v2722 = vadd.f32 %v2668, %v2721
    %v2723 = vpop.f32.mrf.mxu0
    %2724 = vdwg.mxu0
    %v2725 = vmul.f32 %v2683, %v1702
    %v2726 = vmul.f32 %v2696, %v1703
    %v2727 = vmul.f32 %v2709, %v1704
    %v2728 = vmul.f32 %v2722, %v1705
    %v2729 = vtanh.pop %v2725
    %v2730 = vtanh.pop %v2726
    %v2731 = vtanh.pop %v2727
    %v2732 = vtanh.pop %v2728
    %v2733 = vmul.f32 %v2729, %v1702
    %v2734 = vmul.f32 %v2730, %v1703
    %v2735 = vmul.f32 %v2731, %v1704
    %v2736 = vmul.f32 %v2732, %v1705
    %v2737 = vadd.f32 %v2733, %v1706
    %v2738 = vadd.f32 %v2734, %v1707
    %v2739 = vadd.f32 %v2735, %v1708
    %v2740 = vadd.f32 %v2736, %v1709
    %2742 = vrot.lane.b32.xlu0 %v2739, 64
    %v2743 = vpop.permute.xlu0 %2742
    %v2745 = vsel %vm1952, %v2737, %v2743
    %2747 = vrot.lane.b32.xlu0 %v2737, 64
    %v2748 = vpop.permute.xlu0 %2747
    %v2750 = vsel %vm1952, %v2748, %v2739
    %2752 = vrot.lane.b32.xlu0 %v2740, 64
    %v2753 = vpop.permute.xlu0 %2752
    %v2755 = vsel %vm1952, %v2738, %v2753
    %2757 = vrot.lane.b32.xlu0 %v2738, 64
    %v2758 = vpop.permute.xlu0 %2757
    %v2760 = vsel %vm1952, %v2758, %v2740
    %v2761 = vmul.f32 %v2750, %v2649
    %v2762 = vmul.f32 %v2745, %v2755
    %v2763 = vadd.f32 %v2761, %v2762
    %v2764 = vtanh.pop %v2763
    %v2765 = vmul.f32 %v2760, %v2764
    %2766 = vst.msk [vmem:[%s4 + $0xe] sm:$0x3] %vm1974, %v2765
    %2767 = vst.msk [vmem:[%s4] sm:$0x3] %vm1976, %v2765
    // Predicated region
    $region30: #{forward.2} parent=1 // pred_check
      _
    $region31: #{forward.2} parent=1 // pred_check_branch
      %2769 = sbr.rel (0) target = $region33
    $region32: #{forward.2} parent=1 // pred_region
      _
    $region33: #{forward.2} parent=1 // pred_fallthru
      _
    // Predicated region
    $region34: #{forward.2} parent=1 // pred_check
      _
    $region35: #{forward.2} parent=1 // pred_check_branch
      %2771 = sbr.rel (0) target = $region37
    $region36: #{forward.2} parent=1 // pred_region
      _
    $region37: #{forward.2} parent=1 // pred_fallthru
      _
    %2772 = vsyncpa [#allocation4], 1
    %2773 = vsyncpa [#allocation6], 1

</llo_original>
